<compile_context>
chip_gen: v7x
topology: tpu7x:2x2x1
jax: 0.10.0
libtpu: 0.0.40
codegen_flags: <defaults>
</compile_context>

<pallas_src>
import math

import jax
import jax.numpy as jnp
from jax.experimental import pallas as pl
from jax.experimental.pallas import tpu as pltpu

# ----------------------------- model dims (hparams) -------------------------
TITLE = 32                      # hparams.title_size (document_vector_dim)
HEAD_NUM = 4                    # hparams.head_num
HEAD_DIM = 16                   # hparams.head_dim
EMB = HEAD_NUM * HEAD_DIM       # news-encoder output dim (64)
ATT_HID = 32                    # hparams.attention_hidden_dim
UNITS = (512, 512, 512)         # NewsEncoder units_per_layer (module default)
BN_EPS = 1e-5

B_TILE = 8                      # users per grid step in the scoring kernel
VMEM_LIMIT = 32 * 1024 * 1024   # well above actual use, <= physical on all chips


def _pick_row_tile():
    """MXU-sized row tile for the news-encoder MLP: 128 on v5e, 256 on v6e/v7x."""
    try:
        kind = jax.devices()[0].device_kind.lower()
    except Exception:
        return 256
    return 128 if "v5" in kind else 256


# ----------------------------- Pallas kernels -------------------------------
def _news_mlp_kernel(x_ref,
                     w1, b1, s1, t1,
                     w2, b2, s2, t2,
                     w3, b3, s3, t3,
                     wo, bo,
                     o_ref):
    """NewsEncoder MLP: 3x [Linear -> ReLU -> BatchNorm(inference)] -> Linear.

    Weights are stored bf16 (halves weight HBM traffic) and up-cast to f32 for
    the matmuls; biases and folded-BN scale/shift stay f32.  Dropout is the
    identity in inference mode.
    """
    h = x_ref[...]                                           # (ROW_TILE, TITLE)
    for w, b, s, t in ((w1, b1, s1, t1), (w2, b2, s2, t2), (w3, b3, s3, t3)):
        h = jnp.dot(h, w[...].astype(jnp.float32),
                    preferred_element_type=jnp.float32) + b[...]
        h = jnp.maximum(h, 0.0)                              # ReLU
        h = h * s[...] + t[...]                              # BatchNorm1d (folded)
    o_ref[...] = (jnp.dot(h, wo[...].astype(jnp.float32),
                          preferred_element_type=jnp.float32)
                  + bo[...]).astype(o_ref.dtype)             # (ROW_TILE, EMB)


def _user_score_kernel(click_ref, cand_ref, wqkv_ref, watt_ref, batt_ref,
                       qatt_ref, out_ref):
    """Batched scoring: B_TILE users per grid step.

    Multi-head self-attention over the click history -> additive soft
    attention -> user vector -> candidate dot products -> softmax.
    """
    BT, H, E = click_ref.shape
    C = cand_ref.shape[1]

    x = click_ref[...]                                       # (BT, H, E)  f32
    cand = cand_ref[...]                                     # (BT, C, E)  f32
    wqkv = wqkv_ref[...].astype(jnp.float32)                 # (E, 3E)
    watt = watt_ref[...].astype(jnp.float32)                 # (E, ATT_HID)
    qatt = qatt_ref[...].astype(jnp.float32)                 # (ATT_HID, 1)
    batt = batt_ref[...]                                     # (1, ATT_HID) f32

    # Fused QKV projection: one MXU matmul instead of three.
    x2 = x.reshape(BT * H, E)
    qkv = jnp.dot(x2, wqkv, preferred_element_type=jnp.float32)   # (BT*H, 3E)

    scale = 1.0 / math.sqrt(HEAD_DIM)
    heads = []
    # TODO(synk): fold the head loop into one multi-batch-dim contraction once
    # Mosaic dot_general handles (batch, head) batch dims; each einsum below is
    # already batched over the B_TILE users, which is the dominant win.
    for h in range(HEAD_NUM):
        o = h * HEAD_DIM
        qh = qkv[:, o:o + HEAD_DIM].reshape(BT, H, HEAD_DIM)
        kh = qkv[:, E + o:E + o + HEAD_DIM].reshape(BT, H, HEAD_DIM)
        vh = qkv[:, 2 * E + o:2 * E + o + HEAD_DIM].reshape(BT, H, HEAD_DIM)
        s = jnp.einsum("bqd,bkd->bqk", qh, kh,
                       preferred_element_type=jnp.float32) * scale   # (BT,H,H)
        p = jax.nn.softmax(s, axis=-1)
        heads.append(jnp.einsum("bqk,bkd->bqd", p, vh,
                                preferred_element_type=jnp.float32))  # (BT,H,hd)
    y = jnp.concatenate(heads, axis=-1)                      # (BT, H, E)

    # Additive soft attention over the history axis.
    y2 = y.reshape(BT * H, E)
    att = jnp.tanh(jnp.dot(y2, watt, preferred_element_type=jnp.float32) + batt)
    sco = jnp.dot(att, qatt, preferred_element_type=jnp.float32)     # (BT*H, 1)
    sco = sco.reshape(BT, H, 1)
    sco = sco - jnp.max(sco, axis=1, keepdims=True)
    wgt = jnp.exp(sco)
    wgt = wgt * pl.reciprocal(jnp.sum(wgt, axis=1, keepdims=True), approx=True)
    user = jnp.sum(wgt * y, axis=1)                          # (BT, E)

    # Candidate logits + softmax over candidates.
    logits = jnp.einsum("bue,bce->buc", user[:, None, :], cand,
                        preferred_element_type=jnp.float32)  # (BT, 1, C)
    out_ref[...] = jax.nn.softmax(logits, axis=-1).astype(out_ref.dtype)


# ----------------------------- wrappers --------------------------------------
def news_encode(x2d, p, row_tile):
    """x2d: (N, TITLE) -> (N, EMB) via the Pallas MLP kernel, tiled over rows."""
    N, T = x2d.shape
    n_pad = row_tile * pl.cdiv(N, row_tile)
    if n_pad != N:
        x2d = jnp.pad(x2d, ((0, n_pad - N), (0, 0)))
    flat = [p["w1"], p["b1"], p["s1"], p["t1"],
            p["w2"], p["b2"], p["s2"], p["t2"],
            p["w3"], p["b3"], p["s3"], p["t3"],
            p["wo"], p["bo"]]
    out = pl.pallas_call(
        _news_mlp_kernel,
        out_shape=jax.ShapeDtypeStruct((n_pad, EMB), jnp.float32),
        grid=(n_pad // row_tile,),
        in_specs=[pl.BlockSpec((row_tile, T), lambda i: (i, 0))]
                 + [pl.BlockSpec(a.shape, lambda i: (0, 0)) for a in flat],
        out_specs=pl.BlockSpec((row_tile, EMB), lambda i: (i, 0)),
        compiler_params=pltpu.CompilerParams(
            dimension_semantics=("parallel",), vmem_limit_bytes=VMEM_LIMIT),
    )(x2d, *flat)
    return out[:N]


def nrms_forward(his, pred, params):
    B, H, T = his.shape
    _, C, _ = pred.shape
    ne, at = params["news"], params["att"]
    row_tile = _pick_row_tile()

    # One fused encoder call over history + candidate rows: the ~1.1 MB of
    # bf16 weights are DMA'd once and stay resident for the whole grid.
    rows = jnp.concatenate([his.reshape(B * H, T), pred.reshape(B * C, T)], axis=0)
    emb = news_encode(rows, ne, row_tile)
    his_emb = emb[:B * H].reshape(B, H, EMB)
    pred_emb = emb[B * H:].reshape(B, C, EMB)

    # Pad the batch up to a multiple of B_TILE; padded rows produce finite
    # (uniform-softmax) junk that is sliced away below.
    b_pad = B_TILE * pl.cdiv(B, B_TILE)
    if b_pad != B:
        pad = ((0, b_pad - B), (0, 0), (0, 0))
        his_emb = jnp.pad(his_emb, pad)
        pred_emb = jnp.pad(pred_emb, pad)

    out = pl.pallas_call(
        _user_score_kernel,
        out_shape=jax.ShapeDtypeStruct((b_pad, 1, C), jnp.float32),
        grid=(b_pad // B_TILE,),
        in_specs=[
            pl.BlockSpec((B_TILE, H, EMB), lambda b: (b, 0, 0)),
            pl.BlockSpec((B_TILE, C, EMB), lambda b: (b, 0, 0)),
            pl.BlockSpec((EMB, 3 * EMB), lambda b: (0, 0)),
            pl.BlockSpec((EMB, ATT_HID), lambda b: (0, 0)),
            pl.BlockSpec((1, ATT_HID), lambda b: (0, 0)),
            pl.BlockSpec((ATT_HID, 1), lambda b: (0, 0)),
        ],
        out_specs=pl.BlockSpec((B_TILE, 1, C), lambda b: (b, 0, 0)),
        compiler_params=pltpu.CompilerParams(
            dimension_semantics=("parallel",), vmem_limit_bytes=VMEM_LIMIT),
    )(his_emb, pred_emb, at["wqkv"], at["watt"], at["batt"], at["qatt"])
    return out.reshape(b_pad, C)[:B]


# ----------------------------- deterministic params --------------------------
def init_params(key):
    ks = iter(jax.random.split(key, 40))

    def dense(fan_in, fan_out):
        w = jax.random.normal(next(ks), (fan_in, fan_out), jnp.float32) / math.sqrt(fan_in)
        b = 0.01 * jax.random.normal(next(ks), (1, fan_out), jnp.float32)
        return w.astype(jnp.bfloat16), b            # bf16 weight storage

    news = {}
    in_dim = TITLE
    for i, u in enumerate(UNITS, start=1):
        w, b = dense(in_dim, u)
        gamma = 1.0 + 0.1 * jax.random.normal(next(ks), (1, u), jnp.float32)
        beta = 0.1 * jax.random.normal(next(ks), (1, u), jnp.float32)
        mean = 0.1 * jax.random.normal(next(ks), (1, u), jnp.float32)
        var = jax.random.uniform(next(ks), (1, u), jnp.float32, 0.5, 1.5)
        s = gamma / jnp.sqrt(var + BN_EPS)
        t = beta - mean * s
        news[f"w{i}"], news[f"b{i}"], news[f"s{i}"], news[f"t{i}"] = w, b, s, t
        in_dim = u
    news["wo"], news["bo"] = dense(in_dim, EMB)

    wq = jax.random.normal(next(ks), (EMB, EMB), jnp.float32) / math.sqrt(EMB)
    wk = jax.random.normal(next(ks), (EMB, EMB), jnp.float32) / math.sqrt(EMB)
    wv = jax.random.normal(next(ks), (EMB, EMB), jnp.float32) / math.sqrt(EMB)
    att = {
        "wqkv": jnp.concatenate([wq, wk, wv], axis=1).astype(jnp.bfloat16),
        "watt": (jax.random.normal(next(ks), (EMB, ATT_HID), jnp.float32)
                 / math.sqrt(EMB)).astype(jnp.bfloat16),
        "batt": 0.01 * jax.random.normal(next(ks), (1, ATT_HID), jnp.float32),
        "qatt": (jax.random.normal(next(ks), (ATT_HID, 1), jnp.float32)
                 / math.sqrt(ATT_HID)).astype(jnp.bfloat16),
    }
    return {"news": news, "att": att}


# ----------------------------- pure-JAX reference ----------------------------
def _news_ref(x, p):
    h = x
    for i in (1, 2, 3):
        h = jnp.maximum(h @ p[f"w{i}"].astype(jnp.float32) + p[f"b{i}"], 0.0)
        h = h * p[f"s{i}"] + p[f"t{i}"]
    return h @ p["wo"].astype(jnp.float32) + p["bo"]


def nrms_ref(his, pred, params):
    B, H, T = his.shape
    _, C, _ = pred.shape
    ne, at = params["news"], params["att"]
    click = _news_ref(his.reshape(-1, T), ne).reshape(B, H, EMB)
    cand = _news_ref(pred.reshape(-1, T), ne).reshape(B, C, EMB)
    wqkv = at["wqkv"].astype(jnp.float32)
    wq, wk, wv = wqkv[:, :EMB], wqkv[:, EMB:2 * EMB], wqkv[:, 2 * EMB:]
    q = (click @ wq).reshape(B, H, HEAD_NUM, HEAD_DIM).transpose(0, 2, 1, 3)
    k = (click @ wk).reshape(B, H, HEAD_NUM, HEAD_DIM).transpose(0, 2, 1, 3)
    v = (click @ wv).reshape(B, H, HEAD_NUM, HEAD_DIM).transpose(0, 2, 1, 3)
    s = jnp.einsum("bhqd,bhkd->bhqk", q, k) / math.sqrt(HEAD_DIM)
    y = jnp.einsum("bhqk,bhkd->bhqd", jax.nn.softmax(s, -1), v)
    y = y.transpose(0, 2, 1, 3).reshape(B, H, EMB)
    att = jnp.tanh(y @ at["watt"].astype(jnp.float32) + at["batt"])
    w = jax.nn.softmax((att @ at["qatt"].astype(jnp.float32))[..., 0], axis=-1)[..., None]
    user = jnp.sum(w * y, axis=1)
    logits = jnp.einsum("bce,be->bc", cand, user)
    return jax.nn.softmax(logits, axis=-1)


# ----------------------------- main ------------------------------------------
if __name__ == "__main__":
    B, HIST, CAND = 2, 8, 4
    key = jax.random.PRNGKey(0)
    k_param, k_his, k_pred = jax.random.split(key, 3)

    params = init_params(k_param)
    his_input_title = jax.random.normal(k_his, (B, HIST, TITLE), jnp.float32)
    pred_input_title = jax.random.normal(k_pred, (B, CAND, TITLE), jnp.float32)

    preds = jax.block_until_ready(nrms_forward(his_input_title, pred_input_title, params))
    ref = nrms_ref(his_input_title, pred_input_title, params)

    assert preds.shape == (B, CAND)
    assert bool(jnp.all(jnp.isfinite(preds)))
    # Kernel and reference share the same bf16-quantized weights; remaining
    # divergence is f32 accumulation order + the approx reciprocal in the
    # history softmax, hence the slightly widened atol.
    assert bool(jnp.allclose(preds, ref, atol=2e-2, rtol=5e-2)), "mismatch vs reference"
    # rows of the candidate softmax must sum to 1
    assert bool(jnp.allclose(jnp.sum(preds, axis=-1), 1.0, atol=1e-4))

    print("KERNEL_OK")
</pallas_src>

<mosaic_0001>
module attributes {stable_mosaic.version = 11 : i64} {
  func.func @_news_mlp_kernel(%arg0: i32, %arg1: memref<256x32xf32, #tpu.memory_space<vmem>>, %arg2: memref<32x512xbf16, #tpu.memory_space<vmem>>, %arg3: memref<1x512xf32, #tpu.memory_space<vmem>>, %arg4: memref<1x512xf32, #tpu.memory_space<vmem>>, %arg5: memref<1x512xf32, #tpu.memory_space<vmem>>, %arg6: memref<512x512xbf16, #tpu.memory_space<vmem>>, %arg7: memref<1x512xf32, #tpu.memory_space<vmem>>, %arg8: memref<1x512xf32, #tpu.memory_space<vmem>>, %arg9: memref<1x512xf32, #tpu.memory_space<vmem>>, %arg10: memref<512x512xbf16, #tpu.memory_space<vmem>>, %arg11: memref<1x512xf32, #tpu.memory_space<vmem>>, %arg12: memref<1x512xf32, #tpu.memory_space<vmem>>, %arg13: memref<1x512xf32, #tpu.memory_space<vmem>>, %arg14: memref<512x64xbf16, #tpu.memory_space<vmem>>, %arg15: memref<1x64xf32, #tpu.memory_space<vmem>>, %arg16: memref<256x64xf32, #tpu.memory_space<vmem>>) attributes {dimension_semantics = [#tpu.dimension_semantics<parallel>], iteration_bounds = array<i64: 1>, scalar_prefetch = 0 : i64, scratch_operands = 0 : i64, tpu.core_type = #tpu.core_type<tc>, window_params = [{transform_indices = @transform_0, window_bounds = array<i64: 256, 32>}, {pipeline_mode = #tpu.pipeline_mode<synchronous>, transform_indices = @transform_1, window_bounds = array<i64: 32, 512>}, {pipeline_mode = #tpu.pipeline_mode<synchronous>, transform_indices = @transform_2, window_bounds = array<i64: 1, 512>}, {pipeline_mode = #tpu.pipeline_mode<synchronous>, transform_indices = @transform_3, window_bounds = array<i64: 1, 512>}, {pipeline_mode = #tpu.pipeline_mode<synchronous>, transform_indices = @transform_4, window_bounds = array<i64: 1, 512>}, {pipeline_mode = #tpu.pipeline_mode<synchronous>, transform_indices = @transform_5, window_bounds = array<i64: 512, 512>}, {pipeline_mode = #tpu.pipeline_mode<synchronous>, transform_indices = @transform_6, window_bounds = array<i64: 1, 512>}, {pipeline_mode = #tpu.pipeline_mode<synchronous>, transform_indices = @transform_7, window_bounds = array<i64: 1, 512>}, {pipeline_mode = #tpu.pipeline_mode<synchronous>, transform_indices = @transform_8, window_bounds = array<i64: 1, 512>}, {pipeline_mode = #tpu.pipeline_mode<synchronous>, transform_indices = @transform_9, window_bounds = array<i64: 512, 512>}, {pipeline_mode = #tpu.pipeline_mode<synchronous>, transform_indices = @transform_10, window_bounds = array<i64: 1, 512>}, {pipeline_mode = #tpu.pipeline_mode<synchronous>, transform_indices = @transform_11, window_bounds = array<i64: 1, 512>}, {pipeline_mode = #tpu.pipeline_mode<synchronous>, transform_indices = @transform_12, window_bounds = array<i64: 1, 512>}, {pipeline_mode = #tpu.pipeline_mode<synchronous>, transform_indices = @transform_13, window_bounds = array<i64: 512, 64>}, {pipeline_mode = #tpu.pipeline_mode<synchronous>, transform_indices = @transform_14, window_bounds = array<i64: 1, 64>}, {transform_indices = @transform_15, window_bounds = array<i64: 256, 64>}]} {
    %c0 = arith.constant 0 : index
    %c0_0 = arith.constant 0 : index
    %0 = vector.load %arg1[%c0, %c0_0] : memref<256x32xf32, #tpu.memory_space<vmem>>, vector<256x32xf32>
    %c0_1 = arith.constant 0 : index
    %c0_2 = arith.constant 0 : index
    %1 = vector.load %arg2[%c0_1, %c0_2] : memref<32x512xbf16, #tpu.memory_space<vmem>>, vector<32x512xbf16>
    %2 = arith.extf %1 : vector<32x512xbf16> to vector<32x512xf32>
    %cst = arith.constant dense<0.000000e+00> : vector<256x512xf32>
    %3 = tpu.matmul %0, %2, %cst {dimension_numbers = #tpu.dot_dimension_numbers<[1], [0], [0], [1], [0, 0, 1, 1], [], []>} : vector<256x32xf32>, vector<32x512xf32>, vector<256x512xf32> -> vector<256x512xf32>
    %c0_3 = arith.constant 0 : index
    %c0_4 = arith.constant 0 : index
    %4 = vector.load %arg3[%c0_3, %c0_4] : memref<1x512xf32, #tpu.memory_space<vmem>>, vector<1x512xf32>
    %5 = vector.broadcast %4 : vector<1x512xf32> to vector<256x512xf32>
    %6 = arith.addf %3, %5 : vector<256x512xf32>
    %cst_5 = arith.constant 0.000000e+00 : f32
    %7 = vector.broadcast %cst_5 : f32 to vector<256x512xf32>
    %8 = arith.maximumf %6, %7 : vector<256x512xf32>
    %c0_6 = arith.constant 0 : index
    %c0_7 = arith.constant 0 : index
    %9 = vector.load %arg4[%c0_6, %c0_7] : memref<1x512xf32, #tpu.memory_space<vmem>>, vector<1x512xf32>
    %10 = vector.broadcast %9 : vector<1x512xf32> to vector<256x512xf32>
    %11 = arith.mulf %8, %10 : vector<256x512xf32>
    %c0_8 = arith.constant 0 : index
    %c0_9 = arith.constant 0 : index
    %12 = vector.load %arg5[%c0_8, %c0_9] : memref<1x512xf32, #tpu.memory_space<vmem>>, vector<1x512xf32>
    %13 = vector.broadcast %12 : vector<1x512xf32> to vector<256x512xf32>
    %14 = arith.addf %11, %13 : vector<256x512xf32>
    %c0_10 = arith.constant 0 : index
    %c0_11 = arith.constant 0 : index
    %15 = vector.load %arg6[%c0_10, %c0_11] : memref<512x512xbf16, #tpu.memory_space<vmem>>, vector<512x512xbf16>
    %16 = arith.extf %15 : vector<512x512xbf16> to vector<512x512xf32>
    %cst_12 = arith.constant dense<0.000000e+00> : vector<256x512xf32>
    %17 = tpu.matmul %14, %16, %cst_12 {dimension_numbers = #tpu.dot_dimension_numbers<[1], [0], [0], [1], [0, 0, 1, 1], [], []>} : vector<256x512xf32>, vector<512x512xf32>, vector<256x512xf32> -> vector<256x512xf32>
    %c0_13 = arith.constant 0 : index
    %c0_14 = arith.constant 0 : index
    %18 = vector.load %arg7[%c0_13, %c0_14] : memref<1x512xf32, #tpu.memory_space<vmem>>, vector<1x512xf32>
    %19 = vector.broadcast %18 : vector<1x512xf32> to vector<256x512xf32>
    %20 = arith.addf %17, %19 : vector<256x512xf32>
    %cst_15 = arith.constant 0.000000e+00 : f32
    %21 = vector.broadcast %cst_15 : f32 to vector<256x512xf32>
    %22 = arith.maximumf %20, %21 : vector<256x512xf32>
    %c0_16 = arith.constant 0 : index
    %c0_17 = arith.constant 0 : index
    %23 = vector.load %arg8[%c0_16, %c0_17] : memref<1x512xf32, #tpu.memory_space<vmem>>, vector<1x512xf32>
    %24 = vector.broadcast %23 : vector<1x512xf32> to vector<256x512xf32>
    %25 = arith.mulf %22, %24 : vector<256x512xf32>
    %c0_18 = arith.constant 0 : index
    %c0_19 = arith.constant 0 : index
    %26 = vector.load %arg9[%c0_18, %c0_19] : memref<1x512xf32, #tpu.memory_space<vmem>>, vector<1x512xf32>
    %27 = vector.broadcast %26 : vector<1x512xf32> to vector<256x512xf32>
    %28 = arith.addf %25, %27 : vector<256x512xf32>
    %c0_20 = arith.constant 0 : index
    %c0_21 = arith.constant 0 : index
    %29 = vector.load %arg10[%c0_20, %c0_21] : memref<512x512xbf16, #tpu.memory_space<vmem>>, vector<512x512xbf16>
    %30 = arith.extf %29 : vector<512x512xbf16> to vector<512x512xf32>
    %cst_22 = arith.constant dense<0.000000e+00> : vector<256x512xf32>
    %31 = tpu.matmul %28, %30, %cst_22 {dimension_numbers = #tpu.dot_dimension_numbers<[1], [0], [0], [1], [0, 0, 1, 1], [], []>} : vector<256x512xf32>, vector<512x512xf32>, vector<256x512xf32> -> vector<256x512xf32>
    %c0_23 = arith.constant 0 : index
    %c0_24 = arith.constant 0 : index
    %32 = vector.load %arg11[%c0_23, %c0_24] : memref<1x512xf32, #tpu.memory_space<vmem>>, vector<1x512xf32>
    %33 = vector.broadcast %32 : vector<1x512xf32> to vector<256x512xf32>
    %34 = arith.addf %31, %33 : vector<256x512xf32>
    %cst_25 = arith.constant 0.000000e+00 : f32
    %35 = vector.broadcast %cst_25 : f32 to vector<256x512xf32>
    %36 = arith.maximumf %34, %35 : vector<256x512xf32>
    %c0_26 = arith.constant 0 : index
    %c0_27 = arith.constant 0 : index
    %37 = vector.load %arg12[%c0_26, %c0_27] : memref<1x512xf32, #tpu.memory_space<vmem>>, vector<1x512xf32>
    %38 = vector.broadcast %37 : vector<1x512xf32> to vector<256x512xf32>
    %39 = arith.mulf %36, %38 : vector<256x512xf32>
    %c0_28 = arith.constant 0 : index
    %c0_29 = arith.constant 0 : index
    %40 = vector.load %arg13[%c0_28, %c0_29] : memref<1x512xf32, #tpu.memory_space<vmem>>, vector<1x512xf32>
    %41 = vector.broadcast %40 : vector<1x512xf32> to vector<256x512xf32>
    %42 = arith.addf %39, %41 : vector<256x512xf32>
    %c0_30 = arith.constant 0 : index
    %c0_31 = arith.constant 0 : index
    %43 = vector.load %arg14[%c0_30, %c0_31] : memref<512x64xbf16, #tpu.memory_space<vmem>>, vector<512x64xbf16>
    %44 = arith.extf %43 : vector<512x64xbf16> to vector<512x64xf32>
    %cst_32 = arith.constant dense<0.000000e+00> : vector<256x64xf32>
    %45 = tpu.matmul %42, %44, %cst_32 {dimension_numbers = #tpu.dot_dimension_numbers<[1], [0], [0], [1], [0, 0, 1, 1], [], []>} : vector<256x512xf32>, vector<512x64xf32>, vector<256x64xf32> -> vector<256x64xf32>
    %c0_33 = arith.constant 0 : index
    %c0_34 = arith.constant 0 : index
    %46 = vector.load %arg15[%c0_33, %c0_34] : memref<1x64xf32, #tpu.memory_space<vmem>>, vector<1x64xf32>
    %47 = vector.broadcast %46 : vector<1x64xf32> to vector<256x64xf32>
    %48 = arith.addf %45, %47 : vector<256x64xf32>
    %c0_35 = arith.constant 0 : index
    %c0_36 = arith.constant 0 : index
    %49 = vector.load %arg16[%c0_35, %c0_36] : memref<256x64xf32, #tpu.memory_space<vmem>>, vector<256x64xf32>
    tpu.vector_store %arg16[%c0_35, %c0_36], %48 {strides = array<i32>} : memref<256x64xf32, #tpu.memory_space<vmem>>, vector<256x64xf32>,
    return
  }
  func.func @transform_0(%arg0: i32) -> (i32, i32) {
    %c0_i32 = arith.constant 0 : i32
    %c0_i32_0 = arith.constant 0 : i32
    return %arg0, %c0_i32 : i32, i32
  }
  func.func @transform_1(%arg0: i32) -> (i32, i32) {
    %c0_i32 = arith.constant 0 : i32
    %c0_i32_0 = arith.constant 0 : i32
    %c0_i32_1 = arith.constant 0 : i32
    return %c0_i32, %c0_i32_0 : i32, i32
  }
  func.func @transform_2(%arg0: i32) -> (i32, i32) {
    %c0_i32 = arith.constant 0 : i32
    %c0_i32_0 = arith.constant 0 : i32
    %c0_i32_1 = arith.constant 0 : i32
    return %c0_i32, %c0_i32_0 : i32, i32
  }
  func.func @transform_3(%arg0: i32) -> (i32, i32) {
    %c0_i32 = arith.constant 0 : i32
    %c0_i32_0 = arith.constant 0 : i32
    %c0_i32_1 = arith.constant 0 : i32
    return %c0_i32, %c0_i32_0 : i32, i32
  }
  func.func @transform_4(%arg0: i32) -> (i32, i32) {
    %c0_i32 = arith.constant 0 : i32
    %c0_i32_0 = arith.constant 0 : i32
    %c0_i32_1 = arith.constant 0 : i32
    return %c0_i32, %c0_i32_0 : i32, i32
  }
  func.func @transform_5(%arg0: i32) -> (i32, i32) {
    %c0_i32 = arith.constant 0 : i32
    %c0_i32_0 = arith.constant 0 : i32
    %c0_i32_1 = arith.constant 0 : i32
    return %c0_i32, %c0_i32_0 : i32, i32
  }
  func.func @transform_6(%arg0: i32) -> (i32, i32) {
    %c0_i32 = arith.constant 0 : i32
    %c0_i32_0 = arith.constant 0 : i32
    %c0_i32_1 = arith.constant 0 : i32
    return %c0_i32, %c0_i32_0 : i32, i32
  }
  func.func @transform_7(%arg0: i32) -> (i32, i32) {
    %c0_i32 = arith.constant 0 : i32
    %c0_i32_0 = arith.constant 0 : i32
    %c0_i32_1 = arith.constant 0 : i32
    return %c0_i32, %c0_i32_0 : i32, i32
  }
  func.func @transform_8(%arg0: i32) -> (i32, i32) {
    %c0_i32 = arith.constant 0 : i32
    %c0_i32_0 = arith.constant 0 : i32
    %c0_i32_1 = arith.constant 0 : i32
    return %c0_i32, %c0_i32_0 : i32, i32
  }
  func.func @transform_9(%arg0: i32) -> (i32, i32) {
    %c0_i32 = arith.constant 0 : i32
    %c0_i32_0 = arith.constant 0 : i32
    %c0_i32_1 = arith.constant 0 : i32
    return %c0_i32, %c0_i32_0 : i32, i32
  }
  func.func @transform_10(%arg0: i32) -> (i32, i32) {
    %c0_i32 = arith.constant 0 : i32
    %c0_i32_0 = arith.constant 0 : i32
    %c0_i32_1 = arith.constant 0 : i32
    return %c0_i32, %c0_i32_0 : i32, i32
  }
  func.func @transform_11(%arg0: i32) -> (i32, i32) {
    %c0_i32 = arith.constant 0 : i32
    %c0_i32_0 = arith.constant 0 : i32
    %c0_i32_1 = arith.constant 0 : i32
    return %c0_i32, %c0_i32_0 : i32, i32
  }
  func.func @transform_12(%arg0: i32) -> (i32, i32) {
    %c0_i32 = arith.constant 0 : i32
    %c0_i32_0 = arith.constant 0 : i32
    %c0_i32_1 = arith.constant 0 : i32
    return %c0_i32, %c0_i32_0 : i32, i32
  }
  func.func @transform_13(%arg0: i32) -> (i32, i32) {
    %c0_i32 = arith.constant 0 : i32
    %c0_i32_0 = arith.constant 0 : i32
    %c0_i32_1 = arith.constant 0 : i32
    return %c0_i32, %c0_i32_0 : i32, i32
  }
  func.func @transform_14(%arg0: i32) -> (i32, i32) {
    %c0_i32 = arith.constant 0 : i32
    %c0_i32_0 = arith.constant 0 : i32
    %c0_i32_1 = arith.constant 0 : i32
    return %c0_i32, %c0_i32_0 : i32, i32
  }
  func.func @transform_15(%arg0: i32) -> (i32, i32) {
    %c0_i32 = arith.constant 0 : i32
    %c0_i32_0 = arith.constant 0 : i32
    return %arg0, %c0_i32 : i32, i32
  }
}

</mosaic_0001>

<llo_original>
// kernel: tpu_custom_call.1
$region0: #{tpu_custom_call.1}
  #allocation0 [shape = 'u32[]', space=smem, size = 0x4, offset = 0x4, fixed_abs, tag = 'smem constant byte address 0x4 - core index']
  #allocation1 [shape = 'u32[144,128]{1,0:T(1,128)}', space=vmem, size = 0x12000, scoped, tag = 'internal scratch']
  %s0 = inlined_call_operand.vmem [shape: f32[256,32], index: 0, kind: input, shape index: {}]
  %s1 = inlined_call_operand.vmem [shape: bf16[32,512], index: 1, kind: input, shape index: {}]
  %s2 = inlined_call_operand.vmem [shape: f32[1,512], index: 2, kind: input, shape index: {}]
  %s3 = inlined_call_operand.vmem [shape: f32[1,512], index: 3, kind: input, shape index: {}]
  %s4 = inlined_call_operand.vmem [shape: f32[1,512], index: 4, kind: input, shape index: {}]
  %s5 = inlined_call_operand.hbm [shape: bf16[512,512], index: 5, kind: input, shape index: {}]
  %s6 = inlined_call_operand.vmem [shape: f32[1,512], index: 6, kind: input, shape index: {}]
  %s7 = inlined_call_operand.vmem [shape: f32[1,512], index: 7, kind: input, shape index: {}]
  %s8 = inlined_call_operand.vmem [shape: f32[1,512], index: 8, kind: input, shape index: {}]
  %s9 = inlined_call_operand.hbm [shape: bf16[512,512], index: 9, kind: input, shape index: {}]
  %s10 = inlined_call_operand.vmem [shape: f32[1,512], index: 10, kind: input, shape index: {}]
  %s11 = inlined_call_operand.vmem [shape: f32[1,512], index: 11, kind: input, shape index: {}]
  %s12 = inlined_call_operand.vmem [shape: f32[1,512], index: 12, kind: input, shape index: {}]
  %s13 = inlined_call_operand.vmem [shape: bf16[512,64], index: 13, kind: input, shape index: {}]
  %s14 = inlined_call_operand.vmem [shape: f32[1,64], index: 14, kind: input, shape index: {}]
  %s15 = inlined_call_operand.vmem [shape: f32[256,64], index: 15, kind: output, shape index: {}]
  %s16 = sld [smem:[#allocation0]]
  $region78: #{tpu_custom_call.1} parent=0
    _
  %s18 = ssub.s32 1, %s16
  %s19 = scalar_select 0, %s18, %s16
  $region1: #{tpu_custom_call.1} parent=0
    #allocation2 [shape = 'u8[524288]{0}', space=vmem, size = 0x80000, scoped, tag = 'input window, operand 5, single buffered']
    #allocation3 [shape = 's32[1]{0}', space=sflag, size = 0x4, scoped, tag = 'scoped memory for tpu_custom_call.1']
    #allocation4 [shape = 'u8[524288]{0}', space=vmem, size = 0x80000, scoped, tag = 'input window, operand 9, single buffered']
    #allocation5 [shape = 's32[1]{0}', space=sflag, size = 0x4, scoped, tag = 'scoped memory for tpu_custom_call.1']
    %20 = vsyncpa [#allocation3], 0
    %21 = vsyncpa [#allocation5], 0
    // Predicated region
    $region2: #{tpu_custom_call.1} parent=1 // pred_check
      _
    $region3: #{tpu_custom_call.1} parent=1 // pred_check_branch
      %23 = sbr.rel (0) target = $region5
    $region4: #{tpu_custom_call.1} parent=1 // pred_region
      _
    $region5: #{tpu_custom_call.1} parent=1 // pred_fallthru
      _
    // Predicated region
    $region6: #{tpu_custom_call.1} parent=1 // pred_check
      _
    $region7: #{tpu_custom_call.1} parent=1 // pred_check_branch
      %25 = sbr.rel (0) target = $region9
    $region8: #{tpu_custom_call.1} parent=1 // pred_region
      _
    $region9: #{tpu_custom_call.1} parent=1 // pred_fallthru
      _
    // Predicated region
    $region10: #{tpu_custom_call.1} parent=1 // pred_check
      _
    $region11: #{tpu_custom_call.1} parent=1 // pred_check_branch
      %27 = sbr.rel (0) target = $region13
    $region12: #{tpu_custom_call.1} parent=1 // pred_region
      _
    $region13: #{tpu_custom_call.1} parent=1 // pred_fallthru
      _
    // Predicated region
    $region14: #{tpu_custom_call.1} parent=1 // pred_check
      _
    $region15: #{tpu_custom_call.1} parent=1 // pred_check_branch
      %29 = sbr.rel (0) target = $region17
    $region16: #{tpu_custom_call.1} parent=1 // pred_region
      _
    $region17: #{tpu_custom_call.1} parent=1 // pred_fallthru
      _
    // Predicated region
    $region18: #{tpu_custom_call.1} parent=1 // pred_check
      _
    $region19: #{tpu_custom_call.1} parent=1 // pred_check_branch
      %31 = sbr.rel (0) target = $region21
    $region20: #{tpu_custom_call.1} parent=1 // pred_region
      _
    $region21: #{tpu_custom_call.1} parent=1 // pred_fallthru
      _
    // Predicated region
    $region22: #{tpu_custom_call.1} parent=1 // pred_check
      _
    $region23: #{tpu_custom_call.1} parent=1 // pred_check_branch
      %33 = sbr.rel (0) target = $region25
    $region24: #{tpu_custom_call.1} parent=1 // pred_region
      %s35 = ssub.s32 16384, 16384
      %36 = vsyncadd [#allocation3], %s35
      %s37 = sshll.u32 [#allocation2], 4
      %s38 = int_to_ptr.vmem [resolvable:$true] %s37
      %43 = dma.hbm_to_vmem [thread:$0]  %s5, 16384, %s38, [#allocation3], 256, 256, 16
    $region25: #{tpu_custom_call.1} parent=1 // pred_fallthru
      _
    // Predicated region
    $region26: #{tpu_custom_call.1} parent=1 // pred_check
      _
    $region27: #{tpu_custom_call.1} parent=1 // pred_check_branch
      %45 = sbr.rel (0) target = $region29
    $region28: #{tpu_custom_call.1} parent=1 // pred_region
      _
    $region29: #{tpu_custom_call.1} parent=1 // pred_fallthru
      _
    // Predicated region
    $region30: #{tpu_custom_call.1} parent=1 // pred_check
      _
    $region31: #{tpu_custom_call.1} parent=1 // pred_check_branch
      %47 = sbr.rel (0) target = $region33
    $region32: #{tpu_custom_call.1} parent=1 // pred_region
      _
    $region33: #{tpu_custom_call.1} parent=1 // pred_fallthru
      _
    // Predicated region
    $region34: #{tpu_custom_call.1} parent=1 // pred_check
      _
    $region35: #{tpu_custom_call.1} parent=1 // pred_check_branch
      %49 = sbr.rel (0) target = $region37
    $region36: #{tpu_custom_call.1} parent=1 // pred_region
      _
    $region37: #{tpu_custom_call.1} parent=1 // pred_fallthru
      _
    // Predicated region
    $region38: #{tpu_custom_call.1} parent=1 // pred_check
      _
    $region39: #{tpu_custom_call.1} parent=1 // pred_check_branch
      %51 = sbr.rel (0) target = $region41
    $region40: #{tpu_custom_call.1} parent=1 // pred_region
      %s53 = ssub.s32 16384, 16384
      %54 = vsyncadd [#allocation5], %s53
      %s55 = sshll.u32 [#allocation4], 4
      %s56 = int_to_ptr.vmem [resolvable:$true] %s55
      %61 = dma.hbm_to_vmem [thread:$0]  %s9, 16384, %s56, [#allocation5], 256, 256, 16
    $region41: #{tpu_custom_call.1} parent=1 // pred_fallthru
      _
    // Predicated region
    $region42: #{tpu_custom_call.1} parent=1 // pred_check
      _
    $region43: #{tpu_custom_call.1} parent=1 // pred_check_branch
      %63 = sbr.rel (0) target = $region45
    $region44: #{tpu_custom_call.1} parent=1 // pred_region
      _
    $region45: #{tpu_custom_call.1} parent=1 // pred_fallthru
      _
    // Predicated region
    $region46: #{tpu_custom_call.1} parent=1 // pred_check
      _
    $region47: #{tpu_custom_call.1} parent=1 // pred_check_branch
      %65 = sbr.rel (0) target = $region49
    $region48: #{tpu_custom_call.1} parent=1 // pred_region
      _
    $region49: #{tpu_custom_call.1} parent=1 // pred_fallthru
      _
    // Predicated region
    $region50: #{tpu_custom_call.1} parent=1 // pred_check
      _
    $region51: #{tpu_custom_call.1} parent=1 // pred_check_branch
      %67 = sbr.rel (0) target = $region53
    $region52: #{tpu_custom_call.1} parent=1 // pred_region
      _
    $region53: #{tpu_custom_call.1} parent=1 // pred_fallthru
      _
    // Predicated region
    $region54: #{tpu_custom_call.1} parent=1 // pred_check
      _
    $region55: #{tpu_custom_call.1} parent=1 // pred_check_branch
      %69 = sbr.rel (0) target = $region57
    $region56: #{tpu_custom_call.1} parent=1 // pred_region
      _
    $region57: #{tpu_custom_call.1} parent=1 // pred_fallthru
      _
    // Predicated region
    $region58: #{tpu_custom_call.1} parent=1 // pred_check
      _
    $region59: #{tpu_custom_call.1} parent=1 // pred_check_branch
      %71 = sbr.rel (0) target = $region61
    $region60: #{tpu_custom_call.1} parent=1 // pred_region
      _
    $region61: #{tpu_custom_call.1} parent=1 // pred_fallthru
      _
    // Predicated region
    $region62: #{tpu_custom_call.1} parent=1 // pred_check
      _
    $region63: #{tpu_custom_call.1} parent=1 // pred_check_branch
      %73 = sbr.rel (0) target = $region65
    $region64: #{tpu_custom_call.1} parent=1 // pred_region
      %74 = dma.done [#allocation3], 16384
    $region65: #{tpu_custom_call.1} parent=1 // pred_fallthru
      _
    // Predicated region
    $region66: #{tpu_custom_call.1} parent=1 // pred_check
      _
    $region67: #{tpu_custom_call.1} parent=1 // pred_check_branch
      %76 = sbr.rel (0) target = $region69
    $region68: #{tpu_custom_call.1} parent=1 // pred_region
      %77 = dma.done [#allocation5], 16384
    $region69: #{tpu_custom_call.1} parent=1 // pred_fallthru
      _
    %v78 = vld [vmem:[%s0] sm:$0xff]
    %v79 = vld [vmem:[%s0 + $0x8] sm:$0xff]
    %v80 = vld [vmem:[%s0 + $0x10] sm:$0xff]
    %v81 = vld [vmem:[%s0 + $0x18] sm:$0xff]
    %v82 = vld [vmem:[%s0 + $0x20] sm:$0xff]
    %v83 = vld [vmem:[%s0 + $0x28] sm:$0xff]
    %v84 = vld [vmem:[%s0 + $0x30] sm:$0xff]
    %v85 = vld [vmem:[%s0 + $0x38] sm:$0xff]
    %v86 = vld [vmem:[%s0 + $0x40] sm:$0xff]
    %v87 = vld [vmem:[%s0 + $0x48] sm:$0xff]
    %v88 = vld [vmem:[%s0 + $0x50] sm:$0xff]
    %v89 = vld [vmem:[%s0 + $0x58] sm:$0xff]
    %v90 = vld [vmem:[%s0 + $0x60] sm:$0xff]
    %v91 = vld [vmem:[%s0 + $0x68] sm:$0xff]
    %v92 = vld [vmem:[%s0 + $0x70] sm:$0xff]
    %v93 = vld [vmem:[%s0 + $0x78] sm:$0xff]
    %v94 = vld [vmem:[%s0 + $0x80] sm:$0xff]
    %v95 = vld [vmem:[%s0 + $0x88] sm:$0xff]
    %v96 = vld [vmem:[%s0 + $0x90] sm:$0xff]
    %v97 = vld [vmem:[%s0 + $0x98] sm:$0xff]
    %v98 = vld [vmem:[%s0 + $0xa0] sm:$0xff]
    %v99 = vld [vmem:[%s0 + $0xa8] sm:$0xff]
    %v100 = vld [vmem:[%s0 + $0xb0] sm:$0xff]
    %v101 = vld [vmem:[%s0 + $0xb8] sm:$0xff]
    %v102 = vld [vmem:[%s0 + $0xc0] sm:$0xff]
    %v103 = vld [vmem:[%s0 + $0xc8] sm:$0xff]
    %v104 = vld [vmem:[%s0 + $0xd0] sm:$0xff]
    %v105 = vld [vmem:[%s0 + $0xd8] sm:$0xff]
    %v106 = vld [vmem:[%s0 + $0xe0] sm:$0xff]
    %v107 = vld [vmem:[%s0 + $0xe8] sm:$0xff]
    %v108 = vld [vmem:[%s0 + $0xf0] sm:$0xff]
    %v109 = vld [vmem:[%s0 + $0xf8] sm:$0xff]
    %v110 = vld [vmem:[%s1] sm:$0xff]
    %v111 = vld [vmem:[%s1 + $0x8] sm:$0xff]
    %v112 = vld [vmem:[%s1 + $0x10] sm:$0xff]
    %v113 = vld [vmem:[%s1 + $0x18] sm:$0xff]
    %v114 = vld [vmem:[%s1 + $0x20] sm:$0xff]
    %v115 = vld [vmem:[%s1 + $0x28] sm:$0xff]
    %v116 = vld [vmem:[%s1 + $0x30] sm:$0xff]
    %v117 = vld [vmem:[%s1 + $0x38] sm:$0xff]
    %v118 = vunpack.c.l.bf16 %v110
    %v119 = vunpack.c.h.bf16 %v110
    %v120 = vunpack.c.l.bf16 %v111
    %v121 = vunpack.c.h.bf16 %v111
    %v122 = vunpack.c.l.bf16 %v112
    %v123 = vunpack.c.h.bf16 %v112
    %v124 = vunpack.c.l.bf16 %v113
    %v125 = vunpack.c.h.bf16 %v113
    %v126 = vunpack.c.l.bf16 %v114
    %v127 = vunpack.c.h.bf16 %v114
    %v128 = vunpack.c.l.bf16 %v115
    %v129 = vunpack.c.h.bf16 %v115
    %v130 = vunpack.c.l.bf16 %v116
    %v131 = vunpack.c.h.bf16 %v116
    %v132 = vunpack.c.l.bf16 %v117
    %v133 = vunpack.c.h.bf16 %v117
    %v134 = vld [vmem:[%s2] sm:$0xf]
    %v136 = vlaneseq
    %v137 = vshrl.u32 %v136, 7
    %v138 = vsub.s32 0, %v137
    %v139 = vrot.slane %v134, %v138
    %v140 = vlaneseq
    %v141 = vshrl.u32 %v140, 7
    %v142 = vsub.s32 1, %v141
    %v143 = vrot.slane %v134, %v142
    %v144 = vlaneseq
    %v145 = vshrl.u32 %v144, 7
    %v146 = vsub.s32 2, %v145
    %v147 = vrot.slane %v134, %v146
    %v148 = vlaneseq
    %v149 = vshrl.u32 %v148, 7
    %v150 = vsub.s32 3, %v149
    %v151 = vrot.slane %v134, %v150
    %vm156 = vcmask 261120
    %v158 = vsel %vm156, %v78, 0
    %v161 = vsel %vm156, %v79, 0
    %v164 = vsel %vm156, %v80, 0
    %v167 = vsel %vm156, %v81, 0
    %v170 = vsel %vm156, %v82, 0
    %v173 = vsel %vm156, %v83, 0
    %v176 = vsel %vm156, %v84, 0
    %v179 = vsel %vm156, %v85, 0
    %v182 = vsel %vm156, %v86, 0
    %v185 = vsel %vm156, %v87, 0
    %v188 = vsel %vm156, %v88, 0
    %v191 = vsel %vm156, %v89, 0
    %v194 = vsel %vm156, %v90, 0
    %v197 = vsel %vm156, %v91, 0
    %v200 = vsel %vm156, %v92, 0
    %v203 = vsel %vm156, %v93, 0
    %v206 = vsel %vm156, %v94, 0
    %v209 = vsel %vm156, %v95, 0
    %v212 = vsel %vm156, %v96, 0
    %v215 = vsel %vm156, %v97, 0
    %v218 = vsel %vm156, %v98, 0
    %v221 = vsel %vm156, %v99, 0
    %v224 = vsel %vm156, %v100, 0
    %v227 = vsel %vm156, %v101, 0
    %v230 = vsel %vm156, %v102, 0
    %v233 = vsel %vm156, %v103, 0
    %v236 = vsel %vm156, %v104, 0
    %v239 = vsel %vm156, %v105, 0
    %v242 = vsel %vm156, %v106, 0
    %v245 = vsel %vm156, %v107, 0
    %v248 = vsel %vm156, %v108, 0
    %v251 = vsel %vm156, %v109, 0
    %253 = vmatprep.subr.mxu0 %v119
    %254 = vmatpush1.msra.mxu0 %v118
    %255 = vmatprep.subr.mxu0 %v123
    %256 = vmatpush1.msra.mxu0 %v122
    %257 = vmatprep.subr.mxu0 %v127
    %258 = vmatpush1.msra.mxu0 %v126
    %259 = vmatprep.subr.mxu0 %v131
    %260 = vmatpush1.msra.mxu0 %v130
    %261 = vmatprep.subr.mxu0 0.0
    %262 = vmatpush1.msra.mxu0 0.0
    %263 = vmatprep.subr.mxu0 0.0
    %264 = vmatpush1.msra.mxu0 0.0
    %265 = vmatprep.subr.mxu0 0.0
    %266 = vmatpush1.msra.mxu0 0.0
    %267 = vmatprep.subr.mxu0 0.0
    %268 = vmatpush1.msra.mxu0 0.0
    %269 = vmatprep.subr.mxu0 0.0
    %270 = vmatpush1.msra.mxu0 0.0
    %271 = vmatprep.subr.mxu0 0.0
    %272 = vmatpush1.msra.mxu0 0.0
    %273 = vmatprep.subr.mxu0 0.0
    %274 = vmatpush1.msra.mxu0 0.0
    %275 = vmatprep.subr.mxu0 0.0
    %276 = vmatpush1.msra.mxu0 0.0
    %277 = vmatprep.subr.mxu0 0.0
    %278 = vmatpush1.msra.mxu0 0.0
    %279 = vmatprep.subr.mxu0 0.0
    %280 = vmatpush1.msra.mxu0 0.0
    %281 = vmatprep.subr.mxu0 0.0
    %282 = vmatpush1.msra.mxu0 0.0
    %283 = vmatprep.subr.mxu0 0.0
    %284 = vmatpush1.msra.mxu0 0.0
    %285 = vmatprep.subr.mxu0 0.0
    %286 = vmatpush1.msra.mxu0 0.0
    %287 = vmatprep.subr.mxu0 0.0
    %288 = vmatpush1.msra.mxu0 0.0
    %289 = vmatprep.subr.mxu0 0.0
    %290 = vmatpush1.msra.mxu0 0.0
    %291 = vmatprep.subr.mxu0 0.0
    %292 = vmatpush1.msra.mxu0 0.0
    %293 = vmatprep.subr.mxu0 0.0
    %294 = vmatpush1.msra.mxu0 0.0
    %295 = vmatprep.subr.mxu0 0.0
    %296 = vmatpush1.msra.mxu0 0.0
    %297 = vmatprep.subr.mxu0 0.0
    %298 = vmatpush1.msra.mxu0 0.0
    %299 = vmatprep.subr.mxu0 0.0
    %300 = vmatpush1.msra.mxu0 0.0
    %301 = vmatprep.subr.mxu0 0.0
    %302 = vmatpush1.msra.mxu0 0.0
    %303 = vmatprep.subr.mxu0 0.0
    %304 = vmatpush1.msra.mxu0 0.0
    %305 = vmatprep.subr.mxu0 0.0
    %306 = vmatpush1.msra.mxu0 0.0
    %307 = vmatprep.subr.mxu0 0.0
    %308 = vmatpush1.msra.mxu0 0.0
    %309 = vmatprep.subr.mxu0 0.0
    %310 = vmatpush1.msra.mxu0 0.0
    %311 = vmatprep.subr.mxu0 0.0
    %312 = vmatpush1.msra.mxu0 0.0
    %313 = vmatprep.subr.mxu0 0.0
    %314 = vmatpush1.msra.mxu0 0.0
    %315 = vmatprep.subr.mxu0 0.0
    %316 = vmatpush1.msra.mxu0 0.0
    %317 = vmatprep.mubr.f32.mxu0 0.0
    %318 = vmatmul.mubr.f32.gmra.mrb[0].mxu0 %v158
    %v319 = vpop.f32.mrb[0].mxu0
    %v320 = vadd.f32 %v139, %v319
    %v321 = vpop.f32.mrb[0].mxu0
    %v322 = vadd.f32 %v143, %v321
    %323 = vmatprep.mubr.f32.mxu0 0.0
    %324 = vmatmul.mubr.f32.gmra.mrb[0].mxu0 %v161
    %v325 = vpop.f32.mrb[0].mxu0
    %v326 = vadd.f32 %v139, %v325
    %v327 = vpop.f32.mrb[0].mxu0
    %v328 = vadd.f32 %v143, %v327
    %329 = vmatprep.mubr.f32.mxu0 0.0
    %330 = vmatmul.mubr.f32.gmra.mrb[0].mxu0 %v164
    %v331 = vpop.f32.mrb[0].mxu0
    %v332 = vadd.f32 %v139, %v331
    %v333 = vpop.f32.mrb[0].mxu0
    %v334 = vadd.f32 %v143, %v333
    %335 = vmatprep.mubr.f32.mxu0 0.0
    %336 = vmatmul.mubr.f32.gmra.mrb[0].mxu0 %v167
    %v337 = vpop.f32.mrb[0].mxu0
    %v338 = vadd.f32 %v139, %v337
    %v339 = vpop.f32.mrb[0].mxu0
    %v340 = vadd.f32 %v143, %v339
    %341 = vmatprep.mubr.f32.mxu0 0.0
    %342 = vmatmul.mubr.f32.gmra.mrb[0].mxu0 %v170
    %v343 = vpop.f32.mrb[0].mxu0
    %v344 = vadd.f32 %v139, %v343
    %v345 = vpop.f32.mrb[0].mxu0
    %v346 = vadd.f32 %v143, %v345
    %347 = vmatprep.mubr.f32.mxu0 0.0
    %348 = vmatmul.mubr.f32.gmra.mrb[0].mxu0 %v173
    %v349 = vpop.f32.mrb[0].mxu0
    %v350 = vadd.f32 %v139, %v349
    %v351 = vpop.f32.mrb[0].mxu0
    %v352 = vadd.f32 %v143, %v351
    %353 = vmatprep.mubr.f32.mxu0 0.0
    %354 = vmatmul.mubr.f32.gmra.mrb[0].mxu0 %v176
    %v355 = vpop.f32.mrb[0].mxu0
    %v356 = vadd.f32 %v139, %v355
    %v357 = vpop.f32.mrb[0].mxu0
    %v358 = vadd.f32 %v143, %v357
    %359 = vmatprep.mubr.f32.mxu0 0.0
    %360 = vmatmul.mubr.f32.gmra.mrb[0].mxu0 %v179
    %v361 = vpop.f32.mrb[0].mxu0
    %v362 = vadd.f32 %v139, %v361
    %v363 = vpop.f32.mrb[0].mxu0
    %v364 = vadd.f32 %v143, %v363
    %365 = vmatprep.mubr.f32.mxu0 0.0
    %366 = vmatmul.mubr.f32.gmra.mrb[0].mxu0 %v182
    %v367 = vpop.f32.mrb[0].mxu0
    %v368 = vadd.f32 %v139, %v367
    %v369 = vpop.f32.mrb[0].mxu0
    %v370 = vadd.f32 %v143, %v369
    %371 = vmatprep.mubr.f32.mxu0 0.0
    %372 = vmatmul.mubr.f32.gmra.mrb[0].mxu0 %v185
    %v373 = vpop.f32.mrb[0].mxu0
    %v374 = vadd.f32 %v139, %v373
    %v375 = vpop.f32.mrb[0].mxu0
    %v376 = vadd.f32 %v143, %v375
    %377 = vmatprep.mubr.f32.mxu0 0.0
    %378 = vmatmul.mubr.f32.gmra.mrb[0].mxu0 %v188
    %v379 = vpop.f32.mrb[0].mxu0
    %v380 = vadd.f32 %v139, %v379
    %v381 = vpop.f32.mrb[0].mxu0
    %v382 = vadd.f32 %v143, %v381
    %383 = vmatprep.mubr.f32.mxu0 0.0
    %384 = vmatmul.mubr.f32.gmra.mrb[0].mxu0 %v191
    %v385 = vpop.f32.mrb[0].mxu0
    %v386 = vadd.f32 %v139, %v385
    %v387 = vpop.f32.mrb[0].mxu0
    %v388 = vadd.f32 %v143, %v387
    %389 = vmatprep.mubr.f32.mxu0 0.0
    %390 = vmatmul.mubr.f32.gmra.mrb[0].mxu0 %v194
    %v391 = vpop.f32.mrb[0].mxu0
    %v392 = vadd.f32 %v139, %v391
    %v393 = vpop.f32.mrb[0].mxu0
    %v394 = vadd.f32 %v143, %v393
    %395 = vmatprep.mubr.f32.mxu0 0.0
    %396 = vmatmul.mubr.f32.gmra.mrb[0].mxu0 %v197
    %v397 = vpop.f32.mrb[0].mxu0
    %v398 = vadd.f32 %v139, %v397
    %v399 = vpop.f32.mrb[0].mxu0
    %v400 = vadd.f32 %v143, %v399
    %401 = vmatprep.mubr.f32.mxu0 0.0
    %402 = vmatmul.mubr.f32.gmra.mrb[0].mxu0 %v200
    %v403 = vpop.f32.mrb[0].mxu0
    %v404 = vadd.f32 %v139, %v403
    %v405 = vpop.f32.mrb[0].mxu0
    %v406 = vadd.f32 %v143, %v405
    %407 = vmatprep.mubr.f32.mxu0 0.0
    %408 = vmatmul.mubr.f32.gmra.mrb[0].mxu0 %v203
    %v409 = vpop.f32.mrb[0].mxu0
    %v410 = vadd.f32 %v139, %v409
    %v411 = vpop.f32.mrb[0].mxu0
    %v412 = vadd.f32 %v143, %v411
    %413 = vmatprep.mubr.f32.mxu0 0.0
    %414 = vmatmul.mubr.f32.gmra.mrb[0].mxu0 %v206
    %v415 = vpop.f32.mrb[0].mxu0
    %v416 = vadd.f32 %v139, %v415
    %v417 = vpop.f32.mrb[0].mxu0
    %v418 = vadd.f32 %v143, %v417
    %419 = vmatprep.mubr.f32.mxu0 0.0
    %420 = vmatmul.mubr.f32.gmra.mrb[0].mxu0 %v209
    %v421 = vpop.f32.mrb[0].mxu0
    %v422 = vadd.f32 %v139, %v421
    %v423 = vpop.f32.mrb[0].mxu0
    %v424 = vadd.f32 %v143, %v423
    %425 = vmatprep.mubr.f32.mxu0 0.0
    %426 = vmatmul.mubr.f32.gmra.mrb[0].mxu0 %v212
    %v427 = vpop.f32.mrb[0].mxu0
    %v428 = vadd.f32 %v139, %v427
    %v429 = vpop.f32.mrb[0].mxu0
    %v430 = vadd.f32 %v143, %v429
    %431 = vmatprep.mubr.f32.mxu0 0.0
    %432 = vmatmul.mubr.f32.gmra.mrb[0].mxu0 %v215
    %v433 = vpop.f32.mrb[0].mxu0
    %v434 = vadd.f32 %v139, %v433
    %v435 = vpop.f32.mrb[0].mxu0
    %v436 = vadd.f32 %v143, %v435
    %437 = vmatprep.mubr.f32.mxu0 0.0
    %438 = vmatmul.mubr.f32.gmra.mrb[0].mxu0 %v218
    %v439 = vpop.f32.mrb[0].mxu0
    %v440 = vadd.f32 %v139, %v439
    %v441 = vpop.f32.mrb[0].mxu0
    %v442 = vadd.f32 %v143, %v441
    %443 = vmatprep.mubr.f32.mxu0 0.0
    %444 = vmatmul.mubr.f32.gmra.mrb[0].mxu0 %v221
    %v445 = vpop.f32.mrb[0].mxu0
    %v446 = vadd.f32 %v139, %v445
    %v447 = vpop.f32.mrb[0].mxu0
    %v448 = vadd.f32 %v143, %v447
    %449 = vmatprep.mubr.f32.mxu0 0.0
    %450 = vmatmul.mubr.f32.gmra.mrb[0].mxu0 %v224
    %v451 = vpop.f32.mrb[0].mxu0
    %v452 = vadd.f32 %v139, %v451
    %v453 = vpop.f32.mrb[0].mxu0
    %v454 = vadd.f32 %v143, %v453
    %455 = vmatprep.mubr.f32.mxu0 0.0
    %456 = vmatmul.mubr.f32.gmra.mrb[0].mxu0 %v227
    %v457 = vpop.f32.mrb[0].mxu0
    %v458 = vadd.f32 %v139, %v457
    %v459 = vpop.f32.mrb[0].mxu0
    %v460 = vadd.f32 %v143, %v459
    %461 = vmatprep.mubr.f32.mxu0 0.0
    %462 = vmatmul.mubr.f32.gmra.mrb[0].mxu0 %v230
    %v463 = vpop.f32.mrb[0].mxu0
    %v464 = vadd.f32 %v139, %v463
    %v465 = vpop.f32.mrb[0].mxu0
    %v466 = vadd.f32 %v143, %v465
    %467 = vmatprep.mubr.f32.mxu0 0.0
    %468 = vmatmul.mubr.f32.gmra.mrb[0].mxu0 %v233
    %v469 = vpop.f32.mrb[0].mxu0
    %v470 = vadd.f32 %v139, %v469
    %v471 = vpop.f32.mrb[0].mxu0
    %v472 = vadd.f32 %v143, %v471
    %473 = vmatprep.mubr.f32.mxu0 0.0
    %474 = vmatmul.mubr.f32.gmra.mrb[0].mxu0 %v236
    %v475 = vpop.f32.mrb[0].mxu0
    %v476 = vadd.f32 %v139, %v475
    %v477 = vpop.f32.mrb[0].mxu0
    %v478 = vadd.f32 %v143, %v477
    %479 = vmatprep.mubr.f32.mxu0 0.0
    %480 = vmatmul.mubr.f32.gmra.mrb[0].mxu0 %v239
    %v481 = vpop.f32.mrb[0].mxu0
    %v482 = vadd.f32 %v139, %v481
    %v483 = vpop.f32.mrb[0].mxu0
    %v484 = vadd.f32 %v143, %v483
    %485 = vmatprep.mubr.f32.mxu0 0.0
    %486 = vmatmul.mubr.f32.gmra.mrb[0].mxu0 %v242
    %v487 = vpop.f32.mrb[0].mxu0
    %v488 = vadd.f32 %v139, %v487
    %v489 = vpop.f32.mrb[0].mxu0
    %v490 = vadd.f32 %v143, %v489
    %491 = vmatprep.mubr.f32.mxu0 0.0
    %492 = vmatmul.mubr.f32.gmra.mrb[0].mxu0 %v245
    %v493 = vpop.f32.mrb[0].mxu0
    %v494 = vadd.f32 %v139, %v493
    %v495 = vpop.f32.mrb[0].mxu0
    %v496 = vadd.f32 %v143, %v495
    %497 = vmatprep.mubr.f32.mxu0 0.0
    %498 = vmatmul.mubr.f32.gmra.mrb[0].mxu0 %v248
    %v499 = vpop.f32.mrb[0].mxu0
    %v500 = vadd.f32 %v139, %v499
    %v501 = vpop.f32.mrb[0].mxu0
    %v502 = vadd.f32 %v143, %v501
    %503 = vmatprep.mubr.f32.mxu0 0.0
    %504 = vmatmul.mubr.f32.gmra.mrb[0].mxu0 %v251
    %v505 = vpop.f32.mrb[0].mxu0
    %v506 = vadd.f32 %v139, %v505
    %v507 = vpop.f32.mrb[0].mxu0
    %v508 = vadd.f32 %v143, %v507
    %509 = vdwg.mxu0
    %510 = vmatprep.subr.mxu0 %v121
    %511 = vmatpush1.msra.mxu0 %v120
    %512 = vmatprep.subr.mxu0 %v125
    %513 = vmatpush1.msra.mxu0 %v124
    %514 = vmatprep.subr.mxu0 %v129
    %515 = vmatpush1.msra.mxu0 %v128
    %516 = vmatprep.subr.mxu0 %v133
    %517 = vmatpush1.msra.mxu0 %v132
    %518 = vmatprep.subr.mxu0 0.0
    %519 = vmatpush1.msra.mxu0 0.0
    %520 = vmatprep.subr.mxu0 0.0
    %521 = vmatpush1.msra.mxu0 0.0
    %522 = vmatprep.subr.mxu0 0.0
    %523 = vmatpush1.msra.mxu0 0.0
    %524 = vmatprep.subr.mxu0 0.0
    %525 = vmatpush1.msra.mxu0 0.0
    %526 = vmatprep.subr.mxu0 0.0
    %527 = vmatpush1.msra.mxu0 0.0
    %528 = vmatprep.subr.mxu0 0.0
    %529 = vmatpush1.msra.mxu0 0.0
    %530 = vmatprep.subr.mxu0 0.0
    %531 = vmatpush1.msra.mxu0 0.0
    %532 = vmatprep.subr.mxu0 0.0
    %533 = vmatpush1.msra.mxu0 0.0
    %534 = vmatprep.subr.mxu0 0.0
    %535 = vmatpush1.msra.mxu0 0.0
    %536 = vmatprep.subr.mxu0 0.0
    %537 = vmatpush1.msra.mxu0 0.0
    %538 = vmatprep.subr.mxu0 0.0
    %539 = vmatpush1.msra.mxu0 0.0
    %540 = vmatprep.subr.mxu0 0.0
    %541 = vmatpush1.msra.mxu0 0.0
    %542 = vmatprep.subr.mxu0 0.0
    %543 = vmatpush1.msra.mxu0 0.0
    %544 = vmatprep.subr.mxu0 0.0
    %545 = vmatpush1.msra.mxu0 0.0
    %546 = vmatprep.subr.mxu0 0.0
    %547 = vmatpush1.msra.mxu0 0.0
    %548 = vmatprep.subr.mxu0 0.0
    %549 = vmatpush1.msra.mxu0 0.0
    %550 = vmatprep.subr.mxu0 0.0
    %551 = vmatpush1.msra.mxu0 0.0
    %552 = vmatprep.subr.mxu0 0.0
    %553 = vmatpush1.msra.mxu0 0.0
    %554 = vmatprep.subr.mxu0 0.0
    %555 = vmatpush1.msra.mxu0 0.0
    %556 = vmatprep.subr.mxu0 0.0
    %557 = vmatpush1.msra.mxu0 0.0
    %558 = vmatprep.subr.mxu0 0.0
    %559 = vmatpush1.msra.mxu0 0.0
    %560 = vmatprep.subr.mxu0 0.0
    %561 = vmatpush1.msra.mxu0 0.0
    %562 = vmatprep.subr.mxu0 0.0
    %563 = vmatpush1.msra.mxu0 0.0
    %564 = vmatprep.subr.mxu0 0.0
    %565 = vmatpush1.msra.mxu0 0.0
    %566 = vmatprep.subr.mxu0 0.0
    %567 = vmatpush1.msra.mxu0 0.0
    %568 = vmatprep.subr.mxu0 0.0
    %569 = vmatpush1.msra.mxu0 0.0
    %570 = vmatprep.subr.mxu0 0.0
    %571 = vmatpush1.msra.mxu0 0.0
    %572 = vmatprep.subr.mxu0 0.0
    %573 = vmatpush1.msra.mxu0 0.0
    %574 = vmatprep.mubr.f32.mxu0 0.0
    %575 = vmatmul.mubr.f32.gmra.mrb[0].mxu0 %v158
    %v576 = vpop.f32.mrb[0].mxu0
    %v577 = vadd.f32 %v147, %v576
    %v578 = vpop.f32.mrb[0].mxu0
    %v579 = vadd.f32 %v151, %v578
    %580 = vmatprep.mubr.f32.mxu0 0.0
    %581 = vmatmul.mubr.f32.gmra.mrb[0].mxu0 %v161
    %v582 = vpop.f32.mrb[0].mxu0
    %v583 = vadd.f32 %v147, %v582
    %v584 = vpop.f32.mrb[0].mxu0
    %v585 = vadd.f32 %v151, %v584
    %586 = vmatprep.mubr.f32.mxu0 0.0
    %587 = vmatmul.mubr.f32.gmra.mrb[0].mxu0 %v164
    %v588 = vpop.f32.mrb[0].mxu0
    %v589 = vadd.f32 %v147, %v588
    %v590 = vpop.f32.mrb[0].mxu0
    %v591 = vadd.f32 %v151, %v590
    %592 = vmatprep.mubr.f32.mxu0 0.0
    %593 = vmatmul.mubr.f32.gmra.mrb[0].mxu0 %v167
    %v594 = vpop.f32.mrb[0].mxu0
    %v595 = vadd.f32 %v147, %v594
    %v596 = vpop.f32.mrb[0].mxu0
    %v597 = vadd.f32 %v151, %v596
    %598 = vmatprep.mubr.f32.mxu0 0.0
    %599 = vmatmul.mubr.f32.gmra.mrb[0].mxu0 %v170
    %v600 = vpop.f32.mrb[0].mxu0
    %v601 = vadd.f32 %v147, %v600
    %v602 = vpop.f32.mrb[0].mxu0
    %v603 = vadd.f32 %v151, %v602
    %604 = vmatprep.mubr.f32.mxu0 0.0
    %605 = vmatmul.mubr.f32.gmra.mrb[0].mxu0 %v173
    %v606 = vpop.f32.mrb[0].mxu0
    %v607 = vadd.f32 %v147, %v606
    %v608 = vpop.f32.mrb[0].mxu0
    %v609 = vadd.f32 %v151, %v608
    %610 = vmatprep.mubr.f32.mxu0 0.0
    %611 = vmatmul.mubr.f32.gmra.mrb[0].mxu0 %v176
    %v612 = vpop.f32.mrb[0].mxu0
    %v613 = vadd.f32 %v147, %v612
    %v614 = vpop.f32.mrb[0].mxu0
    %v615 = vadd.f32 %v151, %v614
    %616 = vmatprep.mubr.f32.mxu0 0.0
    %617 = vmatmul.mubr.f32.gmra.mrb[0].mxu0 %v179
    %v618 = vpop.f32.mrb[0].mxu0
    %v619 = vadd.f32 %v147, %v618
    %v620 = vpop.f32.mrb[0].mxu0
    %v621 = vadd.f32 %v151, %v620
    %622 = vmatprep.mubr.f32.mxu0 0.0
    %623 = vmatmul.mubr.f32.gmra.mrb[0].mxu0 %v182
    %v624 = vpop.f32.mrb[0].mxu0
    %v625 = vadd.f32 %v147, %v624
    %v626 = vpop.f32.mrb[0].mxu0
    %v627 = vadd.f32 %v151, %v626
    %628 = vmatprep.mubr.f32.mxu0 0.0
    %629 = vmatmul.mubr.f32.gmra.mrb[0].mxu0 %v185
    %v630 = vpop.f32.mrb[0].mxu0
    %v631 = vadd.f32 %v147, %v630
    %v632 = vpop.f32.mrb[0].mxu0
    %v633 = vadd.f32 %v151, %v632
    %634 = vmatprep.mubr.f32.mxu0 0.0
    %635 = vmatmul.mubr.f32.gmra.mrb[0].mxu0 %v188
    %v636 = vpop.f32.mrb[0].mxu0
    %v637 = vadd.f32 %v147, %v636
    %v638 = vpop.f32.mrb[0].mxu0
    %v639 = vadd.f32 %v151, %v638
    %640 = vmatprep.mubr.f32.mxu0 0.0
    %641 = vmatmul.mubr.f32.gmra.mrb[0].mxu0 %v191
    %v642 = vpop.f32.mrb[0].mxu0
    %v643 = vadd.f32 %v147, %v642
    %v644 = vpop.f32.mrb[0].mxu0
    %v645 = vadd.f32 %v151, %v644
    %646 = vmatprep.mubr.f32.mxu0 0.0
    %647 = vmatmul.mubr.f32.gmra.mrb[0].mxu0 %v194
    %v648 = vpop.f32.mrb[0].mxu0
    %v649 = vadd.f32 %v147, %v648
    %v650 = vpop.f32.mrb[0].mxu0
    %v651 = vadd.f32 %v151, %v650
    %652 = vmatprep.mubr.f32.mxu0 0.0
    %653 = vmatmul.mubr.f32.gmra.mrb[0].mxu0 %v197
    %v654 = vpop.f32.mrb[0].mxu0
    %v655 = vadd.f32 %v147, %v654
    %v656 = vpop.f32.mrb[0].mxu0
    %v657 = vadd.f32 %v151, %v656
    %658 = vmatprep.mubr.f32.mxu0 0.0
    %659 = vmatmul.mubr.f32.gmra.mrb[0].mxu0 %v200
    %v660 = vpop.f32.mrb[0].mxu0
    %v661 = vadd.f32 %v147, %v660
    %v662 = vpop.f32.mrb[0].mxu0
    %v663 = vadd.f32 %v151, %v662
    %664 = vmatprep.mubr.f32.mxu0 0.0
    %665 = vmatmul.mubr.f32.gmra.mrb[0].mxu0 %v203
    %v666 = vpop.f32.mrb[0].mxu0
    %v667 = vadd.f32 %v147, %v666
    %v668 = vpop.f32.mrb[0].mxu0
    %v669 = vadd.f32 %v151, %v668
    %670 = vmatprep.mubr.f32.mxu0 0.0
    %671 = vmatmul.mubr.f32.gmra.mrb[0].mxu0 %v206
    %v672 = vpop.f32.mrb[0].mxu0
    %v673 = vadd.f32 %v147, %v672
    %v674 = vpop.f32.mrb[0].mxu0
    %v675 = vadd.f32 %v151, %v674
    %676 = vmatprep.mubr.f32.mxu0 0.0
    %677 = vmatmul.mubr.f32.gmra.mrb[0].mxu0 %v209
    %v678 = vpop.f32.mrb[0].mxu0
    %v679 = vadd.f32 %v147, %v678
    %v680 = vpop.f32.mrb[0].mxu0
    %v681 = vadd.f32 %v151, %v680
    %682 = vmatprep.mubr.f32.mxu0 0.0
    %683 = vmatmul.mubr.f32.gmra.mrb[0].mxu0 %v212
    %v684 = vpop.f32.mrb[0].mxu0
    %v685 = vadd.f32 %v147, %v684
    %v686 = vpop.f32.mrb[0].mxu0
    %v687 = vadd.f32 %v151, %v686
    %688 = vmatprep.mubr.f32.mxu0 0.0
    %689 = vmatmul.mubr.f32.gmra.mrb[0].mxu0 %v215
    %v690 = vpop.f32.mrb[0].mxu0
    %v691 = vadd.f32 %v147, %v690
    %v692 = vpop.f32.mrb[0].mxu0
    %v693 = vadd.f32 %v151, %v692
    %694 = vmatprep.mubr.f32.mxu0 0.0
    %695 = vmatmul.mubr.f32.gmra.mrb[0].mxu0 %v218
    %v696 = vpop.f32.mrb[0].mxu0
    %v697 = vadd.f32 %v147, %v696
    %v698 = vpop.f32.mrb[0].mxu0
    %v699 = vadd.f32 %v151, %v698
    %700 = vmatprep.mubr.f32.mxu0 0.0
    %701 = vmatmul.mubr.f32.gmra.mrb[0].mxu0 %v221
    %v702 = vpop.f32.mrb[0].mxu0
    %v703 = vadd.f32 %v147, %v702
    %v704 = vpop.f32.mrb[0].mxu0
    %v705 = vadd.f32 %v151, %v704
    %706 = vmatprep.mubr.f32.mxu0 0.0
    %707 = vmatmul.mubr.f32.gmra.mrb[0].mxu0 %v224
    %v708 = vpop.f32.mrb[0].mxu0
    %v709 = vadd.f32 %v147, %v708
    %v710 = vpop.f32.mrb[0].mxu0
    %v711 = vadd.f32 %v151, %v710
    %712 = vmatprep.mubr.f32.mxu0 0.0
    %713 = vmatmul.mubr.f32.gmra.mrb[0].mxu0 %v227
    %v714 = vpop.f32.mrb[0].mxu0
    %v715 = vadd.f32 %v147, %v714
    %v716 = vpop.f32.mrb[0].mxu0
    %v717 = vadd.f32 %v151, %v716
    %718 = vmatprep.mubr.f32.mxu0 0.0
    %719 = vmatmul.mubr.f32.gmra.mrb[0].mxu0 %v230
    %v720 = vpop.f32.mrb[0].mxu0
    %v721 = vadd.f32 %v147, %v720
    %v722 = vpop.f32.mrb[0].mxu0
    %v723 = vadd.f32 %v151, %v722
    %724 = vmatprep.mubr.f32.mxu0 0.0
    %725 = vmatmul.mubr.f32.gmra.mrb[0].mxu0 %v233
    %v726 = vpop.f32.mrb[0].mxu0
    %v727 = vadd.f32 %v147, %v726
    %v728 = vpop.f32.mrb[0].mxu0
    %v729 = vadd.f32 %v151, %v728
    %730 = vmatprep.mubr.f32.mxu0 0.0
    %731 = vmatmul.mubr.f32.gmra.mrb[0].mxu0 %v236
    %v732 = vpop.f32.mrb[0].mxu0
    %v733 = vadd.f32 %v147, %v732
    %v734 = vpop.f32.mrb[0].mxu0
    %v735 = vadd.f32 %v151, %v734
    %736 = vmatprep.mubr.f32.mxu0 0.0
    %737 = vmatmul.mubr.f32.gmra.mrb[0].mxu0 %v239
    %v738 = vpop.f32.mrb[0].mxu0
    %v739 = vadd.f32 %v147, %v738
    %v740 = vpop.f32.mrb[0].mxu0
    %v741 = vadd.f32 %v151, %v740
    %742 = vmatprep.mubr.f32.mxu0 0.0
    %743 = vmatmul.mubr.f32.gmra.mrb[0].mxu0 %v242
    %v744 = vpop.f32.mrb[0].mxu0
    %v745 = vadd.f32 %v147, %v744
    %v746 = vpop.f32.mrb[0].mxu0
    %v747 = vadd.f32 %v151, %v746
    %748 = vmatprep.mubr.f32.mxu0 0.0
    %749 = vmatmul.mubr.f32.gmra.mrb[0].mxu0 %v245
    %v750 = vpop.f32.mrb[0].mxu0
    %v751 = vadd.f32 %v147, %v750
    %v752 = vpop.f32.mrb[0].mxu0
    %v753 = vadd.f32 %v151, %v752
    %754 = vmatprep.mubr.f32.mxu0 0.0
    %755 = vmatmul.mubr.f32.gmra.mrb[0].mxu0 %v248
    %v756 = vpop.f32.mrb[0].mxu0
    %v757 = vadd.f32 %v147, %v756
    %v758 = vpop.f32.mrb[0].mxu0
    %v759 = vadd.f32 %v151, %v758
    %760 = vmatprep.mubr.f32.mxu0 0.0
    %761 = vmatmul.mubr.f32.gmra.mrb[0].mxu0 %v251
    %v762 = vpop.f32.mrb[0].mxu0
    %v763 = vadd.f32 %v147, %v762
    %v764 = vpop.f32.mrb[0].mxu0
    %v765 = vadd.f32 %v151, %v764
    %766 = vdwg.mxu0
    %v767 = vmax.f32 %v320, 0.0
    %v768 = vmax.f32 %v322, 0.0
    %v769 = vmax.f32 %v577, 0.0
    %v770 = vmax.f32 %v579, 0.0
    %v771 = vmax.f32 %v326, 0.0
    %v772 = vmax.f32 %v328, 0.0
    %v773 = vmax.f32 %v583, 0.0
    %v774 = vmax.f32 %v585, 0.0
    %v775 = vmax.f32 %v332, 0.0
    %v776 = vmax.f32 %v334, 0.0
    %v777 = vmax.f32 %v589, 0.0
    %v778 = vmax.f32 %v591, 0.0
    %v779 = vmax.f32 %v338, 0.0
    %v780 = vmax.f32 %v340, 0.0
    %v781 = vmax.f32 %v595, 0.0
    %v782 = vmax.f32 %v597, 0.0
    %v783 = vmax.f32 %v344, 0.0
    %v784 = vmax.f32 %v346, 0.0
    %v785 = vmax.f32 %v601, 0.0
    %v786 = vmax.f32 %v603, 0.0
    %v787 = vmax.f32 %v350, 0.0
    %v788 = vmax.f32 %v352, 0.0
    %v789 = vmax.f32 %v607, 0.0
    %v790 = vmax.f32 %v609, 0.0
    %v791 = vmax.f32 %v356, 0.0
    %v792 = vmax.f32 %v358, 0.0
    %v793 = vmax.f32 %v613, 0.0
    %v794 = vmax.f32 %v615, 0.0
    %v795 = vmax.f32 %v362, 0.0
    %v796 = vmax.f32 %v364, 0.0
    %v797 = vmax.f32 %v619, 0.0
    %v798 = vmax.f32 %v621, 0.0
    %v799 = vmax.f32 %v368, 0.0
    %v800 = vmax.f32 %v370, 0.0
    %v801 = vmax.f32 %v625, 0.0
    %v802 = vmax.f32 %v627, 0.0
    %v803 = vmax.f32 %v374, 0.0
    %v804 = vmax.f32 %v376, 0.0
    %v805 = vmax.f32 %v631, 0.0
    %v806 = vmax.f32 %v633, 0.0
    %v807 = vmax.f32 %v380, 0.0
    %v808 = vmax.f32 %v382, 0.0
    %v809 = vmax.f32 %v637, 0.0
    %v810 = vmax.f32 %v639, 0.0
    %v811 = vmax.f32 %v386, 0.0
    %v812 = vmax.f32 %v388, 0.0
    %v813 = vmax.f32 %v643, 0.0
    %v814 = vmax.f32 %v645, 0.0
    %v815 = vmax.f32 %v392, 0.0
    %v816 = vmax.f32 %v394, 0.0
    %v817 = vmax.f32 %v649, 0.0
    %v818 = vmax.f32 %v651, 0.0
    %v819 = vmax.f32 %v398, 0.0
    %v820 = vmax.f32 %v400, 0.0
    %v821 = vmax.f32 %v655, 0.0
    %v822 = vmax.f32 %v657, 0.0
    %v823 = vmax.f32 %v404, 0.0
    %v824 = vmax.f32 %v406, 0.0
    %v825 = vmax.f32 %v661, 0.0
    %v826 = vmax.f32 %v663, 0.0
    %v827 = vmax.f32 %v410, 0.0
    %v828 = vmax.f32 %v412, 0.0
    %v829 = vmax.f32 %v667, 0.0
    %v830 = vmax.f32 %v669, 0.0
    %v831 = vmax.f32 %v416, 0.0
    %v832 = vmax.f32 %v418, 0.0
    %v833 = vmax.f32 %v673, 0.0
    %v834 = vmax.f32 %v675, 0.0
    %v835 = vmax.f32 %v422, 0.0
    %v836 = vmax.f32 %v424, 0.0
    %v837 = vmax.f32 %v679, 0.0
    %v838 = vmax.f32 %v681, 0.0
    %v839 = vmax.f32 %v428, 0.0
    %v840 = vmax.f32 %v430, 0.0
    %v841 = vmax.f32 %v685, 0.0
    %v842 = vmax.f32 %v687, 0.0
    %v843 = vmax.f32 %v434, 0.0
    %v844 = vmax.f32 %v436, 0.0
    %v845 = vmax.f32 %v691, 0.0
    %v846 = vmax.f32 %v693, 0.0
    %v847 = vmax.f32 %v440, 0.0
    %v848 = vmax.f32 %v442, 0.0
    %v849 = vmax.f32 %v697, 0.0
    %v850 = vmax.f32 %v699, 0.0
    %v851 = vmax.f32 %v446, 0.0
    %v852 = vmax.f32 %v448, 0.0
    %v853 = vmax.f32 %v703, 0.0
    %v854 = vmax.f32 %v705, 0.0
    %v855 = vmax.f32 %v452, 0.0
    %v856 = vmax.f32 %v454, 0.0
    %v857 = vmax.f32 %v709, 0.0
    %v858 = vmax.f32 %v711, 0.0
    %v859 = vmax.f32 %v458, 0.0
    %v860 = vmax.f32 %v460, 0.0
    %v861 = vmax.f32 %v715, 0.0
    %v862 = vmax.f32 %v717, 0.0
    %v863 = vmax.f32 %v464, 0.0
    %v864 = vmax.f32 %v466, 0.0
    %v865 = vmax.f32 %v721, 0.0
    %v866 = vmax.f32 %v723, 0.0
    %v867 = vmax.f32 %v470, 0.0
    %v868 = vmax.f32 %v472, 0.0
    %v869 = vmax.f32 %v727, 0.0
    %v870 = vmax.f32 %v729, 0.0
    %v871 = vmax.f32 %v476, 0.0
    %v872 = vmax.f32 %v478, 0.0
    %v873 = vmax.f32 %v733, 0.0
    %v874 = vmax.f32 %v735, 0.0
    %v875 = vmax.f32 %v482, 0.0
    %v876 = vmax.f32 %v484, 0.0
    %v877 = vmax.f32 %v739, 0.0
    %v878 = vmax.f32 %v741, 0.0
    %v879 = vmax.f32 %v488, 0.0
    %v880 = vmax.f32 %v490, 0.0
    %v881 = vmax.f32 %v745, 0.0
    %v882 = vmax.f32 %v747, 0.0
    %v883 = vmax.f32 %v494, 0.0
    %v884 = vmax.f32 %v496, 0.0
    %v885 = vmax.f32 %v751, 0.0
    %v886 = vmax.f32 %v753, 0.0
    %v887 = vmax.f32 %v500, 0.0
    %v888 = vmax.f32 %v502, 0.0
    %v889 = vmax.f32 %v757, 0.0
    %v890 = vmax.f32 %v759, 0.0
    %v891 = vmax.f32 %v506, 0.0
    %v892 = vmax.f32 %v508, 0.0
    %v893 = vmax.f32 %v763, 0.0
    %v894 = vmax.f32 %v765, 0.0
    %v895 = vld [vmem:[%s3] sm:$0xf]
    %v897 = vlaneseq
    %v898 = vshrl.u32 %v897, 7
    %v899 = vsub.s32 0, %v898
    %v900 = vrot.slane %v895, %v899
    %v901 = vlaneseq
    %v902 = vshrl.u32 %v901, 7
    %v903 = vsub.s32 1, %v902
    %v904 = vrot.slane %v895, %v903
    %v905 = vlaneseq
    %v906 = vshrl.u32 %v905, 7
    %v907 = vsub.s32 2, %v906
    %v908 = vrot.slane %v895, %v907
    %v909 = vlaneseq
    %v910 = vshrl.u32 %v909, 7
    %v911 = vsub.s32 3, %v910
    %v912 = vrot.slane %v895, %v911
    %v917 = vmul.f32 %v767, %v900
    %v918 = vmul.f32 %v768, %v904
    %v919 = vmul.f32 %v769, %v908
    %v920 = vmul.f32 %v770, %v912
    %v921 = vmul.f32 %v771, %v900
    %v922 = vmul.f32 %v772, %v904
    %v923 = vmul.f32 %v773, %v908
    %v924 = vmul.f32 %v774, %v912
    %v925 = vmul.f32 %v775, %v900
    %v926 = vmul.f32 %v776, %v904
    %v927 = vmul.f32 %v777, %v908
    %v928 = vmul.f32 %v778, %v912
    %v929 = vmul.f32 %v779, %v900
    %v930 = vmul.f32 %v780, %v904
    %v931 = vmul.f32 %v781, %v908
    %v932 = vmul.f32 %v782, %v912
    %v933 = vmul.f32 %v783, %v900
    %v934 = vmul.f32 %v784, %v904
    %v935 = vmul.f32 %v785, %v908
    %v936 = vmul.f32 %v786, %v912
    %v937 = vmul.f32 %v787, %v900
    %v938 = vmul.f32 %v788, %v904
    %v939 = vmul.f32 %v789, %v908
    %v940 = vmul.f32 %v790, %v912
    %v941 = vmul.f32 %v791, %v900
    %v942 = vmul.f32 %v792, %v904
    %v943 = vmul.f32 %v793, %v908
    %v944 = vmul.f32 %v794, %v912
    %v945 = vmul.f32 %v795, %v900
    %v946 = vmul.f32 %v796, %v904
    %v947 = vmul.f32 %v797, %v908
    %v948 = vmul.f32 %v798, %v912
    %v949 = vmul.f32 %v799, %v900
    %v950 = vmul.f32 %v800, %v904
    %v951 = vmul.f32 %v801, %v908
    %v952 = vmul.f32 %v802, %v912
    %v953 = vmul.f32 %v803, %v900
    %v954 = vmul.f32 %v804, %v904
    %v955 = vmul.f32 %v805, %v908
    %v956 = vmul.f32 %v806, %v912
    %v957 = vmul.f32 %v807, %v900
    %v958 = vmul.f32 %v808, %v904
    %v959 = vmul.f32 %v809, %v908
    %v960 = vmul.f32 %v810, %v912
    %v961 = vmul.f32 %v811, %v900
    %v962 = vmul.f32 %v812, %v904
    %v963 = vmul.f32 %v813, %v908
    %v964 = vmul.f32 %v814, %v912
    %v965 = vmul.f32 %v815, %v900
    %v966 = vmul.f32 %v816, %v904
    %v967 = vmul.f32 %v817, %v908
    %v968 = vmul.f32 %v818, %v912
    %v969 = vmul.f32 %v819, %v900
    %v970 = vmul.f32 %v820, %v904
    %v971 = vmul.f32 %v821, %v908
    %v972 = vmul.f32 %v822, %v912
    %v973 = vmul.f32 %v823, %v900
    %v974 = vmul.f32 %v824, %v904
    %v975 = vmul.f32 %v825, %v908
    %v976 = vmul.f32 %v826, %v912
    %v977 = vmul.f32 %v827, %v900
    %v978 = vmul.f32 %v828, %v904
    %v979 = vmul.f32 %v829, %v908
    %v980 = vmul.f32 %v830, %v912
    %v981 = vmul.f32 %v831, %v900
    %v982 = vmul.f32 %v832, %v904
    %v983 = vmul.f32 %v833, %v908
    %v984 = vmul.f32 %v834, %v912
    %v985 = vmul.f32 %v835, %v900
    %v986 = vmul.f32 %v836, %v904
    %v987 = vmul.f32 %v837, %v908
    %v988 = vmul.f32 %v838, %v912
    %v989 = vmul.f32 %v839, %v900
    %v990 = vmul.f32 %v840, %v904
    %v991 = vmul.f32 %v841, %v908
    %v992 = vmul.f32 %v842, %v912
    %v993 = vmul.f32 %v843, %v900
    %v994 = vmul.f32 %v844, %v904
    %v995 = vmul.f32 %v845, %v908
    %v996 = vmul.f32 %v846, %v912
    %v997 = vmul.f32 %v847, %v900
    %v998 = vmul.f32 %v848, %v904
    %v999 = vmul.f32 %v849, %v908
    %v1000 = vmul.f32 %v850, %v912
    %v1001 = vmul.f32 %v851, %v900
    %v1002 = vmul.f32 %v852, %v904
    %v1003 = vmul.f32 %v853, %v908
    %v1004 = vmul.f32 %v854, %v912
    %v1005 = vmul.f32 %v855, %v900
    %v1006 = vmul.f32 %v856, %v904
    %v1007 = vmul.f32 %v857, %v908
    %v1008 = vmul.f32 %v858, %v912
    %v1009 = vmul.f32 %v859, %v900
    %v1010 = vmul.f32 %v860, %v904
    %v1011 = vmul.f32 %v861, %v908
    %v1012 = vmul.f32 %v862, %v912
    %v1013 = vmul.f32 %v863, %v900
    %v1014 = vmul.f32 %v864, %v904
    %v1015 = vmul.f32 %v865, %v908
    %v1016 = vmul.f32 %v866, %v912
    %v1017 = vmul.f32 %v867, %v900
    %v1018 = vmul.f32 %v868, %v904
    %v1019 = vmul.f32 %v869, %v908
    %v1020 = vmul.f32 %v870, %v912
    %v1021 = vmul.f32 %v871, %v900
    %v1022 = vmul.f32 %v872, %v904
    %v1023 = vmul.f32 %v873, %v908
    %v1024 = vmul.f32 %v874, %v912
    %v1025 = vmul.f32 %v875, %v900
    %v1026 = vmul.f32 %v876, %v904
    %v1027 = vmul.f32 %v877, %v908
    %v1028 = vmul.f32 %v878, %v912
    %v1029 = vmul.f32 %v879, %v900
    %v1030 = vmul.f32 %v880, %v904
    %v1031 = vmul.f32 %v881, %v908
    %v1032 = vmul.f32 %v882, %v912
    %v1033 = vmul.f32 %v883, %v900
    %v1034 = vmul.f32 %v884, %v904
    %v1035 = vmul.f32 %v885, %v908
    %v1036 = vmul.f32 %v886, %v912
    %v1037 = vmul.f32 %v887, %v900
    %v1038 = vmul.f32 %v888, %v904
    %v1039 = vmul.f32 %v889, %v908
    %v1040 = vmul.f32 %v890, %v912
    %v1041 = vmul.f32 %v891, %v900
    %v1042 = vmul.f32 %v892, %v904
    %v1043 = vmul.f32 %v893, %v908
    %v1044 = vmul.f32 %v894, %v912
    %v1045 = vld [vmem:[%s4] sm:$0xf]
    %v1047 = vlaneseq
    %v1048 = vshrl.u32 %v1047, 7
    %v1049 = vsub.s32 0, %v1048
    %v1050 = vrot.slane %v1045, %v1049
    %v1051 = vlaneseq
    %v1052 = vshrl.u32 %v1051, 7
    %v1053 = vsub.s32 1, %v1052
    %v1054 = vrot.slane %v1045, %v1053
    %v1055 = vlaneseq
    %v1056 = vshrl.u32 %v1055, 7
    %v1057 = vsub.s32 2, %v1056
    %v1058 = vrot.slane %v1045, %v1057
    %v1059 = vlaneseq
    %v1060 = vshrl.u32 %v1059, 7
    %v1061 = vsub.s32 3, %v1060
    %v1062 = vrot.slane %v1045, %v1061
    %v1067 = vadd.f32 %v917, %v1050
    %v1068 = vadd.f32 %v918, %v1054
    %v1069 = vadd.f32 %v919, %v1058
    %v1070 = vadd.f32 %v920, %v1062
    %v1071 = vadd.f32 %v921, %v1050
    %v1072 = vadd.f32 %v922, %v1054
    %v1073 = vadd.f32 %v923, %v1058
    %v1074 = vadd.f32 %v924, %v1062
    %v1075 = vadd.f32 %v925, %v1050
    %v1076 = vadd.f32 %v926, %v1054
    %v1077 = vadd.f32 %v927, %v1058
    %v1078 = vadd.f32 %v928, %v1062
    %v1079 = vadd.f32 %v929, %v1050
    %v1080 = vadd.f32 %v930, %v1054
    %v1081 = vadd.f32 %v931, %v1058
    %v1082 = vadd.f32 %v932, %v1062
    %v1083 = vadd.f32 %v933, %v1050
    %v1084 = vadd.f32 %v934, %v1054
    %v1085 = vadd.f32 %v935, %v1058
    %v1086 = vadd.f32 %v936, %v1062
    %v1087 = vadd.f32 %v937, %v1050
    %v1088 = vadd.f32 %v938, %v1054
    %v1089 = vadd.f32 %v939, %v1058
    %v1090 = vadd.f32 %v940, %v1062
    %v1091 = vadd.f32 %v941, %v1050
    %v1092 = vadd.f32 %v942, %v1054
    %v1093 = vadd.f32 %v943, %v1058
    %v1094 = vadd.f32 %v944, %v1062
    %v1095 = vadd.f32 %v945, %v1050
    %v1096 = vadd.f32 %v946, %v1054
    %v1097 = vadd.f32 %v947, %v1058
    %v1098 = vadd.f32 %v948, %v1062
    %v1099 = vadd.f32 %v949, %v1050
    %v1100 = vadd.f32 %v950, %v1054
    %v1101 = vadd.f32 %v951, %v1058
    %v1102 = vadd.f32 %v952, %v1062
    %v1103 = vadd.f32 %v953, %v1050
    %v1104 = vadd.f32 %v954, %v1054
    %v1105 = vadd.f32 %v955, %v1058
    %v1106 = vadd.f32 %v956, %v1062
    %v1107 = vadd.f32 %v957, %v1050
    %v1108 = vadd.f32 %v958, %v1054
    %v1109 = vadd.f32 %v959, %v1058
    %v1110 = vadd.f32 %v960, %v1062
    %v1111 = vadd.f32 %v961, %v1050
    %v1112 = vadd.f32 %v962, %v1054
    %v1113 = vadd.f32 %v963, %v1058
    %v1114 = vadd.f32 %v964, %v1062
    %v1115 = vadd.f32 %v965, %v1050
    %v1116 = vadd.f32 %v966, %v1054
    %v1117 = vadd.f32 %v967, %v1058
    %v1118 = vadd.f32 %v968, %v1062
    %v1119 = vadd.f32 %v969, %v1050
    %v1120 = vadd.f32 %v970, %v1054
    %v1121 = vadd.f32 %v971, %v1058
    %v1122 = vadd.f32 %v972, %v1062
    %v1123 = vadd.f32 %v973, %v1050
    %v1124 = vadd.f32 %v974, %v1054
    %v1125 = vadd.f32 %v975, %v1058
    %v1126 = vadd.f32 %v976, %v1062
    %v1127 = vadd.f32 %v977, %v1050
    %v1128 = vadd.f32 %v978, %v1054
    %v1129 = vadd.f32 %v979, %v1058
    %v1130 = vadd.f32 %v980, %v1062
    %v1131 = vadd.f32 %v981, %v1050
    %v1132 = vadd.f32 %v982, %v1054
    %v1133 = vadd.f32 %v983, %v1058
    %v1134 = vadd.f32 %v984, %v1062
    %v1135 = vadd.f32 %v985, %v1050
    %v1136 = vadd.f32 %v986, %v1054
    %v1137 = vadd.f32 %v987, %v1058
    %v1138 = vadd.f32 %v988, %v1062
    %v1139 = vadd.f32 %v989, %v1050
    %v1140 = vadd.f32 %v990, %v1054
    %v1141 = vadd.f32 %v991, %v1058
    %v1142 = vadd.f32 %v992, %v1062
    %v1143 = vadd.f32 %v993, %v1050
    %v1144 = vadd.f32 %v994, %v1054
    %v1145 = vadd.f32 %v995, %v1058
    %v1146 = vadd.f32 %v996, %v1062
    %v1147 = vadd.f32 %v997, %v1050
    %v1148 = vadd.f32 %v998, %v1054
    %v1149 = vadd.f32 %v999, %v1058
    %v1150 = vadd.f32 %v1000, %v1062
    %v1151 = vadd.f32 %v1001, %v1050
    %v1152 = vadd.f32 %v1002, %v1054
    %v1153 = vadd.f32 %v1003, %v1058
    %v1154 = vadd.f32 %v1004, %v1062
    %v1155 = vadd.f32 %v1005, %v1050
    %v1156 = vadd.f32 %v1006, %v1054
    %v1157 = vadd.f32 %v1007, %v1058
    %v1158 = vadd.f32 %v1008, %v1062
    %v1159 = vadd.f32 %v1009, %v1050
    %v1160 = vadd.f32 %v1010, %v1054
    %v1161 = vadd.f32 %v1011, %v1058
    %v1162 = vadd.f32 %v1012, %v1062
    %v1163 = vadd.f32 %v1013, %v1050
    %v1164 = vadd.f32 %v1014, %v1054
    %v1165 = vadd.f32 %v1015, %v1058
    %v1166 = vadd.f32 %v1016, %v1062
    %v1167 = vadd.f32 %v1017, %v1050
    %v1168 = vadd.f32 %v1018, %v1054
    %v1169 = vadd.f32 %v1019, %v1058
    %v1170 = vadd.f32 %v1020, %v1062
    %v1171 = vadd.f32 %v1021, %v1050
    %v1172 = vadd.f32 %v1022, %v1054
    %v1173 = vadd.f32 %v1023, %v1058
    %v1174 = vadd.f32 %v1024, %v1062
    %v1175 = vadd.f32 %v1025, %v1050
    %v1176 = vadd.f32 %v1026, %v1054
    %v1177 = vadd.f32 %v1027, %v1058
    %v1178 = vadd.f32 %v1028, %v1062
    %v1179 = vadd.f32 %v1029, %v1050
    %v1180 = vadd.f32 %v1030, %v1054
    %v1181 = vadd.f32 %v1031, %v1058
    %v1182 = vadd.f32 %v1032, %v1062
    %v1183 = vadd.f32 %v1033, %v1050
    %v1184 = vadd.f32 %v1034, %v1054
    %v1185 = vadd.f32 %v1035, %v1058
    %v1186 = vadd.f32 %v1036, %v1062
    %v1187 = vadd.f32 %v1037, %v1050
    %v1188 = vadd.f32 %v1038, %v1054
    %v1189 = vadd.f32 %v1039, %v1058
    %v1190 = vadd.f32 %v1040, %v1062
    %v1191 = vadd.f32 %v1041, %v1050
    %v1192 = vadd.f32 %v1042, %v1054
    %v1193 = vadd.f32 %v1043, %v1058
    %v1194 = vadd.f32 %v1044, %v1062
    %v1195 = vld [vmem:[#allocation2] sm:$0xff]
    %v1196 = vld [vmem:[#allocation2 + $0x8] sm:$0xff]
    %v1197 = vld [vmem:[#allocation2 + $0x10] sm:$0xff]
    %v1198 = vld [vmem:[#allocation2 + $0x18] sm:$0xff]
    %v1199 = vld [vmem:[#allocation2 + $0x20] sm:$0xff]
    %v1200 = vld [vmem:[#allocation2 + $0x28] sm:$0xff]
    %v1201 = vld [vmem:[#allocation2 + $0x30] sm:$0xff]
    %v1202 = vld [vmem:[#allocation2 + $0x38] sm:$0xff]
    %v1203 = vld [vmem:[#allocation2 + $0x40] sm:$0xff]
    %v1204 = vld [vmem:[#allocation2 + $0x48] sm:$0xff]
    %v1205 = vld [vmem:[#allocation2 + $0x50] sm:$0xff]
    %v1206 = vld [vmem:[#allocation2 + $0x58] sm:$0xff]
    %v1207 = vld [vmem:[#allocation2 + $0x60] sm:$0xff]
    %v1208 = vld [vmem:[#allocation2 + $0x68] sm:$0xff]
    %v1209 = vld [vmem:[#allocation2 + $0x70] sm:$0xff]
    %v1210 = vld [vmem:[#allocation2 + $0x78] sm:$0xff]
    %v1211 = vld [vmem:[#allocation2 + $0x80] sm:$0xff]
    %v1212 = vld [vmem:[#allocation2 + $0x88] sm:$0xff]
    %v1213 = vld [vmem:[#allocation2 + $0x90] sm:$0xff]
    %v1214 = vld [vmem:[#allocation2 + $0x98] sm:$0xff]
    %v1215 = vld [vmem:[#allocation2 + $0xa0] sm:$0xff]
    %v1216 = vld [vmem:[#allocation2 + $0xa8] sm:$0xff]
    %v1217 = vld [vmem:[#allocation2 + $0xb0] sm:$0xff]
    %v1218 = vld [vmem:[#allocation2 + $0xb8] sm:$0xff]
    %v1219 = vld [vmem:[#allocation2 + $0xc0] sm:$0xff]
    %v1220 = vld [vmem:[#allocation2 + $0xc8] sm:$0xff]
    %v1221 = vld [vmem:[#allocation2 + $0xd0] sm:$0xff]
    %v1222 = vld [vmem:[#allocation2 + $0xd8] sm:$0xff]
    %v1223 = vld [vmem:[#allocation2 + $0xe0] sm:$0xff]
    %v1224 = vld [vmem:[#allocation2 + $0xe8] sm:$0xff]
    %v1225 = vld [vmem:[#allocation2 + $0xf0] sm:$0xff]
    %v1226 = vld [vmem:[#allocation2 + $0xf8] sm:$0xff]
    %v1227 = vld [vmem:[#allocation2 + $0x100] sm:$0xff]
    %v1228 = vld [vmem:[#allocation2 + $0x108] sm:$0xff]
    %v1229 = vld [vmem:[#allocation2 + $0x110] sm:$0xff]
    %v1230 = vld [vmem:[#allocation2 + $0x118] sm:$0xff]
    %v1231 = vld [vmem:[#allocation2 + $0x120] sm:$0xff]
    %v1232 = vld [vmem:[#allocation2 + $0x128] sm:$0xff]
    %v1233 = vld [vmem:[#allocation2 + $0x130] sm:$0xff]
    %v1234 = vld [vmem:[#allocation2 + $0x138] sm:$0xff]
    %v1235 = vld [vmem:[#allocation2 + $0x140] sm:$0xff]
    %v1236 = vld [vmem:[#allocation2 + $0x148] sm:$0xff]
    %v1237 = vld [vmem:[#allocation2 + $0x150] sm:$0xff]
    %v1238 = vld [vmem:[#allocation2 + $0x158] sm:$0xff]
    %v1239 = vld [vmem:[#allocation2 + $0x160] sm:$0xff]
    %v1240 = vld [vmem:[#allocation2 + $0x168] sm:$0xff]
    %v1241 = vld [vmem:[#allocation2 + $0x170] sm:$0xff]
    %v1242 = vld [vmem:[#allocation2 + $0x178] sm:$0xff]
    %v1243 = vld [vmem:[#allocation2 + $0x180] sm:$0xff]
    %v1244 = vld [vmem:[#allocation2 + $0x188] sm:$0xff]
    %v1245 = vld [vmem:[#allocation2 + $0x190] sm:$0xff]
    %v1246 = vld [vmem:[#allocation2 + $0x198] sm:$0xff]
    %v1247 = vld [vmem:[#allocation2 + $0x1a0] sm:$0xff]
    %v1248 = vld [vmem:[#allocation2 + $0x1a8] sm:$0xff]
    %v1249 = vld [vmem:[#allocation2 + $0x1b0] sm:$0xff]
    %v1250 = vld [vmem:[#allocation2 + $0x1b8] sm:$0xff]
    %v1251 = vld [vmem:[#allocation2 + $0x1c0] sm:$0xff]
    %v1252 = vld [vmem:[#allocation2 + $0x1c8] sm:$0xff]
    %v1253 = vld [vmem:[#allocation2 + $0x1d0] sm:$0xff]
    %v1254 = vld [vmem:[#allocation2 + $0x1d8] sm:$0xff]
    %v1255 = vld [vmem:[#allocation2 + $0x1e0] sm:$0xff]
    %v1256 = vld [vmem:[#allocation2 + $0x1e8] sm:$0xff]
    %v1257 = vld [vmem:[#allocation2 + $0x1f0] sm:$0xff]
    %v1258 = vld [vmem:[#allocation2 + $0x1f8] sm:$0xff]
    %v1259 = vld [vmem:[#allocation2 + $0x200] sm:$0xff]
    %v1260 = vld [vmem:[#allocation2 + $0x208] sm:$0xff]
    %v1261 = vld [vmem:[#allocation2 + $0x210] sm:$0xff]
    %v1262 = vld [vmem:[#allocation2 + $0x218] sm:$0xff]
    %v1263 = vld [vmem:[#allocation2 + $0x220] sm:$0xff]
    %v1264 = vld [vmem:[#allocation2 + $0x228] sm:$0xff]
    %v1265 = vld [vmem:[#allocation2 + $0x230] sm:$0xff]
    %v1266 = vld [vmem:[#allocation2 + $0x238] sm:$0xff]
    %v1267 = vld [vmem:[#allocation2 + $0x240] sm:$0xff]
    %v1268 = vld [vmem:[#allocation2 + $0x248] sm:$0xff]
    %v1269 = vld [vmem:[#allocation2 + $0x250] sm:$0xff]
    %v1270 = vld [vmem:[#allocation2 + $0x258] sm:$0xff]
    %v1271 = vld [vmem:[#allocation2 + $0x260] sm:$0xff]
    %v1272 = vld [vmem:[#allocation2 + $0x268] sm:$0xff]
    %v1273 = vld [vmem:[#allocation2 + $0x270] sm:$0xff]
    %v1274 = vld [vmem:[#allocation2 + $0x278] sm:$0xff]
    %v1275 = vld [vmem:[#allocation2 + $0x280] sm:$0xff]
    %v1276 = vld [vmem:[#allocation2 + $0x288] sm:$0xff]
    %v1277 = vld [vmem:[#allocation2 + $0x290] sm:$0xff]
    %v1278 = vld [vmem:[#allocation2 + $0x298] sm:$0xff]
    %v1279 = vld [vmem:[#allocation2 + $0x2a0] sm:$0xff]
    %v1280 = vld [vmem:[#allocation2 + $0x2a8] sm:$0xff]
    %v1281 = vld [vmem:[#allocation2 + $0x2b0] sm:$0xff]
    %v1282 = vld [vmem:[#allocation2 + $0x2b8] sm:$0xff]
    %v1283 = vld [vmem:[#allocation2 + $0x2c0] sm:$0xff]
    %v1284 = vld [vmem:[#allocation2 + $0x2c8] sm:$0xff]
    %v1285 = vld [vmem:[#allocation2 + $0x2d0] sm:$0xff]
    %v1286 = vld [vmem:[#allocation2 + $0x2d8] sm:$0xff]
    %v1287 = vld [vmem:[#allocation2 + $0x2e0] sm:$0xff]
    %v1288 = vld [vmem:[#allocation2 + $0x2e8] sm:$0xff]
    %v1289 = vld [vmem:[#allocation2 + $0x2f0] sm:$0xff]
    %v1290 = vld [vmem:[#allocation2 + $0x2f8] sm:$0xff]
    %v1291 = vld [vmem:[#allocation2 + $0x300] sm:$0xff]
    %v1292 = vld [vmem:[#allocation2 + $0x308] sm:$0xff]
    %v1293 = vld [vmem:[#allocation2 + $0x310] sm:$0xff]
    %v1294 = vld [vmem:[#allocation2 + $0x318] sm:$0xff]
    %v1295 = vld [vmem:[#allocation2 + $0x320] sm:$0xff]
    %v1296 = vld [vmem:[#allocation2 + $0x328] sm:$0xff]
    %v1297 = vld [vmem:[#allocation2 + $0x330] sm:$0xff]
    %v1298 = vld [vmem:[#allocation2 + $0x338] sm:$0xff]
    %v1299 = vld [vmem:[#allocation2 + $0x340] sm:$0xff]
    %v1300 = vld [vmem:[#allocation2 + $0x348] sm:$0xff]
    %v1301 = vld [vmem:[#allocation2 + $0x350] sm:$0xff]
    %v1302 = vld [vmem:[#allocation2 + $0x358] sm:$0xff]
    %v1303 = vld [vmem:[#allocation2 + $0x360] sm:$0xff]
    %v1304 = vld [vmem:[#allocation2 + $0x368] sm:$0xff]
    %v1305 = vld [vmem:[#allocation2 + $0x370] sm:$0xff]
    %v1306 = vld [vmem:[#allocation2 + $0x378] sm:$0xff]
    %v1307 = vld [vmem:[#allocation2 + $0x380] sm:$0xff]
    %v1308 = vld [vmem:[#allocation2 + $0x388] sm:$0xff]
    %v1309 = vld [vmem:[#allocation2 + $0x390] sm:$0xff]
    %v1310 = vld [vmem:[#allocation2 + $0x398] sm:$0xff]
    %v1311 = vld [vmem:[#allocation2 + $0x3a0] sm:$0xff]
    %v1312 = vld [vmem:[#allocation2 + $0x3a8] sm:$0xff]
    %v1313 = vld [vmem:[#allocation2 + $0x3b0] sm:$0xff]
    %v1314 = vld [vmem:[#allocation2 + $0x3b8] sm:$0xff]
    %v1315 = vld [vmem:[#allocation2 + $0x3c0] sm:$0xff]
    %v1316 = vld [vmem:[#allocation2 + $0x3c8] sm:$0xff]
    %v1317 = vld [vmem:[#allocation2 + $0x3d0] sm:$0xff]
    %v1318 = vld [vmem:[#allocation2 + $0x3d8] sm:$0xff]
    %v1319 = vld [vmem:[#allocation2 + $0x3e0] sm:$0xff]
    %v1320 = vld [vmem:[#allocation2 + $0x3e8] sm:$0xff]
    %v1321 = vld [vmem:[#allocation2 + $0x3f0] sm:$0xff]
    %v1322 = vld [vmem:[#allocation2 + $0x3f8] sm:$0xff]
    %v1323 = vunpack.c.l.bf16 %v1195
    %v1324 = vunpack.c.h.bf16 %v1195
    %v1325 = vunpack.c.l.bf16 %v1196
    %v1326 = vunpack.c.h.bf16 %v1196
    %v1327 = vunpack.c.l.bf16 %v1197
    %v1328 = vunpack.c.h.bf16 %v1197
    %v1329 = vunpack.c.l.bf16 %v1198
    %v1330 = vunpack.c.h.bf16 %v1198
    %v1331 = vunpack.c.l.bf16 %v1199
    %v1332 = vunpack.c.h.bf16 %v1199
    %v1333 = vunpack.c.l.bf16 %v1200
    %v1334 = vunpack.c.h.bf16 %v1200
    %v1335 = vunpack.c.l.bf16 %v1201
    %v1336 = vunpack.c.h.bf16 %v1201
    %v1337 = vunpack.c.l.bf16 %v1202
    %v1338 = vunpack.c.h.bf16 %v1202
    %v1339 = vunpack.c.l.bf16 %v1203
    %v1340 = vunpack.c.h.bf16 %v1203
    %v1341 = vunpack.c.l.bf16 %v1204
    %v1342 = vunpack.c.h.bf16 %v1204
    %v1343 = vunpack.c.l.bf16 %v1205
    %v1344 = vunpack.c.h.bf16 %v1205
    %v1345 = vunpack.c.l.bf16 %v1206
    %v1346 = vunpack.c.h.bf16 %v1206
    %v1347 = vunpack.c.l.bf16 %v1207
    %v1348 = vunpack.c.h.bf16 %v1207
    %v1349 = vunpack.c.l.bf16 %v1208
    %v1350 = vunpack.c.h.bf16 %v1208
    %v1351 = vunpack.c.l.bf16 %v1209
    %v1352 = vunpack.c.h.bf16 %v1209
    %v1353 = vunpack.c.l.bf16 %v1210
    %v1354 = vunpack.c.h.bf16 %v1210
    %v1355 = vunpack.c.l.bf16 %v1211
    %v1356 = vunpack.c.h.bf16 %v1211
    %v1357 = vunpack.c.l.bf16 %v1212
    %v1358 = vunpack.c.h.bf16 %v1212
    %v1359 = vunpack.c.l.bf16 %v1213
    %v1360 = vunpack.c.h.bf16 %v1213
    %v1361 = vunpack.c.l.bf16 %v1214
    %v1362 = vunpack.c.h.bf16 %v1214
    %v1363 = vunpack.c.l.bf16 %v1215
    %v1364 = vunpack.c.h.bf16 %v1215
    %v1365 = vunpack.c.l.bf16 %v1216
    %v1366 = vunpack.c.h.bf16 %v1216
    %v1367 = vunpack.c.l.bf16 %v1217
    %v1368 = vunpack.c.h.bf16 %v1217
    %v1369 = vunpack.c.l.bf16 %v1218
    %v1370 = vunpack.c.h.bf16 %v1218
    %v1371 = vunpack.c.l.bf16 %v1219
    %v1372 = vunpack.c.h.bf16 %v1219
    %v1373 = vunpack.c.l.bf16 %v1220
    %v1374 = vunpack.c.h.bf16 %v1220
    %v1375 = vunpack.c.l.bf16 %v1221
    %v1376 = vunpack.c.h.bf16 %v1221
    %v1377 = vunpack.c.l.bf16 %v1222
    %v1378 = vunpack.c.h.bf16 %v1222
    %v1379 = vunpack.c.l.bf16 %v1223
    %v1380 = vunpack.c.h.bf16 %v1223
    %v1381 = vunpack.c.l.bf16 %v1224
    %v1382 = vunpack.c.h.bf16 %v1224
    %v1383 = vunpack.c.l.bf16 %v1225
    %v1384 = vunpack.c.h.bf16 %v1225
    %v1385 = vunpack.c.l.bf16 %v1226
    %v1386 = vunpack.c.h.bf16 %v1226
    %v1387 = vunpack.c.l.bf16 %v1227
    %v1388 = vunpack.c.h.bf16 %v1227
    %v1389 = vunpack.c.l.bf16 %v1228
    %v1390 = vunpack.c.h.bf16 %v1228
    %v1391 = vunpack.c.l.bf16 %v1229
    %v1392 = vunpack.c.h.bf16 %v1229
    %v1393 = vunpack.c.l.bf16 %v1230
    %v1394 = vunpack.c.h.bf16 %v1230
    %v1395 = vunpack.c.l.bf16 %v1231
    %v1396 = vunpack.c.h.bf16 %v1231
    %v1397 = vunpack.c.l.bf16 %v1232
    %v1398 = vunpack.c.h.bf16 %v1232
    %v1399 = vunpack.c.l.bf16 %v1233
    %v1400 = vunpack.c.h.bf16 %v1233
    %v1401 = vunpack.c.l.bf16 %v1234
    %v1402 = vunpack.c.h.bf16 %v1234
    %v1403 = vunpack.c.l.bf16 %v1235
    %v1404 = vunpack.c.h.bf16 %v1235
    %v1405 = vunpack.c.l.bf16 %v1236
    %v1406 = vunpack.c.h.bf16 %v1236
    %v1407 = vunpack.c.l.bf16 %v1237
    %v1408 = vunpack.c.h.bf16 %v1237
    %v1409 = vunpack.c.l.bf16 %v1238
    %v1410 = vunpack.c.h.bf16 %v1238
    %v1411 = vunpack.c.l.bf16 %v1239
    %v1412 = vunpack.c.h.bf16 %v1239
    %v1413 = vunpack.c.l.bf16 %v1240
    %v1414 = vunpack.c.h.bf16 %v1240
    %v1415 = vunpack.c.l.bf16 %v1241
    %v1416 = vunpack.c.h.bf16 %v1241
    %v1417 = vunpack.c.l.bf16 %v1242
    %v1418 = vunpack.c.h.bf16 %v1242
    %v1419 = vunpack.c.l.bf16 %v1243
    %v1420 = vunpack.c.h.bf16 %v1243
    %v1421 = vunpack.c.l.bf16 %v1244
    %v1422 = vunpack.c.h.bf16 %v1244
    %v1423 = vunpack.c.l.bf16 %v1245
    %v1424 = vunpack.c.h.bf16 %v1245
    %v1425 = vunpack.c.l.bf16 %v1246
    %v1426 = vunpack.c.h.bf16 %v1246
    %v1427 = vunpack.c.l.bf16 %v1247
    %v1428 = vunpack.c.h.bf16 %v1247
    %v1429 = vunpack.c.l.bf16 %v1248
    %v1430 = vunpack.c.h.bf16 %v1248
    %v1431 = vunpack.c.l.bf16 %v1249
    %v1432 = vunpack.c.h.bf16 %v1249
    %v1433 = vunpack.c.l.bf16 %v1250
    %v1434 = vunpack.c.h.bf16 %v1250
    %v1435 = vunpack.c.l.bf16 %v1251
    %v1436 = vunpack.c.h.bf16 %v1251
    %v1437 = vunpack.c.l.bf16 %v1252
    %v1438 = vunpack.c.h.bf16 %v1252
    %v1439 = vunpack.c.l.bf16 %v1253
    %v1440 = vunpack.c.h.bf16 %v1253
    %v1441 = vunpack.c.l.bf16 %v1254
    %v1442 = vunpack.c.h.bf16 %v1254
    %v1443 = vunpack.c.l.bf16 %v1255
    %v1444 = vunpack.c.h.bf16 %v1255
    %v1445 = vunpack.c.l.bf16 %v1256
    %v1446 = vunpack.c.h.bf16 %v1256
    %v1447 = vunpack.c.l.bf16 %v1257
    %v1448 = vunpack.c.h.bf16 %v1257
    %v1449 = vunpack.c.l.bf16 %v1258
    %v1450 = vunpack.c.h.bf16 %v1258
    %v1451 = vunpack.c.l.bf16 %v1259
    %v1452 = vunpack.c.h.bf16 %v1259
    %v1453 = vunpack.c.l.bf16 %v1260
    %v1454 = vunpack.c.h.bf16 %v1260
    %v1455 = vunpack.c.l.bf16 %v1261
    %v1456 = vunpack.c.h.bf16 %v1261
    %v1457 = vunpack.c.l.bf16 %v1262
    %v1458 = vunpack.c.h.bf16 %v1262
    %v1459 = vunpack.c.l.bf16 %v1263
    %v1460 = vunpack.c.h.bf16 %v1263
    %v1461 = vunpack.c.l.bf16 %v1264
    %v1462 = vunpack.c.h.bf16 %v1264
    %v1463 = vunpack.c.l.bf16 %v1265
    %v1464 = vunpack.c.h.bf16 %v1265
    %v1465 = vunpack.c.l.bf16 %v1266
    %v1466 = vunpack.c.h.bf16 %v1266
    %v1467 = vunpack.c.l.bf16 %v1267
    %v1468 = vunpack.c.h.bf16 %v1267
    %v1469 = vunpack.c.l.bf16 %v1268
    %v1470 = vunpack.c.h.bf16 %v1268
    %v1471 = vunpack.c.l.bf16 %v1269
    %v1472 = vunpack.c.h.bf16 %v1269
    %v1473 = vunpack.c.l.bf16 %v1270
    %v1474 = vunpack.c.h.bf16 %v1270
    %v1475 = vunpack.c.l.bf16 %v1271
    %v1476 = vunpack.c.h.bf16 %v1271
    %v1477 = vunpack.c.l.bf16 %v1272
    %v1478 = vunpack.c.h.bf16 %v1272
    %v1479 = vunpack.c.l.bf16 %v1273
    %v1480 = vunpack.c.h.bf16 %v1273
    %v1481 = vunpack.c.l.bf16 %v1274
    %v1482 = vunpack.c.h.bf16 %v1274
    %v1483 = vunpack.c.l.bf16 %v1275
    %v1484 = vunpack.c.h.bf16 %v1275
    %v1485 = vunpack.c.l.bf16 %v1276
    %v1486 = vunpack.c.h.bf16 %v1276
    %v1487 = vunpack.c.l.bf16 %v1277
    %v1488 = vunpack.c.h.bf16 %v1277
    %v1489 = vunpack.c.l.bf16 %v1278
    %v1490 = vunpack.c.h.bf16 %v1278
    %v1491 = vunpack.c.l.bf16 %v1279
    %v1492 = vunpack.c.h.bf16 %v1279
    %v1493 = vunpack.c.l.bf16 %v1280
    %v1494 = vunpack.c.h.bf16 %v1280
    %v1495 = vunpack.c.l.bf16 %v1281
    %v1496 = vunpack.c.h.bf16 %v1281
    %v1497 = vunpack.c.l.bf16 %v1282
    %v1498 = vunpack.c.h.bf16 %v1282
    %v1499 = vunpack.c.l.bf16 %v1283
    %v1500 = vunpack.c.h.bf16 %v1283
    %v1501 = vunpack.c.l.bf16 %v1284
    %v1502 = vunpack.c.h.bf16 %v1284
    %v1503 = vunpack.c.l.bf16 %v1285
    %v1504 = vunpack.c.h.bf16 %v1285
    %v1505 = vunpack.c.l.bf16 %v1286
    %v1506 = vunpack.c.h.bf16 %v1286
    %v1507 = vunpack.c.l.bf16 %v1287
    %v1508 = vunpack.c.h.bf16 %v1287
    %v1509 = vunpack.c.l.bf16 %v1288
    %v1510 = vunpack.c.h.bf16 %v1288
    %v1511 = vunpack.c.l.bf16 %v1289
    %v1512 = vunpack.c.h.bf16 %v1289
    %v1513 = vunpack.c.l.bf16 %v1290
    %v1514 = vunpack.c.h.bf16 %v1290
    %v1515 = vunpack.c.l.bf16 %v1291
    %v1516 = vunpack.c.h.bf16 %v1291
    %v1517 = vunpack.c.l.bf16 %v1292
    %v1518 = vunpack.c.h.bf16 %v1292
    %v1519 = vunpack.c.l.bf16 %v1293
    %v1520 = vunpack.c.h.bf16 %v1293
    %v1521 = vunpack.c.l.bf16 %v1294
    %v1522 = vunpack.c.h.bf16 %v1294
    %v1523 = vunpack.c.l.bf16 %v1295
    %v1524 = vunpack.c.h.bf16 %v1295
    %v1525 = vunpack.c.l.bf16 %v1296
    %v1526 = vunpack.c.h.bf16 %v1296
    %v1527 = vunpack.c.l.bf16 %v1297
    %v1528 = vunpack.c.h.bf16 %v1297
    %v1529 = vunpack.c.l.bf16 %v1298
    %v1530 = vunpack.c.h.bf16 %v1298
    %v1531 = vunpack.c.l.bf16 %v1299
    %v1532 = vunpack.c.h.bf16 %v1299
    %v1533 = vunpack.c.l.bf16 %v1300
    %v1534 = vunpack.c.h.bf16 %v1300
    %v1535 = vunpack.c.l.bf16 %v1301
    %v1536 = vunpack.c.h.bf16 %v1301
    %v1537 = vunpack.c.l.bf16 %v1302
    %v1538 = vunpack.c.h.bf16 %v1302
    %v1539 = vunpack.c.l.bf16 %v1303
    %v1540 = vunpack.c.h.bf16 %v1303
    %v1541 = vunpack.c.l.bf16 %v1304
    %v1542 = vunpack.c.h.bf16 %v1304
    %v1543 = vunpack.c.l.bf16 %v1305
    %v1544 = vunpack.c.h.bf16 %v1305
    %v1545 = vunpack.c.l.bf16 %v1306
    %v1546 = vunpack.c.h.bf16 %v1306
    %v1547 = vunpack.c.l.bf16 %v1307
    %v1548 = vunpack.c.h.bf16 %v1307
    %v1549 = vunpack.c.l.bf16 %v1308
    %v1550 = vunpack.c.h.bf16 %v1308
    %v1551 = vunpack.c.l.bf16 %v1309
    %v1552 = vunpack.c.h.bf16 %v1309
    %v1553 = vunpack.c.l.bf16 %v1310
    %v1554 = vunpack.c.h.bf16 %v1310
    %v1555 = vunpack.c.l.bf16 %v1311
    %v1556 = vunpack.c.h.bf16 %v1311
    %v1557 = vunpack.c.l.bf16 %v1312
    %v1558 = vunpack.c.h.bf16 %v1312
    %v1559 = vunpack.c.l.bf16 %v1313
    %v1560 = vunpack.c.h.bf16 %v1313
    %v1561 = vunpack.c.l.bf16 %v1314
    %v1562 = vunpack.c.h.bf16 %v1314
    %v1563 = vunpack.c.l.bf16 %v1315
    %v1564 = vunpack.c.h.bf16 %v1315
    %v1565 = vunpack.c.l.bf16 %v1316
    %v1566 = vunpack.c.h.bf16 %v1316
    %v1567 = vunpack.c.l.bf16 %v1317
    %v1568 = vunpack.c.h.bf16 %v1317
    %v1569 = vunpack.c.l.bf16 %v1318
    %v1570 = vunpack.c.h.bf16 %v1318
    %v1571 = vunpack.c.l.bf16 %v1319
    %v1572 = vunpack.c.h.bf16 %v1319
    %v1573 = vunpack.c.l.bf16 %v1320
    %v1574 = vunpack.c.h.bf16 %v1320
    %v1575 = vunpack.c.l.bf16 %v1321
    %v1576 = vunpack.c.h.bf16 %v1321
    %v1577 = vunpack.c.l.bf16 %v1322
    %v1578 = vunpack.c.h.bf16 %v1322
    %v1579 = vld [vmem:[%s6] sm:$0xf]
    %v1581 = vlaneseq
    %v1582 = vshrl.u32 %v1581, 7
    %v1583 = vsub.s32 0, %v1582
    %v1584 = vrot.slane %v1579, %v1583
    %v1585 = vlaneseq
    %v1586 = vshrl.u32 %v1585, 7
    %v1587 = vsub.s32 1, %v1586
    %v1588 = vrot.slane %v1579, %v1587
    %v1589 = vlaneseq
    %v1590 = vshrl.u32 %v1589, 7
    %v1591 = vsub.s32 2, %v1590
    %v1592 = vrot.slane %v1579, %v1591
    %v1593 = vlaneseq
    %v1594 = vshrl.u32 %v1593, 7
    %v1595 = vsub.s32 3, %v1594
    %v1596 = vrot.slane %v1579, %v1595
    %1601 = vmatprep.subr.mxu0 %v1324
    %1602 = vmatpush1.msra.mxu0 %v1323
    %1603 = vmatprep.subr.mxu0 %v1328
    %1604 = vmatpush1.msra.mxu0 %v1327
    %1605 = vmatprep.subr.mxu0 %v1332
    %1606 = vmatpush1.msra.mxu0 %v1331
    %1607 = vmatprep.subr.mxu0 %v1336
    %1608 = vmatpush1.msra.mxu0 %v1335
    %1609 = vmatprep.subr.mxu0 %v1340
    %1610 = vmatpush1.msra.mxu0 %v1339
    %1611 = vmatprep.subr.mxu0 %v1344
    %1612 = vmatpush1.msra.mxu0 %v1343
    %1613 = vmatprep.subr.mxu0 %v1348
    %1614 = vmatpush1.msra.mxu0 %v1347
    %1615 = vmatprep.subr.mxu0 %v1352
    %1616 = vmatpush1.msra.mxu0 %v1351
    %1617 = vmatprep.subr.mxu0 %v1356
    %1618 = vmatpush1.msra.mxu0 %v1355
    %1619 = vmatprep.subr.mxu0 %v1360
    %1620 = vmatpush1.msra.mxu0 %v1359
    %1621 = vmatprep.subr.mxu0 %v1364
    %1622 = vmatpush1.msra.mxu0 %v1363
    %1623 = vmatprep.subr.mxu0 %v1368
    %1624 = vmatpush1.msra.mxu0 %v1367
    %1625 = vmatprep.subr.mxu0 %v1372
    %1626 = vmatpush1.msra.mxu0 %v1371
    %1627 = vmatprep.subr.mxu0 %v1376
    %1628 = vmatpush1.msra.mxu0 %v1375
    %1629 = vmatprep.subr.mxu0 %v1380
    %1630 = vmatpush1.msra.mxu0 %v1379
    %1631 = vmatprep.subr.mxu0 %v1384
    %1632 = vmatpush1.msra.mxu0 %v1383
    %1633 = vmatprep.subr.mxu0 %v1388
    %1634 = vmatpush1.msra.mxu0 %v1387
    %1635 = vmatprep.subr.mxu0 %v1392
    %1636 = vmatpush1.msra.mxu0 %v1391
    %1637 = vmatprep.subr.mxu0 %v1396
    %1638 = vmatpush1.msra.mxu0 %v1395
    %1639 = vmatprep.subr.mxu0 %v1400
    %1640 = vmatpush1.msra.mxu0 %v1399
    %1641 = vmatprep.subr.mxu0 %v1404
    %1642 = vmatpush1.msra.mxu0 %v1403
    %1643 = vmatprep.subr.mxu0 %v1408
    %1644 = vmatpush1.msra.mxu0 %v1407
    %1645 = vmatprep.subr.mxu0 %v1412
    %1646 = vmatpush1.msra.mxu0 %v1411
    %1647 = vmatprep.subr.mxu0 %v1416
    %1648 = vmatpush1.msra.mxu0 %v1415
    %1649 = vmatprep.subr.mxu0 %v1420
    %1650 = vmatpush1.msra.mxu0 %v1419
    %1651 = vmatprep.subr.mxu0 %v1424
    %1652 = vmatpush1.msra.mxu0 %v1423
    %1653 = vmatprep.subr.mxu0 %v1428
    %1654 = vmatpush1.msra.mxu0 %v1427
    %1655 = vmatprep.subr.mxu0 %v1432
    %1656 = vmatpush1.msra.mxu0 %v1431
    %1657 = vmatprep.subr.mxu0 %v1436
    %1658 = vmatpush1.msra.mxu0 %v1435
    %1659 = vmatprep.subr.mxu0 %v1440
    %1660 = vmatpush1.msra.mxu0 %v1439
    %1661 = vmatprep.subr.mxu0 %v1444
    %1662 = vmatpush1.msra.mxu0 %v1443
    %1663 = vmatprep.subr.mxu0 %v1448
    %1664 = vmatpush1.msra.mxu0 %v1447
    %1665 = vmatprep.mubr.f32.mxu0 %v1068
    %1666 = vmatmul.mubr.f32.gmra.mrb[0].mxu0 %v1067
    %v1667 = vpop.f32.mrb[0].mxu0
    %v1668 = vadd.f32 %v1584, %v1667
    %v1669 = vpop.f32.mrb[0].mxu0
    %v1670 = vadd.f32 %v1588, %v1669
    %1671 = vmatprep.mubr.f32.mxu0 %v1072
    %1672 = vmatmul.mubr.f32.gmra.mrb[0].mxu0 %v1071
    %v1673 = vpop.f32.mrb[0].mxu0
    %v1674 = vadd.f32 %v1584, %v1673
    %v1675 = vpop.f32.mrb[0].mxu0
    %v1676 = vadd.f32 %v1588, %v1675
    %1677 = vmatprep.mubr.f32.mxu0 %v1076
    %1678 = vmatmul.mubr.f32.gmra.mrb[0].mxu0 %v1075
    %v1679 = vpop.f32.mrb[0].mxu0
    %v1680 = vadd.f32 %v1584, %v1679
    %v1681 = vpop.f32.mrb[0].mxu0
    %v1682 = vadd.f32 %v1588, %v1681
    %1683 = vmatprep.mubr.f32.mxu0 %v1080
    %1684 = vmatmul.mubr.f32.gmra.mrb[0].mxu0 %v1079
    %v1685 = vpop.f32.mrb[0].mxu0
    %v1686 = vadd.f32 %v1584, %v1685
    %v1687 = vpop.f32.mrb[0].mxu0
    %v1688 = vadd.f32 %v1588, %v1687
    %1689 = vmatprep.mubr.f32.mxu0 %v1084
    %1690 = vmatmul.mubr.f32.gmra.mrb[0].mxu0 %v1083
    %v1691 = vpop.f32.mrb[0].mxu0
    %v1692 = vadd.f32 %v1584, %v1691
    %v1693 = vpop.f32.mrb[0].mxu0
    %v1694 = vadd.f32 %v1588, %v1693
    %1695 = vmatprep.mubr.f32.mxu0 %v1088
    %1696 = vmatmul.mubr.f32.gmra.mrb[0].mxu0 %v1087
    %v1697 = vpop.f32.mrb[0].mxu0
    %v1698 = vadd.f32 %v1584, %v1697
    %v1699 = vpop.f32.mrb[0].mxu0
    %v1700 = vadd.f32 %v1588, %v1699
    %1701 = vmatprep.mubr.f32.mxu0 %v1092
    %1702 = vmatmul.mubr.f32.gmra.mrb[0].mxu0 %v1091
    %v1703 = vpop.f32.mrb[0].mxu0
    %v1704 = vadd.f32 %v1584, %v1703
    %v1705 = vpop.f32.mrb[0].mxu0
    %v1706 = vadd.f32 %v1588, %v1705
    %1707 = vmatprep.mubr.f32.mxu0 %v1096
    %1708 = vmatmul.mubr.f32.gmra.mrb[0].mxu0 %v1095
    %v1709 = vpop.f32.mrb[0].mxu0
    %v1710 = vadd.f32 %v1584, %v1709
    %v1711 = vpop.f32.mrb[0].mxu0
    %v1712 = vadd.f32 %v1588, %v1711
    %1713 = vmatprep.mubr.f32.mxu0 %v1100
    %1714 = vmatmul.mubr.f32.gmra.mrb[0].mxu0 %v1099
    %v1715 = vpop.f32.mrb[0].mxu0
    %v1716 = vadd.f32 %v1584, %v1715
    %v1717 = vpop.f32.mrb[0].mxu0
    %v1718 = vadd.f32 %v1588, %v1717
    %1719 = vmatprep.mubr.f32.mxu0 %v1104
    %1720 = vmatmul.mubr.f32.gmra.mrb[0].mxu0 %v1103
    %v1721 = vpop.f32.mrb[0].mxu0
    %v1722 = vadd.f32 %v1584, %v1721
    %v1723 = vpop.f32.mrb[0].mxu0
    %v1724 = vadd.f32 %v1588, %v1723
    %1725 = vmatprep.mubr.f32.mxu0 %v1108
    %1726 = vmatmul.mubr.f32.gmra.mrb[0].mxu0 %v1107
    %v1727 = vpop.f32.mrb[0].mxu0
    %v1728 = vadd.f32 %v1584, %v1727
    %v1729 = vpop.f32.mrb[0].mxu0
    %v1730 = vadd.f32 %v1588, %v1729
    %1731 = vmatprep.mubr.f32.mxu0 %v1112
    %1732 = vmatmul.mubr.f32.gmra.mrb[0].mxu0 %v1111
    %v1733 = vpop.f32.mrb[0].mxu0
    %v1734 = vadd.f32 %v1584, %v1733
    %v1735 = vpop.f32.mrb[0].mxu0
    %v1736 = vadd.f32 %v1588, %v1735
    %1737 = vmatprep.mubr.f32.mxu0 %v1116
    %1738 = vmatmul.mubr.f32.gmra.mrb[0].mxu0 %v1115
    %v1739 = vpop.f32.mrb[0].mxu0
    %v1740 = vadd.f32 %v1584, %v1739
    %v1741 = vpop.f32.mrb[0].mxu0
    %v1742 = vadd.f32 %v1588, %v1741
    %1743 = vmatprep.mubr.f32.mxu0 %v1120
    %1744 = vmatmul.mubr.f32.gmra.mrb[0].mxu0 %v1119
    %v1745 = vpop.f32.mrb[0].mxu0
    %v1746 = vadd.f32 %v1584, %v1745
    %v1747 = vpop.f32.mrb[0].mxu0
    %v1748 = vadd.f32 %v1588, %v1747
    %1749 = vmatprep.mubr.f32.mxu0 %v1124
    %1750 = vmatmul.mubr.f32.gmra.mrb[0].mxu0 %v1123
    %v1751 = vpop.f32.mrb[0].mxu0
    %v1752 = vadd.f32 %v1584, %v1751
    %v1753 = vpop.f32.mrb[0].mxu0
    %v1754 = vadd.f32 %v1588, %v1753
    %1755 = vmatprep.mubr.f32.mxu0 %v1128
    %1756 = vmatmul.mubr.f32.gmra.mrb[0].mxu0 %v1127
    %v1757 = vpop.f32.mrb[0].mxu0
    %v1758 = vadd.f32 %v1584, %v1757
    %v1759 = vpop.f32.mrb[0].mxu0
    %v1760 = vadd.f32 %v1588, %v1759
    %1761 = vmatprep.mubr.f32.mxu0 %v1132
    %1762 = vmatmul.mubr.f32.gmra.mrb[0].mxu0 %v1131
    %v1763 = vpop.f32.mrb[0].mxu0
    %v1764 = vadd.f32 %v1584, %v1763
    %v1765 = vpop.f32.mrb[0].mxu0
    %v1766 = vadd.f32 %v1588, %v1765
    %1767 = vmatprep.mubr.f32.mxu0 %v1136
    %1768 = vmatmul.mubr.f32.gmra.mrb[0].mxu0 %v1135
    %v1769 = vpop.f32.mrb[0].mxu0
    %v1770 = vadd.f32 %v1584, %v1769
    %v1771 = vpop.f32.mrb[0].mxu0
    %v1772 = vadd.f32 %v1588, %v1771
    %1773 = vmatprep.mubr.f32.mxu0 %v1140
    %1774 = vmatmul.mubr.f32.gmra.mrb[0].mxu0 %v1139
    %v1775 = vpop.f32.mrb[0].mxu0
    %v1776 = vadd.f32 %v1584, %v1775
    %v1777 = vpop.f32.mrb[0].mxu0
    %v1778 = vadd.f32 %v1588, %v1777
    %1779 = vmatprep.mubr.f32.mxu0 %v1144
    %1780 = vmatmul.mubr.f32.gmra.mrb[0].mxu0 %v1143
    %v1781 = vpop.f32.mrb[0].mxu0
    %v1782 = vadd.f32 %v1584, %v1781
    %v1783 = vpop.f32.mrb[0].mxu0
    %v1784 = vadd.f32 %v1588, %v1783
    %1785 = vmatprep.mubr.f32.mxu0 %v1148
    %1786 = vmatmul.mubr.f32.gmra.mrb[0].mxu0 %v1147
    %v1787 = vpop.f32.mrb[0].mxu0
    %v1788 = vadd.f32 %v1584, %v1787
    %v1789 = vpop.f32.mrb[0].mxu0
    %v1790 = vadd.f32 %v1588, %v1789
    %1791 = vmatprep.mubr.f32.mxu0 %v1152
    %1792 = vmatmul.mubr.f32.gmra.mrb[0].mxu0 %v1151
    %v1793 = vpop.f32.mrb[0].mxu0
    %v1794 = vadd.f32 %v1584, %v1793
    %v1795 = vpop.f32.mrb[0].mxu0
    %v1796 = vadd.f32 %v1588, %v1795
    %1797 = vmatprep.mubr.f32.mxu0 %v1156
    %1798 = vmatmul.mubr.f32.gmra.mrb[0].mxu0 %v1155
    %v1799 = vpop.f32.mrb[0].mxu0
    %v1800 = vadd.f32 %v1584, %v1799
    %v1801 = vpop.f32.mrb[0].mxu0
    %v1802 = vadd.f32 %v1588, %v1801
    %1803 = vmatprep.mubr.f32.mxu0 %v1160
    %1804 = vmatmul.mubr.f32.gmra.mrb[0].mxu0 %v1159
    %v1805 = vpop.f32.mrb[0].mxu0
    %v1806 = vadd.f32 %v1584, %v1805
    %v1807 = vpop.f32.mrb[0].mxu0
    %v1808 = vadd.f32 %v1588, %v1807
    %1809 = vmatprep.mubr.f32.mxu0 %v1164
    %1810 = vmatmul.mubr.f32.gmra.mrb[0].mxu0 %v1163
    %v1811 = vpop.f32.mrb[0].mxu0
    %v1812 = vadd.f32 %v1584, %v1811
    %v1813 = vpop.f32.mrb[0].mxu0
    %v1814 = vadd.f32 %v1588, %v1813
    %1815 = vmatprep.mubr.f32.mxu0 %v1168
    %1816 = vmatmul.mubr.f32.gmra.mrb[0].mxu0 %v1167
    %v1817 = vpop.f32.mrb[0].mxu0
    %v1818 = vadd.f32 %v1584, %v1817
    %v1819 = vpop.f32.mrb[0].mxu0
    %v1820 = vadd.f32 %v1588, %v1819
    %1821 = vmatprep.mubr.f32.mxu0 %v1172
    %1822 = vmatmul.mubr.f32.gmra.mrb[0].mxu0 %v1171
    %v1823 = vpop.f32.mrb[0].mxu0
    %v1824 = vadd.f32 %v1584, %v1823
    %v1825 = vpop.f32.mrb[0].mxu0
    %v1826 = vadd.f32 %v1588, %v1825
    %1827 = vmatprep.mubr.f32.mxu0 %v1176
    %1828 = vmatmul.mubr.f32.gmra.mrb[0].mxu0 %v1175
    %v1829 = vpop.f32.mrb[0].mxu0
    %v1830 = vadd.f32 %v1584, %v1829
    %v1831 = vpop.f32.mrb[0].mxu0
    %v1832 = vadd.f32 %v1588, %v1831
    %1833 = vmatprep.mubr.f32.mxu0 %v1180
    %1834 = vmatmul.mubr.f32.gmra.mrb[0].mxu0 %v1179
    %v1835 = vpop.f32.mrb[0].mxu0
    %v1836 = vadd.f32 %v1584, %v1835
    %v1837 = vpop.f32.mrb[0].mxu0
    %v1838 = vadd.f32 %v1588, %v1837
    %1839 = vmatprep.mubr.f32.mxu0 %v1184
    %1840 = vmatmul.mubr.f32.gmra.mrb[0].mxu0 %v1183
    %v1841 = vpop.f32.mrb[0].mxu0
    %v1842 = vadd.f32 %v1584, %v1841
    %v1843 = vpop.f32.mrb[0].mxu0
    %v1844 = vadd.f32 %v1588, %v1843
    %1845 = vmatprep.mubr.f32.mxu0 %v1188
    %1846 = vmatmul.mubr.f32.gmra.mrb[0].mxu0 %v1187
    %v1847 = vpop.f32.mrb[0].mxu0
    %v1848 = vadd.f32 %v1584, %v1847
    %v1849 = vpop.f32.mrb[0].mxu0
    %v1850 = vadd.f32 %v1588, %v1849
    %1851 = vmatprep.mubr.f32.mxu0 %v1192
    %1852 = vmatmul.mubr.f32.gmra.mrb[0].mxu0 %v1191
    %v1853 = vpop.f32.mrb[0].mxu0
    %v1854 = vadd.f32 %v1584, %v1853
    %v1855 = vpop.f32.mrb[0].mxu0
    %v1856 = vadd.f32 %v1588, %v1855
    %1857 = vdwg.mxu0
    %1858 = vmatprep.subr.mxu0 %v1452
    %1859 = vmatpush1.msra.mxu0 %v1451
    %1860 = vmatprep.subr.mxu0 %v1456
    %1861 = vmatpush1.msra.mxu0 %v1455
    %1862 = vmatprep.subr.mxu0 %v1460
    %1863 = vmatpush1.msra.mxu0 %v1459
    %1864 = vmatprep.subr.mxu0 %v1464
    %1865 = vmatpush1.msra.mxu0 %v1463
    %1866 = vmatprep.subr.mxu0 %v1468
    %1867 = vmatpush1.msra.mxu0 %v1467
    %1868 = vmatprep.subr.mxu0 %v1472
    %1869 = vmatpush1.msra.mxu0 %v1471
    %1870 = vmatprep.subr.mxu0 %v1476
    %1871 = vmatpush1.msra.mxu0 %v1475
    %1872 = vmatprep.subr.mxu0 %v1480
    %1873 = vmatpush1.msra.mxu0 %v1479
    %1874 = vmatprep.subr.mxu0 %v1484
    %1875 = vmatpush1.msra.mxu0 %v1483
    %1876 = vmatprep.subr.mxu0 %v1488
    %1877 = vmatpush1.msra.mxu0 %v1487
    %1878 = vmatprep.subr.mxu0 %v1492
    %1879 = vmatpush1.msra.mxu0 %v1491
    %1880 = vmatprep.subr.mxu0 %v1496
    %1881 = vmatpush1.msra.mxu0 %v1495
    %1882 = vmatprep.subr.mxu0 %v1500
    %1883 = vmatpush1.msra.mxu0 %v1499
    %1884 = vmatprep.subr.mxu0 %v1504
    %1885 = vmatpush1.msra.mxu0 %v1503
    %1886 = vmatprep.subr.mxu0 %v1508
    %1887 = vmatpush1.msra.mxu0 %v1507
    %1888 = vmatprep.subr.mxu0 %v1512
    %1889 = vmatpush1.msra.mxu0 %v1511
    %1890 = vmatprep.subr.mxu0 %v1516
    %1891 = vmatpush1.msra.mxu0 %v1515
    %1892 = vmatprep.subr.mxu0 %v1520
    %1893 = vmatpush1.msra.mxu0 %v1519
    %1894 = vmatprep.subr.mxu0 %v1524
    %1895 = vmatpush1.msra.mxu0 %v1523
    %1896 = vmatprep.subr.mxu0 %v1528
    %1897 = vmatpush1.msra.mxu0 %v1527
    %1898 = vmatprep.subr.mxu0 %v1532
    %1899 = vmatpush1.msra.mxu0 %v1531
    %1900 = vmatprep.subr.mxu0 %v1536
    %1901 = vmatpush1.msra.mxu0 %v1535
    %1902 = vmatprep.subr.mxu0 %v1540
    %1903 = vmatpush1.msra.mxu0 %v1539
    %1904 = vmatprep.subr.mxu0 %v1544
    %1905 = vmatpush1.msra.mxu0 %v1543
    %1906 = vmatprep.subr.mxu0 %v1548
    %1907 = vmatpush1.msra.mxu0 %v1547
    %1908 = vmatprep.subr.mxu0 %v1552
    %1909 = vmatpush1.msra.mxu0 %v1551
    %1910 = vmatprep.subr.mxu0 %v1556
    %1911 = vmatpush1.msra.mxu0 %v1555
    %1912 = vmatprep.subr.mxu0 %v1560
    %1913 = vmatpush1.msra.mxu0 %v1559
    %1914 = vmatprep.subr.mxu0 %v1564
    %1915 = vmatpush1.msra.mxu0 %v1563
    %1916 = vmatprep.subr.mxu0 %v1568
    %1917 = vmatpush1.msra.mxu0 %v1567
    %1918 = vmatprep.subr.mxu0 %v1572
    %1919 = vmatpush1.msra.mxu0 %v1571
    %1920 = vmatprep.subr.mxu0 %v1576
    %1921 = vmatpush1.msra.mxu0 %v1575
    %1922 = vmatprep.mubr.f32.mxu0 %v1070
    %1923 = vmatmul.mubr.f32.gmra.mrb[0].mxu0 %v1069
    %v1924 = vpop.f32.mrb[0].mxu0
    %v1925 = vadd.f32 %v1668, %v1924
    %v1926 = vpop.f32.mrb[0].mxu0
    %v1927 = vadd.f32 %v1670, %v1926
    %1928 = vmatprep.mubr.f32.mxu0 %v1074
    %1929 = vmatmul.mubr.f32.gmra.mrb[0].mxu0 %v1073
    %v1930 = vpop.f32.mrb[0].mxu0
    %v1931 = vadd.f32 %v1674, %v1930
    %v1932 = vpop.f32.mrb[0].mxu0
    %v1933 = vadd.f32 %v1676, %v1932
    %1934 = vmatprep.mubr.f32.mxu0 %v1078
    %1935 = vmatmul.mubr.f32.gmra.mrb[0].mxu0 %v1077
    %v1936 = vpop.f32.mrb[0].mxu0
    %v1937 = vadd.f32 %v1680, %v1936
    %v1938 = vpop.f32.mrb[0].mxu0
    %v1939 = vadd.f32 %v1682, %v1938
    %1940 = vmatprep.mubr.f32.mxu0 %v1082
    %1941 = vmatmul.mubr.f32.gmra.mrb[0].mxu0 %v1081
    %v1942 = vpop.f32.mrb[0].mxu0
    %v1943 = vadd.f32 %v1686, %v1942
    %v1944 = vpop.f32.mrb[0].mxu0
    %v1945 = vadd.f32 %v1688, %v1944
    %1946 = vmatprep.mubr.f32.mxu0 %v1086
    %1947 = vmatmul.mubr.f32.gmra.mrb[0].mxu0 %v1085
    %v1948 = vpop.f32.mrb[0].mxu0
    %v1949 = vadd.f32 %v1692, %v1948
    %v1950 = vpop.f32.mrb[0].mxu0
    %v1951 = vadd.f32 %v1694, %v1950
    %1952 = vmatprep.mubr.f32.mxu0 %v1090
    %1953 = vmatmul.mubr.f32.gmra.mrb[0].mxu0 %v1089
    %v1954 = vpop.f32.mrb[0].mxu0
    %v1955 = vadd.f32 %v1698, %v1954
    %v1956 = vpop.f32.mrb[0].mxu0
    %v1957 = vadd.f32 %v1700, %v1956
    %1958 = vmatprep.mubr.f32.mxu0 %v1094
    %1959 = vmatmul.mubr.f32.gmra.mrb[0].mxu0 %v1093
    %v1960 = vpop.f32.mrb[0].mxu0
    %v1961 = vadd.f32 %v1704, %v1960
    %v1962 = vpop.f32.mrb[0].mxu0
    %v1963 = vadd.f32 %v1706, %v1962
    %1964 = vmatprep.mubr.f32.mxu0 %v1098
    %1965 = vmatmul.mubr.f32.gmra.mrb[0].mxu0 %v1097
    %v1966 = vpop.f32.mrb[0].mxu0
    %v1967 = vadd.f32 %v1710, %v1966
    %v1968 = vpop.f32.mrb[0].mxu0
    %v1969 = vadd.f32 %v1712, %v1968
    %1970 = vmatprep.mubr.f32.mxu0 %v1102
    %1971 = vmatmul.mubr.f32.gmra.mrb[0].mxu0 %v1101
    %v1972 = vpop.f32.mrb[0].mxu0
    %v1973 = vadd.f32 %v1716, %v1972
    %v1974 = vpop.f32.mrb[0].mxu0
    %v1975 = vadd.f32 %v1718, %v1974
    %1976 = vmatprep.mubr.f32.mxu0 %v1106
    %1977 = vmatmul.mubr.f32.gmra.mrb[0].mxu0 %v1105
    %v1978 = vpop.f32.mrb[0].mxu0
    %v1979 = vadd.f32 %v1722, %v1978
    %v1980 = vpop.f32.mrb[0].mxu0
    %v1981 = vadd.f32 %v1724, %v1980
    %1982 = vmatprep.mubr.f32.mxu0 %v1110
    %1983 = vmatmul.mubr.f32.gmra.mrb[0].mxu0 %v1109
    %v1984 = vpop.f32.mrb[0].mxu0
    %v1985 = vadd.f32 %v1728, %v1984
    %v1986 = vpop.f32.mrb[0].mxu0
    %v1987 = vadd.f32 %v1730, %v1986
    %1988 = vmatprep.mubr.f32.mxu0 %v1114
    %1989 = vmatmul.mubr.f32.gmra.mrb[0].mxu0 %v1113
    %v1990 = vpop.f32.mrb[0].mxu0
    %v1991 = vadd.f32 %v1734, %v1990
    %v1992 = vpop.f32.mrb[0].mxu0
    %v1993 = vadd.f32 %v1736, %v1992
    %1994 = vmatprep.mubr.f32.mxu0 %v1118
    %1995 = vmatmul.mubr.f32.gmra.mrb[0].mxu0 %v1117
    %v1996 = vpop.f32.mrb[0].mxu0
    %v1997 = vadd.f32 %v1740, %v1996
    %v1998 = vpop.f32.mrb[0].mxu0
    %v1999 = vadd.f32 %v1742, %v1998
    %2000 = vmatprep.mubr.f32.mxu0 %v1122
    %2001 = vmatmul.mubr.f32.gmra.mrb[0].mxu0 %v1121
    %v2002 = vpop.f32.mrb[0].mxu0
    %v2003 = vadd.f32 %v1746, %v2002
    %v2004 = vpop.f32.mrb[0].mxu0
    %v2005 = vadd.f32 %v1748, %v2004
    %2006 = vmatprep.mubr.f32.mxu0 %v1126
    %2007 = vmatmul.mubr.f32.gmra.mrb[0].mxu0 %v1125
    %v2008 = vpop.f32.mrb[0].mxu0
    %v2009 = vadd.f32 %v1752, %v2008
    %v2010 = vpop.f32.mrb[0].mxu0
    %v2011 = vadd.f32 %v1754, %v2010
    %2012 = vmatprep.mubr.f32.mxu0 %v1130
    %2013 = vmatmul.mubr.f32.gmra.mrb[0].mxu0 %v1129
    %v2014 = vpop.f32.mrb[0].mxu0
    %v2015 = vadd.f32 %v1758, %v2014
    %v2016 = vpop.f32.mrb[0].mxu0
    %v2017 = vadd.f32 %v1760, %v2016
    %2018 = vmatprep.mubr.f32.mxu0 %v1134
    %2019 = vmatmul.mubr.f32.gmra.mrb[0].mxu0 %v1133
    %v2020 = vpop.f32.mrb[0].mxu0
    %v2021 = vadd.f32 %v1764, %v2020
    %v2022 = vpop.f32.mrb[0].mxu0
    %v2023 = vadd.f32 %v1766, %v2022
    %2024 = vmatprep.mubr.f32.mxu0 %v1138
    %2025 = vmatmul.mubr.f32.gmra.mrb[0].mxu0 %v1137
    %v2026 = vpop.f32.mrb[0].mxu0
    %v2027 = vadd.f32 %v1770, %v2026
    %v2028 = vpop.f32.mrb[0].mxu0
    %v2029 = vadd.f32 %v1772, %v2028
    %2030 = vmatprep.mubr.f32.mxu0 %v1142
    %2031 = vmatmul.mubr.f32.gmra.mrb[0].mxu0 %v1141
    %v2032 = vpop.f32.mrb[0].mxu0
    %v2033 = vadd.f32 %v1776, %v2032
    %v2034 = vpop.f32.mrb[0].mxu0
    %v2035 = vadd.f32 %v1778, %v2034
    %2036 = vmatprep.mubr.f32.mxu0 %v1146
    %2037 = vmatmul.mubr.f32.gmra.mrb[0].mxu0 %v1145
    %v2038 = vpop.f32.mrb[0].mxu0
    %v2039 = vadd.f32 %v1782, %v2038
    %v2040 = vpop.f32.mrb[0].mxu0
    %v2041 = vadd.f32 %v1784, %v2040
    %2042 = vmatprep.mubr.f32.mxu0 %v1150
    %2043 = vmatmul.mubr.f32.gmra.mrb[0].mxu0 %v1149
    %v2044 = vpop.f32.mrb[0].mxu0
    %v2045 = vadd.f32 %v1788, %v2044
    %v2046 = vpop.f32.mrb[0].mxu0
    %v2047 = vadd.f32 %v1790, %v2046
    %2048 = vmatprep.mubr.f32.mxu0 %v1154
    %2049 = vmatmul.mubr.f32.gmra.mrb[0].mxu0 %v1153
    %v2050 = vpop.f32.mrb[0].mxu0
    %v2051 = vadd.f32 %v1794, %v2050
    %v2052 = vpop.f32.mrb[0].mxu0
    %v2053 = vadd.f32 %v1796, %v2052
    %2054 = vmatprep.mubr.f32.mxu0 %v1158
    %2055 = vmatmul.mubr.f32.gmra.mrb[0].mxu0 %v1157
    %v2056 = vpop.f32.mrb[0].mxu0
    %v2057 = vadd.f32 %v1800, %v2056
    %v2058 = vpop.f32.mrb[0].mxu0
    %v2059 = vadd.f32 %v1802, %v2058
    %2060 = vmatprep.mubr.f32.mxu0 %v1162
    %2061 = vmatmul.mubr.f32.gmra.mrb[0].mxu0 %v1161
    %v2062 = vpop.f32.mrb[0].mxu0
    %v2063 = vadd.f32 %v1806, %v2062
    %v2064 = vpop.f32.mrb[0].mxu0
    %v2065 = vadd.f32 %v1808, %v2064
    %2066 = vmatprep.mubr.f32.mxu0 %v1166
    %2067 = vmatmul.mubr.f32.gmra.mrb[0].mxu0 %v1165
    %v2068 = vpop.f32.mrb[0].mxu0
    %v2069 = vadd.f32 %v1812, %v2068
    %v2070 = vpop.f32.mrb[0].mxu0
    %v2071 = vadd.f32 %v1814, %v2070
    %2072 = vmatprep.mubr.f32.mxu0 %v1170
    %2073 = vmatmul.mubr.f32.gmra.mrb[0].mxu0 %v1169
    %v2074 = vpop.f32.mrb[0].mxu0
    %v2075 = vadd.f32 %v1818, %v2074
    %v2076 = vpop.f32.mrb[0].mxu0
    %v2077 = vadd.f32 %v1820, %v2076
    %2078 = vmatprep.mubr.f32.mxu0 %v1174
    %2079 = vmatmul.mubr.f32.gmra.mrb[0].mxu0 %v1173
    %v2080 = vpop.f32.mrb[0].mxu0
    %v2081 = vadd.f32 %v1824, %v2080
    %v2082 = vpop.f32.mrb[0].mxu0
    %v2083 = vadd.f32 %v1826, %v2082
    %2084 = vmatprep.mubr.f32.mxu0 %v1178
    %2085 = vmatmul.mubr.f32.gmra.mrb[0].mxu0 %v1177
    %v2086 = vpop.f32.mrb[0].mxu0
    %v2087 = vadd.f32 %v1830, %v2086
    %v2088 = vpop.f32.mrb[0].mxu0
    %v2089 = vadd.f32 %v1832, %v2088
    %2090 = vmatprep.mubr.f32.mxu0 %v1182
    %2091 = vmatmul.mubr.f32.gmra.mrb[0].mxu0 %v1181
    %v2092 = vpop.f32.mrb[0].mxu0
    %v2093 = vadd.f32 %v1836, %v2092
    %v2094 = vpop.f32.mrb[0].mxu0
    %v2095 = vadd.f32 %v1838, %v2094
    %2096 = vmatprep.mubr.f32.mxu0 %v1186
    %2097 = vmatmul.mubr.f32.gmra.mrb[0].mxu0 %v1185
    %v2098 = vpop.f32.mrb[0].mxu0
    %v2099 = vadd.f32 %v1842, %v2098
    %v2100 = vpop.f32.mrb[0].mxu0
    %v2101 = vadd.f32 %v1844, %v2100
    %2102 = vmatprep.mubr.f32.mxu0 %v1190
    %2103 = vmatmul.mubr.f32.gmra.mrb[0].mxu0 %v1189
    %v2104 = vpop.f32.mrb[0].mxu0
    %v2105 = vadd.f32 %v1848, %v2104
    %v2106 = vpop.f32.mrb[0].mxu0
    %v2107 = vadd.f32 %v1850, %v2106
    %2108 = vmatprep.mubr.f32.mxu0 %v1194
    %2109 = vmatmul.mubr.f32.gmra.mrb[0].mxu0 %v1193
    %v2110 = vpop.f32.mrb[0].mxu0
    %v2111 = vadd.f32 %v1854, %v2110
    %v2112 = vpop.f32.mrb[0].mxu0
    %v2113 = vadd.f32 %v1856, %v2112
    %2114 = vdwg.mxu0
    %2115 = vmatprep.subr.mxu0 %v1326
    %2116 = vmatpush1.msra.mxu0 %v1325
    %2117 = vmatprep.subr.mxu0 %v1330
    %2118 = vmatpush1.msra.mxu0 %v1329
    %2119 = vmatprep.subr.mxu0 %v1334
    %2120 = vmatpush1.msra.mxu0 %v1333
    %2121 = vmatprep.subr.mxu0 %v1338
    %2122 = vmatpush1.msra.mxu0 %v1337
    %2123 = vmatprep.subr.mxu0 %v1342
    %2124 = vmatpush1.msra.mxu0 %v1341
    %2125 = vmatprep.subr.mxu0 %v1346
    %2126 = vmatpush1.msra.mxu0 %v1345
    %2127 = vmatprep.subr.mxu0 %v1350
    %2128 = vmatpush1.msra.mxu0 %v1349
    %2129 = vmatprep.subr.mxu0 %v1354
    %2130 = vmatpush1.msra.mxu0 %v1353
    %2131 = vmatprep.subr.mxu0 %v1358
    %2132 = vmatpush1.msra.mxu0 %v1357
    %2133 = vmatprep.subr.mxu0 %v1362
    %2134 = vmatpush1.msra.mxu0 %v1361
    %2135 = vmatprep.subr.mxu0 %v1366
    %2136 = vmatpush1.msra.mxu0 %v1365
    %2137 = vmatprep.subr.mxu0 %v1370
    %2138 = vmatpush1.msra.mxu0 %v1369
    %2139 = vmatprep.subr.mxu0 %v1374
    %2140 = vmatpush1.msra.mxu0 %v1373
    %2141 = vmatprep.subr.mxu0 %v1378
    %2142 = vmatpush1.msra.mxu0 %v1377
    %2143 = vmatprep.subr.mxu0 %v1382
    %2144 = vmatpush1.msra.mxu0 %v1381
    %2145 = vmatprep.subr.mxu0 %v1386
    %2146 = vmatpush1.msra.mxu0 %v1385
    %2147 = vmatprep.subr.mxu0 %v1390
    %2148 = vmatpush1.msra.mxu0 %v1389
    %2149 = vmatprep.subr.mxu0 %v1394
    %2150 = vmatpush1.msra.mxu0 %v1393
    %2151 = vmatprep.subr.mxu0 %v1398
    %2152 = vmatpush1.msra.mxu0 %v1397
    %2153 = vmatprep.subr.mxu0 %v1402
    %2154 = vmatpush1.msra.mxu0 %v1401
    %2155 = vmatprep.subr.mxu0 %v1406
    %2156 = vmatpush1.msra.mxu0 %v1405
    %2157 = vmatprep.subr.mxu0 %v1410
    %2158 = vmatpush1.msra.mxu0 %v1409
    %2159 = vmatprep.subr.mxu0 %v1414
    %2160 = vmatpush1.msra.mxu0 %v1413
    %2161 = vmatprep.subr.mxu0 %v1418
    %2162 = vmatpush1.msra.mxu0 %v1417
    %2163 = vmatprep.subr.mxu0 %v1422
    %2164 = vmatpush1.msra.mxu0 %v1421
    %2165 = vmatprep.subr.mxu0 %v1426
    %2166 = vmatpush1.msra.mxu0 %v1425
    %2167 = vmatprep.subr.mxu0 %v1430
    %2168 = vmatpush1.msra.mxu0 %v1429
    %2169 = vmatprep.subr.mxu0 %v1434
    %2170 = vmatpush1.msra.mxu0 %v1433
    %2171 = vmatprep.subr.mxu0 %v1438
    %2172 = vmatpush1.msra.mxu0 %v1437
    %2173 = vmatprep.subr.mxu0 %v1442
    %2174 = vmatpush1.msra.mxu0 %v1441
    %2175 = vmatprep.subr.mxu0 %v1446
    %2176 = vmatpush1.msra.mxu0 %v1445
    %2177 = vmatprep.subr.mxu0 %v1450
    %2178 = vmatpush1.msra.mxu0 %v1449
    %2179 = vmatprep.mubr.f32.mxu0 %v1068
    %2180 = vmatmul.mubr.f32.gmra.mrb[0].mxu0 %v1067
    %v2181 = vpop.f32.mrb[0].mxu0
    %v2182 = vadd.f32 %v1592, %v2181
    %v2183 = vpop.f32.mrb[0].mxu0
    %v2184 = vadd.f32 %v1596, %v2183
    %2185 = vmatprep.mubr.f32.mxu0 %v1072
    %2186 = vmatmul.mubr.f32.gmra.mrb[0].mxu0 %v1071
    %v2187 = vpop.f32.mrb[0].mxu0
    %v2188 = vadd.f32 %v1592, %v2187
    %v2189 = vpop.f32.mrb[0].mxu0
    %v2190 = vadd.f32 %v1596, %v2189
    %2191 = vmatprep.mubr.f32.mxu0 %v1076
    %2192 = vmatmul.mubr.f32.gmra.mrb[0].mxu0 %v1075
    %v2193 = vpop.f32.mrb[0].mxu0
    %v2194 = vadd.f32 %v1592, %v2193
    %v2195 = vpop.f32.mrb[0].mxu0
    %v2196 = vadd.f32 %v1596, %v2195
    %2197 = vmatprep.mubr.f32.mxu0 %v1080
    %2198 = vmatmul.mubr.f32.gmra.mrb[0].mxu0 %v1079
    %v2199 = vpop.f32.mrb[0].mxu0
    %v2200 = vadd.f32 %v1592, %v2199
    %v2201 = vpop.f32.mrb[0].mxu0
    %v2202 = vadd.f32 %v1596, %v2201
    %2203 = vmatprep.mubr.f32.mxu0 %v1084
    %2204 = vmatmul.mubr.f32.gmra.mrb[0].mxu0 %v1083
    %v2205 = vpop.f32.mrb[0].mxu0
    %v2206 = vadd.f32 %v1592, %v2205
    %v2207 = vpop.f32.mrb[0].mxu0
    %v2208 = vadd.f32 %v1596, %v2207
    %2209 = vmatprep.mubr.f32.mxu0 %v1088
    %2210 = vmatmul.mubr.f32.gmra.mrb[0].mxu0 %v1087
    %v2211 = vpop.f32.mrb[0].mxu0
    %v2212 = vadd.f32 %v1592, %v2211
    %v2213 = vpop.f32.mrb[0].mxu0
    %v2214 = vadd.f32 %v1596, %v2213
    %2215 = vmatprep.mubr.f32.mxu0 %v1092
    %2216 = vmatmul.mubr.f32.gmra.mrb[0].mxu0 %v1091
    %v2217 = vpop.f32.mrb[0].mxu0
    %v2218 = vadd.f32 %v1592, %v2217
    %v2219 = vpop.f32.mrb[0].mxu0
    %v2220 = vadd.f32 %v1596, %v2219
    %2221 = vmatprep.mubr.f32.mxu0 %v1096
    %2222 = vmatmul.mubr.f32.gmra.mrb[0].mxu0 %v1095
    %v2223 = vpop.f32.mrb[0].mxu0
    %v2224 = vadd.f32 %v1592, %v2223
    %v2225 = vpop.f32.mrb[0].mxu0
    %v2226 = vadd.f32 %v1596, %v2225
    %2227 = vmatprep.mubr.f32.mxu0 %v1100
    %2228 = vmatmul.mubr.f32.gmra.mrb[0].mxu0 %v1099
    %v2229 = vpop.f32.mrb[0].mxu0
    %v2230 = vadd.f32 %v1592, %v2229
    %v2231 = vpop.f32.mrb[0].mxu0
    %v2232 = vadd.f32 %v1596, %v2231
    %2233 = vmatprep.mubr.f32.mxu0 %v1104
    %2234 = vmatmul.mubr.f32.gmra.mrb[0].mxu0 %v1103
    %v2235 = vpop.f32.mrb[0].mxu0
    %v2236 = vadd.f32 %v1592, %v2235
    %v2237 = vpop.f32.mrb[0].mxu0
    %v2238 = vadd.f32 %v1596, %v2237
    %2239 = vmatprep.mubr.f32.mxu0 %v1108
    %2240 = vmatmul.mubr.f32.gmra.mrb[0].mxu0 %v1107
    %v2241 = vpop.f32.mrb[0].mxu0
    %v2242 = vadd.f32 %v1592, %v2241
    %v2243 = vpop.f32.mrb[0].mxu0
    %v2244 = vadd.f32 %v1596, %v2243
    %2245 = vmatprep.mubr.f32.mxu0 %v1112
    %2246 = vmatmul.mubr.f32.gmra.mrb[0].mxu0 %v1111
    %v2247 = vpop.f32.mrb[0].mxu0
    %v2248 = vadd.f32 %v1592, %v2247
    %v2249 = vpop.f32.mrb[0].mxu0
    %v2250 = vadd.f32 %v1596, %v2249
    %2251 = vmatprep.mubr.f32.mxu0 %v1116
    %2252 = vmatmul.mubr.f32.gmra.mrb[0].mxu0 %v1115
    %v2253 = vpop.f32.mrb[0].mxu0
    %v2254 = vadd.f32 %v1592, %v2253
    %v2255 = vpop.f32.mrb[0].mxu0
    %v2256 = vadd.f32 %v1596, %v2255
    %2257 = vmatprep.mubr.f32.mxu0 %v1120
    %2258 = vmatmul.mubr.f32.gmra.mrb[0].mxu0 %v1119
    %v2259 = vpop.f32.mrb[0].mxu0
    %v2260 = vadd.f32 %v1592, %v2259
    %v2261 = vpop.f32.mrb[0].mxu0
    %v2262 = vadd.f32 %v1596, %v2261
    %2263 = vmatprep.mubr.f32.mxu0 %v1124
    %2264 = vmatmul.mubr.f32.gmra.mrb[0].mxu0 %v1123
    %v2265 = vpop.f32.mrb[0].mxu0
    %v2266 = vadd.f32 %v1592, %v2265
    %v2267 = vpop.f32.mrb[0].mxu0
    %v2268 = vadd.f32 %v1596, %v2267
    %2269 = vmatprep.mubr.f32.mxu0 %v1128
    %2270 = vmatmul.mubr.f32.gmra.mrb[0].mxu0 %v1127
    %v2271 = vpop.f32.mrb[0].mxu0
    %v2272 = vadd.f32 %v1592, %v2271
    %v2273 = vpop.f32.mrb[0].mxu0
    %v2274 = vadd.f32 %v1596, %v2273
    %2275 = vmatprep.mubr.f32.mxu0 %v1132
    %2276 = vmatmul.mubr.f32.gmra.mrb[0].mxu0 %v1131
    %v2277 = vpop.f32.mrb[0].mxu0
    %v2278 = vadd.f32 %v1592, %v2277
    %v2279 = vpop.f32.mrb[0].mxu0
    %v2280 = vadd.f32 %v1596, %v2279
    %2281 = vmatprep.mubr.f32.mxu0 %v1136
    %2282 = vmatmul.mubr.f32.gmra.mrb[0].mxu0 %v1135
    %v2283 = vpop.f32.mrb[0].mxu0
    %v2284 = vadd.f32 %v1592, %v2283
    %v2285 = vpop.f32.mrb[0].mxu0
    %v2286 = vadd.f32 %v1596, %v2285
    %2287 = vmatprep.mubr.f32.mxu0 %v1140
    %2288 = vmatmul.mubr.f32.gmra.mrb[0].mxu0 %v1139
    %v2289 = vpop.f32.mrb[0].mxu0
    %v2290 = vadd.f32 %v1592, %v2289
    %v2291 = vpop.f32.mrb[0].mxu0
    %v2292 = vadd.f32 %v1596, %v2291
    %2293 = vmatprep.mubr.f32.mxu0 %v1144
    %2294 = vmatmul.mubr.f32.gmra.mrb[0].mxu0 %v1143
    %v2295 = vpop.f32.mrb[0].mxu0
    %v2296 = vadd.f32 %v1592, %v2295
    %v2297 = vpop.f32.mrb[0].mxu0
    %v2298 = vadd.f32 %v1596, %v2297
    %2299 = vmatprep.mubr.f32.mxu0 %v1148
    %2300 = vmatmul.mubr.f32.gmra.mrb[0].mxu0 %v1147
    %v2301 = vpop.f32.mrb[0].mxu0
    %v2302 = vadd.f32 %v1592, %v2301
    %v2303 = vpop.f32.mrb[0].mxu0
    %v2304 = vadd.f32 %v1596, %v2303
    %2305 = vmatprep.mubr.f32.mxu0 %v1152
    %2306 = vmatmul.mubr.f32.gmra.mrb[0].mxu0 %v1151
    %v2307 = vpop.f32.mrb[0].mxu0
    %v2308 = vadd.f32 %v1592, %v2307
    %v2309 = vpop.f32.mrb[0].mxu0
    %v2310 = vadd.f32 %v1596, %v2309
    %2311 = vmatprep.mubr.f32.mxu0 %v1156
    %2312 = vmatmul.mubr.f32.gmra.mrb[0].mxu0 %v1155
    %v2313 = vpop.f32.mrb[0].mxu0
    %v2314 = vadd.f32 %v1592, %v2313
    %v2315 = vpop.f32.mrb[0].mxu0
    %v2316 = vadd.f32 %v1596, %v2315
    %2317 = vmatprep.mubr.f32.mxu0 %v1160
    %2318 = vmatmul.mubr.f32.gmra.mrb[0].mxu0 %v1159
    %v2319 = vpop.f32.mrb[0].mxu0
    %v2320 = vadd.f32 %v1592, %v2319
    %v2321 = vpop.f32.mrb[0].mxu0
    %v2322 = vadd.f32 %v1596, %v2321
    %2323 = vmatprep.mubr.f32.mxu0 %v1164
    %2324 = vmatmul.mubr.f32.gmra.mrb[0].mxu0 %v1163
    %v2325 = vpop.f32.mrb[0].mxu0
    %v2326 = vadd.f32 %v1592, %v2325
    %v2327 = vpop.f32.mrb[0].mxu0
    %v2328 = vadd.f32 %v1596, %v2327
    %2329 = vmatprep.mubr.f32.mxu0 %v1168
    %2330 = vmatmul.mubr.f32.gmra.mrb[0].mxu0 %v1167
    %v2331 = vpop.f32.mrb[0].mxu0
    %v2332 = vadd.f32 %v1592, %v2331
    %v2333 = vpop.f32.mrb[0].mxu0
    %v2334 = vadd.f32 %v1596, %v2333
    %2335 = vmatprep.mubr.f32.mxu0 %v1172
    %2336 = vmatmul.mubr.f32.gmra.mrb[0].mxu0 %v1171
    %v2337 = vpop.f32.mrb[0].mxu0
    %v2338 = vadd.f32 %v1592, %v2337
    %v2339 = vpop.f32.mrb[0].mxu0
    %v2340 = vadd.f32 %v1596, %v2339
    %2341 = vmatprep.mubr.f32.mxu0 %v1176
    %2342 = vmatmul.mubr.f32.gmra.mrb[0].mxu0 %v1175
    %v2343 = vpop.f32.mrb[0].mxu0
    %v2344 = vadd.f32 %v1592, %v2343
    %v2345 = vpop.f32.mrb[0].mxu0
    %v2346 = vadd.f32 %v1596, %v2345
    %2347 = vmatprep.mubr.f32.mxu0 %v1180
    %2348 = vmatmul.mubr.f32.gmra.mrb[0].mxu0 %v1179
    %v2349 = vpop.f32.mrb[0].mxu0
    %v2350 = vadd.f32 %v1592, %v2349
    %v2351 = vpop.f32.mrb[0].mxu0
    %v2352 = vadd.f32 %v1596, %v2351
    %2353 = vmatprep.mubr.f32.mxu0 %v1184
    %2354 = vmatmul.mubr.f32.gmra.mrb[0].mxu0 %v1183
    %v2355 = vpop.f32.mrb[0].mxu0
    %v2356 = vadd.f32 %v1592, %v2355
    %v2357 = vpop.f32.mrb[0].mxu0
    %v2358 = vadd.f32 %v1596, %v2357
    %2359 = vmatprep.mubr.f32.mxu0 %v1188
    %2360 = vmatmul.mubr.f32.gmra.mrb[0].mxu0 %v1187
    %v2361 = vpop.f32.mrb[0].mxu0
    %v2362 = vadd.f32 %v1592, %v2361
    %v2363 = vpop.f32.mrb[0].mxu0
    %v2364 = vadd.f32 %v1596, %v2363
    %2365 = vmatprep.mubr.f32.mxu0 %v1192
    %2366 = vmatmul.mubr.f32.gmra.mrb[0].mxu0 %v1191
    %v2367 = vpop.f32.mrb[0].mxu0
    %v2368 = vadd.f32 %v1592, %v2367
    %v2369 = vpop.f32.mrb[0].mxu0
    %v2370 = vadd.f32 %v1596, %v2369
    %2371 = vdwg.mxu0
    %2372 = vmatprep.subr.mxu0 %v1454
    %2373 = vmatpush1.msra.mxu0 %v1453
    %2374 = vmatprep.subr.mxu0 %v1458
    %2375 = vmatpush1.msra.mxu0 %v1457
    %2376 = vmatprep.subr.mxu0 %v1462
    %2377 = vmatpush1.msra.mxu0 %v1461
    %2378 = vmatprep.subr.mxu0 %v1466
    %2379 = vmatpush1.msra.mxu0 %v1465
    %2380 = vmatprep.subr.mxu0 %v1470
    %2381 = vmatpush1.msra.mxu0 %v1469
    %2382 = vmatprep.subr.mxu0 %v1474
    %2383 = vmatpush1.msra.mxu0 %v1473
    %2384 = vmatprep.subr.mxu0 %v1478
    %2385 = vmatpush1.msra.mxu0 %v1477
    %2386 = vmatprep.subr.mxu0 %v1482
    %2387 = vmatpush1.msra.mxu0 %v1481
    %2388 = vmatprep.subr.mxu0 %v1486
    %2389 = vmatpush1.msra.mxu0 %v1485
    %2390 = vmatprep.subr.mxu0 %v1490
    %2391 = vmatpush1.msra.mxu0 %v1489
    %2392 = vmatprep.subr.mxu0 %v1494
    %2393 = vmatpush1.msra.mxu0 %v1493
    %2394 = vmatprep.subr.mxu0 %v1498
    %2395 = vmatpush1.msra.mxu0 %v1497
    %2396 = vmatprep.subr.mxu0 %v1502
    %2397 = vmatpush1.msra.mxu0 %v1501
    %2398 = vmatprep.subr.mxu0 %v1506
    %2399 = vmatpush1.msra.mxu0 %v1505
    %2400 = vmatprep.subr.mxu0 %v1510
    %2401 = vmatpush1.msra.mxu0 %v1509
    %2402 = vmatprep.subr.mxu0 %v1514
    %2403 = vmatpush1.msra.mxu0 %v1513
    %2404 = vmatprep.subr.mxu0 %v1518
    %2405 = vmatpush1.msra.mxu0 %v1517
    %2406 = vmatprep.subr.mxu0 %v1522
    %2407 = vmatpush1.msra.mxu0 %v1521
    %2408 = vmatprep.subr.mxu0 %v1526
    %2409 = vmatpush1.msra.mxu0 %v1525
    %2410 = vmatprep.subr.mxu0 %v1530
    %2411 = vmatpush1.msra.mxu0 %v1529
    %2412 = vmatprep.subr.mxu0 %v1534
    %2413 = vmatpush1.msra.mxu0 %v1533
    %2414 = vmatprep.subr.mxu0 %v1538
    %2415 = vmatpush1.msra.mxu0 %v1537
    %2416 = vmatprep.subr.mxu0 %v1542
    %2417 = vmatpush1.msra.mxu0 %v1541
    %2418 = vmatprep.subr.mxu0 %v1546
    %2419 = vmatpush1.msra.mxu0 %v1545
    %2420 = vmatprep.subr.mxu0 %v1550
    %2421 = vmatpush1.msra.mxu0 %v1549
    %2422 = vmatprep.subr.mxu0 %v1554
    %2423 = vmatpush1.msra.mxu0 %v1553
    %2424 = vmatprep.subr.mxu0 %v1558
    %2425 = vmatpush1.msra.mxu0 %v1557
    %2426 = vmatprep.subr.mxu0 %v1562
    %2427 = vmatpush1.msra.mxu0 %v1561
    %2428 = vmatprep.subr.mxu0 %v1566
    %2429 = vmatpush1.msra.mxu0 %v1565
    %2430 = vmatprep.subr.mxu0 %v1570
    %2431 = vmatpush1.msra.mxu0 %v1569
    %2432 = vmatprep.subr.mxu0 %v1574
    %2433 = vmatpush1.msra.mxu0 %v1573
    %2434 = vmatprep.subr.mxu0 %v1578
    %2435 = vmatpush1.msra.mxu0 %v1577
    %2436 = vmatprep.mubr.f32.mxu0 %v1070
    %2437 = vmatmul.mubr.f32.gmra.mrb[0].mxu0 %v1069
    %v2438 = vpop.f32.mrb[0].mxu0
    %v2439 = vadd.f32 %v2182, %v2438
    %v2440 = vpop.f32.mrb[0].mxu0
    %v2441 = vadd.f32 %v2184, %v2440
    %2442 = vmatprep.mubr.f32.mxu0 %v1074
    %2443 = vmatmul.mubr.f32.gmra.mrb[0].mxu0 %v1073
    %v2444 = vpop.f32.mrb[0].mxu0
    %v2445 = vadd.f32 %v2188, %v2444
    %v2446 = vpop.f32.mrb[0].mxu0
    %v2447 = vadd.f32 %v2190, %v2446
    %2448 = vmatprep.mubr.f32.mxu0 %v1078
    %2449 = vmatmul.mubr.f32.gmra.mrb[0].mxu0 %v1077
    %v2450 = vpop.f32.mrb[0].mxu0
    %v2451 = vadd.f32 %v2194, %v2450
    %v2452 = vpop.f32.mrb[0].mxu0
    %v2453 = vadd.f32 %v2196, %v2452
    %2454 = vmatprep.mubr.f32.mxu0 %v1082
    %2455 = vmatmul.mubr.f32.gmra.mrb[0].mxu0 %v1081
    %v2456 = vpop.f32.mrb[0].mxu0
    %v2457 = vadd.f32 %v2200, %v2456
    %v2458 = vpop.f32.mrb[0].mxu0
    %v2459 = vadd.f32 %v2202, %v2458
    %2460 = vmatprep.mubr.f32.mxu0 %v1086
    %2461 = vmatmul.mubr.f32.gmra.mrb[0].mxu0 %v1085
    %v2462 = vpop.f32.mrb[0].mxu0
    %v2463 = vadd.f32 %v2206, %v2462
    %v2464 = vpop.f32.mrb[0].mxu0
    %v2465 = vadd.f32 %v2208, %v2464
    %2466 = vmatprep.mubr.f32.mxu0 %v1090
    %2467 = vmatmul.mubr.f32.gmra.mrb[0].mxu0 %v1089
    %v2468 = vpop.f32.mrb[0].mxu0
    %v2469 = vadd.f32 %v2212, %v2468
    %v2470 = vpop.f32.mrb[0].mxu0
    %v2471 = vadd.f32 %v2214, %v2470
    %2472 = vmatprep.mubr.f32.mxu0 %v1094
    %2473 = vmatmul.mubr.f32.gmra.mrb[0].mxu0 %v1093
    %v2474 = vpop.f32.mrb[0].mxu0
    %v2475 = vadd.f32 %v2218, %v2474
    %v2476 = vpop.f32.mrb[0].mxu0
    %v2477 = vadd.f32 %v2220, %v2476
    %2478 = vmatprep.mubr.f32.mxu0 %v1098
    %2479 = vmatmul.mubr.f32.gmra.mrb[0].mxu0 %v1097
    %v2480 = vpop.f32.mrb[0].mxu0
    %v2481 = vadd.f32 %v2224, %v2480
    %v2482 = vpop.f32.mrb[0].mxu0
    %v2483 = vadd.f32 %v2226, %v2482
    %2484 = vmatprep.mubr.f32.mxu0 %v1102
    %2485 = vmatmul.mubr.f32.gmra.mrb[0].mxu0 %v1101
    %v2486 = vpop.f32.mrb[0].mxu0
    %v2487 = vadd.f32 %v2230, %v2486
    %v2488 = vpop.f32.mrb[0].mxu0
    %v2489 = vadd.f32 %v2232, %v2488
    %2490 = vmatprep.mubr.f32.mxu0 %v1106
    %2491 = vmatmul.mubr.f32.gmra.mrb[0].mxu0 %v1105
    %v2492 = vpop.f32.mrb[0].mxu0
    %v2493 = vadd.f32 %v2236, %v2492
    %v2494 = vpop.f32.mrb[0].mxu0
    %v2495 = vadd.f32 %v2238, %v2494
    %2496 = vmatprep.mubr.f32.mxu0 %v1110
    %2497 = vmatmul.mubr.f32.gmra.mrb[0].mxu0 %v1109
    %v2498 = vpop.f32.mrb[0].mxu0
    %v2499 = vadd.f32 %v2242, %v2498
    %v2500 = vpop.f32.mrb[0].mxu0
    %v2501 = vadd.f32 %v2244, %v2500
    %2502 = vmatprep.mubr.f32.mxu0 %v1114
    %2503 = vmatmul.mubr.f32.gmra.mrb[0].mxu0 %v1113
    %v2504 = vpop.f32.mrb[0].mxu0
    %v2505 = vadd.f32 %v2248, %v2504
    %v2506 = vpop.f32.mrb[0].mxu0
    %v2507 = vadd.f32 %v2250, %v2506
    %2508 = vmatprep.mubr.f32.mxu0 %v1118
    %2509 = vmatmul.mubr.f32.gmra.mrb[0].mxu0 %v1117
    %v2510 = vpop.f32.mrb[0].mxu0
    %v2511 = vadd.f32 %v2254, %v2510
    %v2512 = vpop.f32.mrb[0].mxu0
    %v2513 = vadd.f32 %v2256, %v2512
    %2514 = vmatprep.mubr.f32.mxu0 %v1122
    %2515 = vmatmul.mubr.f32.gmra.mrb[0].mxu0 %v1121
    %v2516 = vpop.f32.mrb[0].mxu0
    %v2517 = vadd.f32 %v2260, %v2516
    %v2518 = vpop.f32.mrb[0].mxu0
    %v2519 = vadd.f32 %v2262, %v2518
    %2520 = vmatprep.mubr.f32.mxu0 %v1126
    %2521 = vmatmul.mubr.f32.gmra.mrb[0].mxu0 %v1125
    %v2522 = vpop.f32.mrb[0].mxu0
    %v2523 = vadd.f32 %v2266, %v2522
    %v2524 = vpop.f32.mrb[0].mxu0
    %v2525 = vadd.f32 %v2268, %v2524
    %2526 = vmatprep.mubr.f32.mxu0 %v1130
    %2527 = vmatmul.mubr.f32.gmra.mrb[0].mxu0 %v1129
    %v2528 = vpop.f32.mrb[0].mxu0
    %v2529 = vadd.f32 %v2272, %v2528
    %v2530 = vpop.f32.mrb[0].mxu0
    %v2531 = vadd.f32 %v2274, %v2530
    %2532 = vmatprep.mubr.f32.mxu0 %v1134
    %2533 = vmatmul.mubr.f32.gmra.mrb[0].mxu0 %v1133
    %v2534 = vpop.f32.mrb[0].mxu0
    %v2535 = vadd.f32 %v2278, %v2534
    %v2536 = vpop.f32.mrb[0].mxu0
    %v2537 = vadd.f32 %v2280, %v2536
    %2538 = vmatprep.mubr.f32.mxu0 %v1138
    %2539 = vmatmul.mubr.f32.gmra.mrb[0].mxu0 %v1137
    %v2540 = vpop.f32.mrb[0].mxu0
    %v2541 = vadd.f32 %v2284, %v2540
    %v2542 = vpop.f32.mrb[0].mxu0
    %v2543 = vadd.f32 %v2286, %v2542
    %2544 = vmatprep.mubr.f32.mxu0 %v1142
    %2545 = vmatmul.mubr.f32.gmra.mrb[0].mxu0 %v1141
    %v2546 = vpop.f32.mrb[0].mxu0
    %v2547 = vadd.f32 %v2290, %v2546
    %v2548 = vpop.f32.mrb[0].mxu0
    %v2549 = vadd.f32 %v2292, %v2548
    %2550 = vmatprep.mubr.f32.mxu0 %v1146
    %2551 = vmatmul.mubr.f32.gmra.mrb[0].mxu0 %v1145
    %v2552 = vpop.f32.mrb[0].mxu0
    %v2553 = vadd.f32 %v2296, %v2552
    %v2554 = vpop.f32.mrb[0].mxu0
    %v2555 = vadd.f32 %v2298, %v2554
    %2556 = vmatprep.mubr.f32.mxu0 %v1150
    %2557 = vmatmul.mubr.f32.gmra.mrb[0].mxu0 %v1149
    %v2558 = vpop.f32.mrb[0].mxu0
    %v2559 = vadd.f32 %v2302, %v2558
    %v2560 = vpop.f32.mrb[0].mxu0
    %v2561 = vadd.f32 %v2304, %v2560
    %2562 = vmatprep.mubr.f32.mxu0 %v1154
    %2563 = vmatmul.mubr.f32.gmra.mrb[0].mxu0 %v1153
    %v2564 = vpop.f32.mrb[0].mxu0
    %v2565 = vadd.f32 %v2308, %v2564
    %v2566 = vpop.f32.mrb[0].mxu0
    %v2567 = vadd.f32 %v2310, %v2566
    %2568 = vmatprep.mubr.f32.mxu0 %v1158
    %2569 = vmatmul.mubr.f32.gmra.mrb[0].mxu0 %v1157
    %v2570 = vpop.f32.mrb[0].mxu0
    %v2571 = vadd.f32 %v2314, %v2570
    %v2572 = vpop.f32.mrb[0].mxu0
    %v2573 = vadd.f32 %v2316, %v2572
    %2574 = vmatprep.mubr.f32.mxu0 %v1162
    %2575 = vmatmul.mubr.f32.gmra.mrb[0].mxu0 %v1161
    %v2576 = vpop.f32.mrb[0].mxu0
    %v2577 = vadd.f32 %v2320, %v2576
    %v2578 = vpop.f32.mrb[0].mxu0
    %v2579 = vadd.f32 %v2322, %v2578
    %2580 = vmatprep.mubr.f32.mxu0 %v1166
    %2581 = vmatmul.mubr.f32.gmra.mrb[0].mxu0 %v1165
    %v2582 = vpop.f32.mrb[0].mxu0
    %v2583 = vadd.f32 %v2326, %v2582
    %v2584 = vpop.f32.mrb[0].mxu0
    %v2585 = vadd.f32 %v2328, %v2584
    %2586 = vmatprep.mubr.f32.mxu0 %v1170
    %2587 = vmatmul.mubr.f32.gmra.mrb[0].mxu0 %v1169
    %v2588 = vpop.f32.mrb[0].mxu0
    %v2589 = vadd.f32 %v2332, %v2588
    %v2590 = vpop.f32.mrb[0].mxu0
    %v2591 = vadd.f32 %v2334, %v2590
    %2592 = vmatprep.mubr.f32.mxu0 %v1174
    %2593 = vmatmul.mubr.f32.gmra.mrb[0].mxu0 %v1173
    %v2594 = vpop.f32.mrb[0].mxu0
    %v2595 = vadd.f32 %v2338, %v2594
    %v2596 = vpop.f32.mrb[0].mxu0
    %v2597 = vadd.f32 %v2340, %v2596
    %2598 = vmatprep.mubr.f32.mxu0 %v1178
    %2599 = vmatmul.mubr.f32.gmra.mrb[0].mxu0 %v1177
    %v2600 = vpop.f32.mrb[0].mxu0
    %v2601 = vadd.f32 %v2344, %v2600
    %v2602 = vpop.f32.mrb[0].mxu0
    %v2603 = vadd.f32 %v2346, %v2602
    %2604 = vmatprep.mubr.f32.mxu0 %v1182
    %2605 = vmatmul.mubr.f32.gmra.mrb[0].mxu0 %v1181
    %v2606 = vpop.f32.mrb[0].mxu0
    %v2607 = vadd.f32 %v2350, %v2606
    %v2608 = vpop.f32.mrb[0].mxu0
    %v2609 = vadd.f32 %v2352, %v2608
    %2610 = vmatprep.mubr.f32.mxu0 %v1186
    %2611 = vmatmul.mubr.f32.gmra.mrb[0].mxu0 %v1185
    %v2612 = vpop.f32.mrb[0].mxu0
    %v2613 = vadd.f32 %v2356, %v2612
    %v2614 = vpop.f32.mrb[0].mxu0
    %v2615 = vadd.f32 %v2358, %v2614
    %2616 = vmatprep.mubr.f32.mxu0 %v1190
    %2617 = vmatmul.mubr.f32.gmra.mrb[0].mxu0 %v1189
    %v2618 = vpop.f32.mrb[0].mxu0
    %v2619 = vadd.f32 %v2362, %v2618
    %v2620 = vpop.f32.mrb[0].mxu0
    %v2621 = vadd.f32 %v2364, %v2620
    %2622 = vmatprep.mubr.f32.mxu0 %v1194
    %2623 = vmatmul.mubr.f32.gmra.mrb[0].mxu0 %v1193
    %v2624 = vpop.f32.mrb[0].mxu0
    %v2625 = vadd.f32 %v2368, %v2624
    %v2626 = vpop.f32.mrb[0].mxu0
    %v2627 = vadd.f32 %v2370, %v2626
    %2628 = vdwg.mxu0
    %v2629 = vmax.f32 %v1925, 0.0
    %v2630 = vmax.f32 %v1927, 0.0
    %v2631 = vmax.f32 %v2439, 0.0
    %v2632 = vmax.f32 %v2441, 0.0
    %v2633 = vmax.f32 %v1931, 0.0
    %v2634 = vmax.f32 %v1933, 0.0
    %v2635 = vmax.f32 %v2445, 0.0
    %v2636 = vmax.f32 %v2447, 0.0
    %v2637 = vmax.f32 %v1937, 0.0
    %v2638 = vmax.f32 %v1939, 0.0
    %v2639 = vmax.f32 %v2451, 0.0
    %v2640 = vmax.f32 %v2453, 0.0
    %v2641 = vmax.f32 %v1943, 0.0
    %v2642 = vmax.f32 %v1945, 0.0
    %v2643 = vmax.f32 %v2457, 0.0
    %v2644 = vmax.f32 %v2459, 0.0
    %v2645 = vmax.f32 %v1949, 0.0
    %v2646 = vmax.f32 %v1951, 0.0
    %v2647 = vmax.f32 %v2463, 0.0
    %v2648 = vmax.f32 %v2465, 0.0
    %v2649 = vmax.f32 %v1955, 0.0
    %v2650 = vmax.f32 %v1957, 0.0
    %v2651 = vmax.f32 %v2469, 0.0
    %v2652 = vmax.f32 %v2471, 0.0
    %v2653 = vmax.f32 %v1961, 0.0
    %v2654 = vmax.f32 %v1963, 0.0
    %v2655 = vmax.f32 %v2475, 0.0
    %v2656 = vmax.f32 %v2477, 0.0
    %v2657 = vmax.f32 %v1967, 0.0
    %v2658 = vmax.f32 %v1969, 0.0
    %v2659 = vmax.f32 %v2481, 0.0
    %v2660 = vmax.f32 %v2483, 0.0
    %v2661 = vmax.f32 %v1973, 0.0
    %v2662 = vmax.f32 %v1975, 0.0
    %v2663 = vmax.f32 %v2487, 0.0
    %v2664 = vmax.f32 %v2489, 0.0
    %v2665 = vmax.f32 %v1979, 0.0
    %v2666 = vmax.f32 %v1981, 0.0
    %v2667 = vmax.f32 %v2493, 0.0
    %v2668 = vmax.f32 %v2495, 0.0
    %v2669 = vmax.f32 %v1985, 0.0
    %v2670 = vmax.f32 %v1987, 0.0
    %v2671 = vmax.f32 %v2499, 0.0
    %v2672 = vmax.f32 %v2501, 0.0
    %v2673 = vmax.f32 %v1991, 0.0
    %v2674 = vmax.f32 %v1993, 0.0
    %v2675 = vmax.f32 %v2505, 0.0
    %v2676 = vmax.f32 %v2507, 0.0
    %v2677 = vmax.f32 %v1997, 0.0
    %v2678 = vmax.f32 %v1999, 0.0
    %v2679 = vmax.f32 %v2511, 0.0
    %v2680 = vmax.f32 %v2513, 0.0
    %v2681 = vmax.f32 %v2003, 0.0
    %v2682 = vmax.f32 %v2005, 0.0
    %v2683 = vmax.f32 %v2517, 0.0
    %v2684 = vmax.f32 %v2519, 0.0
    %v2685 = vmax.f32 %v2009, 0.0
    %v2686 = vmax.f32 %v2011, 0.0
    %v2687 = vmax.f32 %v2523, 0.0
    %v2688 = vmax.f32 %v2525, 0.0
    %v2689 = vmax.f32 %v2015, 0.0
    %v2690 = vmax.f32 %v2017, 0.0
    %v2691 = vmax.f32 %v2529, 0.0
    %v2692 = vmax.f32 %v2531, 0.0
    %v2693 = vmax.f32 %v2021, 0.0
    %v2694 = vmax.f32 %v2023, 0.0
    %v2695 = vmax.f32 %v2535, 0.0
    %v2696 = vmax.f32 %v2537, 0.0
    %v2697 = vmax.f32 %v2027, 0.0
    %v2698 = vmax.f32 %v2029, 0.0
    %v2699 = vmax.f32 %v2541, 0.0
    %v2700 = vmax.f32 %v2543, 0.0
    %v2701 = vmax.f32 %v2033, 0.0
    %v2702 = vmax.f32 %v2035, 0.0
    %v2703 = vmax.f32 %v2547, 0.0
    %v2704 = vmax.f32 %v2549, 0.0
    %v2705 = vmax.f32 %v2039, 0.0
    %v2706 = vmax.f32 %v2041, 0.0
    %v2707 = vmax.f32 %v2553, 0.0
    %v2708 = vmax.f32 %v2555, 0.0
    %v2709 = vmax.f32 %v2045, 0.0
    %v2710 = vmax.f32 %v2047, 0.0
    %v2711 = vmax.f32 %v2559, 0.0
    %v2712 = vmax.f32 %v2561, 0.0
    %v2713 = vmax.f32 %v2051, 0.0
    %v2714 = vmax.f32 %v2053, 0.0
    %v2715 = vmax.f32 %v2565, 0.0
    %v2716 = vmax.f32 %v2567, 0.0
    %v2717 = vmax.f32 %v2057, 0.0
    %v2718 = vmax.f32 %v2059, 0.0
    %v2719 = vmax.f32 %v2571, 0.0
    %v2720 = vmax.f32 %v2573, 0.0
    %v2721 = vmax.f32 %v2063, 0.0
    %v2722 = vmax.f32 %v2065, 0.0
    %v2723 = vmax.f32 %v2577, 0.0
    %v2724 = vmax.f32 %v2579, 0.0
    %v2725 = vmax.f32 %v2069, 0.0
    %v2726 = vmax.f32 %v2071, 0.0
    %v2727 = vmax.f32 %v2583, 0.0
    %v2728 = vmax.f32 %v2585, 0.0
    %v2729 = vmax.f32 %v2075, 0.0
    %v2730 = vmax.f32 %v2077, 0.0
    %v2731 = vmax.f32 %v2589, 0.0
    %v2732 = vmax.f32 %v2591, 0.0
    %v2733 = vmax.f32 %v2081, 0.0
    %v2734 = vmax.f32 %v2083, 0.0
    %v2735 = vmax.f32 %v2595, 0.0
    %v2736 = vmax.f32 %v2597, 0.0
    %v2737 = vmax.f32 %v2087, 0.0
    %v2738 = vmax.f32 %v2089, 0.0
    %v2739 = vmax.f32 %v2601, 0.0
    %v2740 = vmax.f32 %v2603, 0.0
    %v2741 = vmax.f32 %v2093, 0.0
    %v2742 = vmax.f32 %v2095, 0.0
    %v2743 = vmax.f32 %v2607, 0.0
    %v2744 = vmax.f32 %v2609, 0.0
    %v2745 = vmax.f32 %v2099, 0.0
    %v2746 = vmax.f32 %v2101, 0.0
    %v2747 = vmax.f32 %v2613, 0.0
    %v2748 = vmax.f32 %v2615, 0.0
    %v2749 = vmax.f32 %v2105, 0.0
    %v2750 = vmax.f32 %v2107, 0.0
    %v2751 = vmax.f32 %v2619, 0.0
    %v2752 = vmax.f32 %v2621, 0.0
    %v2753 = vmax.f32 %v2111, 0.0
    %v2754 = vmax.f32 %v2113, 0.0
    %v2755 = vmax.f32 %v2625, 0.0
    %v2756 = vmax.f32 %v2627, 0.0
    %v2757 = vld [vmem:[%s7] sm:$0xf]
    %v2759 = vlaneseq
    %v2760 = vshrl.u32 %v2759, 7
    %v2761 = vsub.s32 0, %v2760
    %v2762 = vrot.slane %v2757, %v2761
    %v2763 = vlaneseq
    %v2764 = vshrl.u32 %v2763, 7
    %v2765 = vsub.s32 1, %v2764
    %v2766 = vrot.slane %v2757, %v2765
    %v2767 = vlaneseq
    %v2768 = vshrl.u32 %v2767, 7
    %v2769 = vsub.s32 2, %v2768
    %v2770 = vrot.slane %v2757, %v2769
    %v2771 = vlaneseq
    %v2772 = vshrl.u32 %v2771, 7
    %v2773 = vsub.s32 3, %v2772
    %v2774 = vrot.slane %v2757, %v2773
    %v2779 = vmul.f32 %v2629, %v2762
    %v2780 = vmul.f32 %v2630, %v2766
    %v2781 = vmul.f32 %v2631, %v2770
    %v2782 = vmul.f32 %v2632, %v2774
    %v2783 = vmul.f32 %v2633, %v2762
    %v2784 = vmul.f32 %v2634, %v2766
    %v2785 = vmul.f32 %v2635, %v2770
    %v2786 = vmul.f32 %v2636, %v2774
    %v2787 = vmul.f32 %v2637, %v2762
    %v2788 = vmul.f32 %v2638, %v2766
    %v2789 = vmul.f32 %v2639, %v2770
    %v2790 = vmul.f32 %v2640, %v2774
    %v2791 = vmul.f32 %v2641, %v2762
    %v2792 = vmul.f32 %v2642, %v2766
    %v2793 = vmul.f32 %v2643, %v2770
    %v2794 = vmul.f32 %v2644, %v2774
    %v2795 = vmul.f32 %v2645, %v2762
    %v2796 = vmul.f32 %v2646, %v2766
    %v2797 = vmul.f32 %v2647, %v2770
    %v2798 = vmul.f32 %v2648, %v2774
    %v2799 = vmul.f32 %v2649, %v2762
    %v2800 = vmul.f32 %v2650, %v2766
    %v2801 = vmul.f32 %v2651, %v2770
    %v2802 = vmul.f32 %v2652, %v2774
    %v2803 = vmul.f32 %v2653, %v2762
    %v2804 = vmul.f32 %v2654, %v2766
    %v2805 = vmul.f32 %v2655, %v2770
    %v2806 = vmul.f32 %v2656, %v2774
    %v2807 = vmul.f32 %v2657, %v2762
    %v2808 = vmul.f32 %v2658, %v2766
    %v2809 = vmul.f32 %v2659, %v2770
    %v2810 = vmul.f32 %v2660, %v2774
    %v2811 = vmul.f32 %v2661, %v2762
    %v2812 = vmul.f32 %v2662, %v2766
    %v2813 = vmul.f32 %v2663, %v2770
    %v2814 = vmul.f32 %v2664, %v2774
    %v2815 = vmul.f32 %v2665, %v2762
    %v2816 = vmul.f32 %v2666, %v2766
    %v2817 = vmul.f32 %v2667, %v2770
    %v2818 = vmul.f32 %v2668, %v2774
    %v2819 = vmul.f32 %v2669, %v2762
    %v2820 = vmul.f32 %v2670, %v2766
    %v2821 = vmul.f32 %v2671, %v2770
    %v2822 = vmul.f32 %v2672, %v2774
    %v2823 = vmul.f32 %v2673, %v2762
    %v2824 = vmul.f32 %v2674, %v2766
    %v2825 = vmul.f32 %v2675, %v2770
    %v2826 = vmul.f32 %v2676, %v2774
    %v2827 = vmul.f32 %v2677, %v2762
    %v2828 = vmul.f32 %v2678, %v2766
    %v2829 = vmul.f32 %v2679, %v2770
    %v2830 = vmul.f32 %v2680, %v2774
    %v2831 = vmul.f32 %v2681, %v2762
    %v2832 = vmul.f32 %v2682, %v2766
    %v2833 = vmul.f32 %v2683, %v2770
    %v2834 = vmul.f32 %v2684, %v2774
    %v2835 = vmul.f32 %v2685, %v2762
    %v2836 = vmul.f32 %v2686, %v2766
    %v2837 = vmul.f32 %v2687, %v2770
    %v2838 = vmul.f32 %v2688, %v2774
    %v2839 = vmul.f32 %v2689, %v2762
    %v2840 = vmul.f32 %v2690, %v2766
    %v2841 = vmul.f32 %v2691, %v2770
    %v2842 = vmul.f32 %v2692, %v2774
    %v2843 = vmul.f32 %v2693, %v2762
    %v2844 = vmul.f32 %v2694, %v2766
    %v2845 = vmul.f32 %v2695, %v2770
    %v2846 = vmul.f32 %v2696, %v2774
    %v2847 = vmul.f32 %v2697, %v2762
    %v2848 = vmul.f32 %v2698, %v2766
    %v2849 = vmul.f32 %v2699, %v2770
    %v2850 = vmul.f32 %v2700, %v2774
    %v2851 = vmul.f32 %v2701, %v2762
    %v2852 = vmul.f32 %v2702, %v2766
    %v2853 = vmul.f32 %v2703, %v2770
    %v2854 = vmul.f32 %v2704, %v2774
    %v2855 = vmul.f32 %v2705, %v2762
    %v2856 = vmul.f32 %v2706, %v2766
    %v2857 = vmul.f32 %v2707, %v2770
    %v2858 = vmul.f32 %v2708, %v2774
    %v2859 = vmul.f32 %v2709, %v2762
    %v2860 = vmul.f32 %v2710, %v2766
    %v2861 = vmul.f32 %v2711, %v2770
    %v2862 = vmul.f32 %v2712, %v2774
    %v2863 = vmul.f32 %v2713, %v2762
    %v2864 = vmul.f32 %v2714, %v2766
    %v2865 = vmul.f32 %v2715, %v2770
    %v2866 = vmul.f32 %v2716, %v2774
    %v2867 = vmul.f32 %v2717, %v2762
    %v2868 = vmul.f32 %v2718, %v2766
    %v2869 = vmul.f32 %v2719, %v2770
    %v2870 = vmul.f32 %v2720, %v2774
    %v2871 = vmul.f32 %v2721, %v2762
    %v2872 = vmul.f32 %v2722, %v2766
    %v2873 = vmul.f32 %v2723, %v2770
    %v2874 = vmul.f32 %v2724, %v2774
    %v2875 = vmul.f32 %v2725, %v2762
    %v2876 = vmul.f32 %v2726, %v2766
    %v2877 = vmul.f32 %v2727, %v2770
    %v2878 = vmul.f32 %v2728, %v2774
    %v2879 = vmul.f32 %v2729, %v2762
    %v2880 = vmul.f32 %v2730, %v2766
    %v2881 = vmul.f32 %v2731, %v2770
    %v2882 = vmul.f32 %v2732, %v2774
    %v2883 = vmul.f32 %v2733, %v2762
    %v2884 = vmul.f32 %v2734, %v2766
    %v2885 = vmul.f32 %v2735, %v2770
    %v2886 = vmul.f32 %v2736, %v2774
    %v2887 = vmul.f32 %v2737, %v2762
    %v2888 = vmul.f32 %v2738, %v2766
    %v2889 = vmul.f32 %v2739, %v2770
    %v2890 = vmul.f32 %v2740, %v2774
    %v2891 = vmul.f32 %v2741, %v2762
    %v2892 = vmul.f32 %v2742, %v2766
    %v2893 = vmul.f32 %v2743, %v2770
    %v2894 = vmul.f32 %v2744, %v2774
    %v2895 = vmul.f32 %v2745, %v2762
    %v2896 = vmul.f32 %v2746, %v2766
    %v2897 = vmul.f32 %v2747, %v2770
    %v2898 = vmul.f32 %v2748, %v2774
    %v2899 = vmul.f32 %v2749, %v2762
    %v2900 = vmul.f32 %v2750, %v2766
    %v2901 = vmul.f32 %v2751, %v2770
    %v2902 = vmul.f32 %v2752, %v2774
    %v2903 = vmul.f32 %v2753, %v2762
    %v2904 = vmul.f32 %v2754, %v2766
    %v2905 = vmul.f32 %v2755, %v2770
    %v2906 = vmul.f32 %v2756, %v2774
    %v2907 = vld [vmem:[%s8] sm:$0xf]
    %v2909 = vlaneseq
    %v2910 = vshrl.u32 %v2909, 7
    %v2911 = vsub.s32 0, %v2910
    %v2912 = vrot.slane %v2907, %v2911
    %v2913 = vlaneseq
    %v2914 = vshrl.u32 %v2913, 7
    %v2915 = vsub.s32 1, %v2914
    %v2916 = vrot.slane %v2907, %v2915
    %v2917 = vlaneseq
    %v2918 = vshrl.u32 %v2917, 7
    %v2919 = vsub.s32 2, %v2918
    %v2920 = vrot.slane %v2907, %v2919
    %v2921 = vlaneseq
    %v2922 = vshrl.u32 %v2921, 7
    %v2923 = vsub.s32 3, %v2922
    %v2924 = vrot.slane %v2907, %v2923
    %v2929 = vadd.f32 %v2779, %v2912
    %v2930 = vadd.f32 %v2780, %v2916
    %v2931 = vadd.f32 %v2781, %v2920
    %v2932 = vadd.f32 %v2782, %v2924
    %v2933 = vadd.f32 %v2783, %v2912
    %v2934 = vadd.f32 %v2784, %v2916
    %v2935 = vadd.f32 %v2785, %v2920
    %v2936 = vadd.f32 %v2786, %v2924
    %v2937 = vadd.f32 %v2787, %v2912
    %v2938 = vadd.f32 %v2788, %v2916
    %v2939 = vadd.f32 %v2789, %v2920
    %v2940 = vadd.f32 %v2790, %v2924
    %v2941 = vadd.f32 %v2791, %v2912
    %v2942 = vadd.f32 %v2792, %v2916
    %v2943 = vadd.f32 %v2793, %v2920
    %v2944 = vadd.f32 %v2794, %v2924
    %v2945 = vadd.f32 %v2795, %v2912
    %v2946 = vadd.f32 %v2796, %v2916
    %v2947 = vadd.f32 %v2797, %v2920
    %v2948 = vadd.f32 %v2798, %v2924
    %v2949 = vadd.f32 %v2799, %v2912
    %v2950 = vadd.f32 %v2800, %v2916
    %v2951 = vadd.f32 %v2801, %v2920
    %v2952 = vadd.f32 %v2802, %v2924
    %v2953 = vadd.f32 %v2803, %v2912
    %v2954 = vadd.f32 %v2804, %v2916
    %v2955 = vadd.f32 %v2805, %v2920
    %v2956 = vadd.f32 %v2806, %v2924
    %v2957 = vadd.f32 %v2807, %v2912
    %v2958 = vadd.f32 %v2808, %v2916
    %v2959 = vadd.f32 %v2809, %v2920
    %v2960 = vadd.f32 %v2810, %v2924
    %v2961 = vadd.f32 %v2811, %v2912
    %v2962 = vadd.f32 %v2812, %v2916
    %v2963 = vadd.f32 %v2813, %v2920
    %v2964 = vadd.f32 %v2814, %v2924
    %v2965 = vadd.f32 %v2815, %v2912
    %v2966 = vadd.f32 %v2816, %v2916
    %v2967 = vadd.f32 %v2817, %v2920
    %v2968 = vadd.f32 %v2818, %v2924
    %v2969 = vadd.f32 %v2819, %v2912
    %v2970 = vadd.f32 %v2820, %v2916
    %v2971 = vadd.f32 %v2821, %v2920
    %v2972 = vadd.f32 %v2822, %v2924
    %v2973 = vadd.f32 %v2823, %v2912
    %v2974 = vadd.f32 %v2824, %v2916
    %v2975 = vadd.f32 %v2825, %v2920
    %v2976 = vadd.f32 %v2826, %v2924
    %v2977 = vadd.f32 %v2827, %v2912
    %v2978 = vadd.f32 %v2828, %v2916
    %v2979 = vadd.f32 %v2829, %v2920
    %v2980 = vadd.f32 %v2830, %v2924
    %v2981 = vadd.f32 %v2831, %v2912
    %v2982 = vadd.f32 %v2832, %v2916
    %v2983 = vadd.f32 %v2833, %v2920
    %v2984 = vadd.f32 %v2834, %v2924
    %v2985 = vadd.f32 %v2835, %v2912
    %v2986 = vadd.f32 %v2836, %v2916
    %v2987 = vadd.f32 %v2837, %v2920
    %v2988 = vadd.f32 %v2838, %v2924
    %v2989 = vadd.f32 %v2839, %v2912
    %v2990 = vadd.f32 %v2840, %v2916
    %v2991 = vadd.f32 %v2841, %v2920
    %v2992 = vadd.f32 %v2842, %v2924
    %v2993 = vadd.f32 %v2843, %v2912
    %v2994 = vadd.f32 %v2844, %v2916
    %v2995 = vadd.f32 %v2845, %v2920
    %v2996 = vadd.f32 %v2846, %v2924
    %v2997 = vadd.f32 %v2847, %v2912
    %v2998 = vadd.f32 %v2848, %v2916
    %v2999 = vadd.f32 %v2849, %v2920
    %v3000 = vadd.f32 %v2850, %v2924
    %v3001 = vadd.f32 %v2851, %v2912
    %v3002 = vadd.f32 %v2852, %v2916
    %v3003 = vadd.f32 %v2853, %v2920
    %v3004 = vadd.f32 %v2854, %v2924
    %v3005 = vadd.f32 %v2855, %v2912
    %v3006 = vadd.f32 %v2856, %v2916
    %v3007 = vadd.f32 %v2857, %v2920
    %v3008 = vadd.f32 %v2858, %v2924
    %v3009 = vadd.f32 %v2859, %v2912
    %v3010 = vadd.f32 %v2860, %v2916
    %v3011 = vadd.f32 %v2861, %v2920
    %v3012 = vadd.f32 %v2862, %v2924
    %v3013 = vadd.f32 %v2863, %v2912
    %v3014 = vadd.f32 %v2864, %v2916
    %v3015 = vadd.f32 %v2865, %v2920
    %v3016 = vadd.f32 %v2866, %v2924
    %v3017 = vadd.f32 %v2867, %v2912
    %v3018 = vadd.f32 %v2868, %v2916
    %v3019 = vadd.f32 %v2869, %v2920
    %v3020 = vadd.f32 %v2870, %v2924
    %v3021 = vadd.f32 %v2871, %v2912
    %v3022 = vadd.f32 %v2872, %v2916
    %v3023 = vadd.f32 %v2873, %v2920
    %v3024 = vadd.f32 %v2874, %v2924
    %v3025 = vadd.f32 %v2875, %v2912
    %v3026 = vadd.f32 %v2876, %v2916
    %v3027 = vadd.f32 %v2877, %v2920
    %v3028 = vadd.f32 %v2878, %v2924
    %v3029 = vadd.f32 %v2879, %v2912
    %v3030 = vadd.f32 %v2880, %v2916
    %v3031 = vadd.f32 %v2881, %v2920
    %v3032 = vadd.f32 %v2882, %v2924
    %v3033 = vadd.f32 %v2883, %v2912
    %v3034 = vadd.f32 %v2884, %v2916
    %v3035 = vadd.f32 %v2885, %v2920
    %v3036 = vadd.f32 %v2886, %v2924
    %v3037 = vadd.f32 %v2887, %v2912
    %v3038 = vadd.f32 %v2888, %v2916
    %v3039 = vadd.f32 %v2889, %v2920
    %v3040 = vadd.f32 %v2890, %v2924
    %v3041 = vadd.f32 %v2891, %v2912
    %v3042 = vadd.f32 %v2892, %v2916
    %v3043 = vadd.f32 %v2893, %v2920
    %v3044 = vadd.f32 %v2894, %v2924
    %v3045 = vadd.f32 %v2895, %v2912
    %v3046 = vadd.f32 %v2896, %v2916
    %v3047 = vadd.f32 %v2897, %v2920
    %v3048 = vadd.f32 %v2898, %v2924
    %v3049 = vadd.f32 %v2899, %v2912
    %v3050 = vadd.f32 %v2900, %v2916
    %v3051 = vadd.f32 %v2901, %v2920
    %v3052 = vadd.f32 %v2902, %v2924
    %v3053 = vadd.f32 %v2903, %v2912
    %v3054 = vadd.f32 %v2904, %v2916
    %v3055 = vadd.f32 %v2905, %v2920
    %v3056 = vadd.f32 %v2906, %v2924
    %v3057 = vld [vmem:[#allocation4] sm:$0xff]
    %v3058 = vld [vmem:[#allocation4 + $0x8] sm:$0xff]
    %v3059 = vld [vmem:[#allocation4 + $0x10] sm:$0xff]
    %v3060 = vld [vmem:[#allocation4 + $0x18] sm:$0xff]
    %v3061 = vld [vmem:[#allocation4 + $0x20] sm:$0xff]
    %v3062 = vld [vmem:[#allocation4 + $0x28] sm:$0xff]
    %v3063 = vld [vmem:[#allocation4 + $0x30] sm:$0xff]
    %v3064 = vld [vmem:[#allocation4 + $0x38] sm:$0xff]
    %v3065 = vld [vmem:[#allocation4 + $0x40] sm:$0xff]
    %v3066 = vld [vmem:[#allocation4 + $0x48] sm:$0xff]
    %v3067 = vld [vmem:[#allocation4 + $0x50] sm:$0xff]
    %v3068 = vld [vmem:[#allocation4 + $0x58] sm:$0xff]
    %v3069 = vld [vmem:[#allocation4 + $0x60] sm:$0xff]
    %v3070 = vld [vmem:[#allocation4 + $0x68] sm:$0xff]
    %v3071 = vld [vmem:[#allocation4 + $0x70] sm:$0xff]
    %v3072 = vld [vmem:[#allocation4 + $0x78] sm:$0xff]
    %v3073 = vld [vmem:[#allocation4 + $0x80] sm:$0xff]
    %v3074 = vld [vmem:[#allocation4 + $0x88] sm:$0xff]
    %v3075 = vld [vmem:[#allocation4 + $0x90] sm:$0xff]
    %v3076 = vld [vmem:[#allocation4 + $0x98] sm:$0xff]
    %v3077 = vld [vmem:[#allocation4 + $0xa0] sm:$0xff]
    %v3078 = vld [vmem:[#allocation4 + $0xa8] sm:$0xff]
    %v3079 = vld [vmem:[#allocation4 + $0xb0] sm:$0xff]
    %v3080 = vld [vmem:[#allocation4 + $0xb8] sm:$0xff]
    %v3081 = vld [vmem:[#allocation4 + $0xc0] sm:$0xff]
    %v3082 = vld [vmem:[#allocation4 + $0xc8] sm:$0xff]
    %v3083 = vld [vmem:[#allocation4 + $0xd0] sm:$0xff]
    %v3084 = vld [vmem:[#allocation4 + $0xd8] sm:$0xff]
    %v3085 = vld [vmem:[#allocation4 + $0xe0] sm:$0xff]
    %v3086 = vld [vmem:[#allocation4 + $0xe8] sm:$0xff]
    %v3087 = vld [vmem:[#allocation4 + $0xf0] sm:$0xff]
    %v3088 = vld [vmem:[#allocation4 + $0xf8] sm:$0xff]
    %v3089 = vld [vmem:[#allocation4 + $0x100] sm:$0xff]
    %v3090 = vld [vmem:[#allocation4 + $0x108] sm:$0xff]
    %v3091 = vld [vmem:[#allocation4 + $0x110] sm:$0xff]
    %v3092 = vld [vmem:[#allocation4 + $0x118] sm:$0xff]
    %v3093 = vld [vmem:[#allocation4 + $0x120] sm:$0xff]
    %v3094 = vld [vmem:[#allocation4 + $0x128] sm:$0xff]
    %v3095 = vld [vmem:[#allocation4 + $0x130] sm:$0xff]
    %v3096 = vld [vmem:[#allocation4 + $0x138] sm:$0xff]
    %v3097 = vld [vmem:[#allocation4 + $0x140] sm:$0xff]
    %v3098 = vld [vmem:[#allocation4 + $0x148] sm:$0xff]
    %v3099 = vld [vmem:[#allocation4 + $0x150] sm:$0xff]
    %v3100 = vld [vmem:[#allocation4 + $0x158] sm:$0xff]
    %v3101 = vld [vmem:[#allocation4 + $0x160] sm:$0xff]
    %v3102 = vld [vmem:[#allocation4 + $0x168] sm:$0xff]
    %v3103 = vld [vmem:[#allocation4 + $0x170] sm:$0xff]
    %v3104 = vld [vmem:[#allocation4 + $0x178] sm:$0xff]
    %v3105 = vld [vmem:[#allocation4 + $0x180] sm:$0xff]
    %v3106 = vld [vmem:[#allocation4 + $0x188] sm:$0xff]
    %v3107 = vld [vmem:[#allocation4 + $0x190] sm:$0xff]
    %v3108 = vld [vmem:[#allocation4 + $0x198] sm:$0xff]
    %v3109 = vld [vmem:[#allocation4 + $0x1a0] sm:$0xff]
    %v3110 = vld [vmem:[#allocation4 + $0x1a8] sm:$0xff]
    %v3111 = vld [vmem:[#allocation4 + $0x1b0] sm:$0xff]
    %v3112 = vld [vmem:[#allocation4 + $0x1b8] sm:$0xff]
    %v3113 = vld [vmem:[#allocation4 + $0x1c0] sm:$0xff]
    %v3114 = vld [vmem:[#allocation4 + $0x1c8] sm:$0xff]
    %v3115 = vld [vmem:[#allocation4 + $0x1d0] sm:$0xff]
    %v3116 = vld [vmem:[#allocation4 + $0x1d8] sm:$0xff]
    %v3117 = vld [vmem:[#allocation4 + $0x1e0] sm:$0xff]
    %v3118 = vld [vmem:[#allocation4 + $0x1e8] sm:$0xff]
    %v3119 = vld [vmem:[#allocation4 + $0x1f0] sm:$0xff]
    %v3120 = vld [vmem:[#allocation4 + $0x1f8] sm:$0xff]
    %v3121 = vld [vmem:[#allocation4 + $0x200] sm:$0xff]
    %v3122 = vld [vmem:[#allocation4 + $0x208] sm:$0xff]
    %v3123 = vld [vmem:[#allocation4 + $0x210] sm:$0xff]
    %v3124 = vld [vmem:[#allocation4 + $0x218] sm:$0xff]
    %v3125 = vld [vmem:[#allocation4 + $0x220] sm:$0xff]
    %v3126 = vld [vmem:[#allocation4 + $0x228] sm:$0xff]
    %v3127 = vld [vmem:[#allocation4 + $0x230] sm:$0xff]
    %v3128 = vld [vmem:[#allocation4 + $0x238] sm:$0xff]
    %v3129 = vld [vmem:[#allocation4 + $0x240] sm:$0xff]
    %v3130 = vld [vmem:[#allocation4 + $0x248] sm:$0xff]
    %v3131 = vld [vmem:[#allocation4 + $0x250] sm:$0xff]
    %v3132 = vld [vmem:[#allocation4 + $0x258] sm:$0xff]
    %v3133 = vld [vmem:[#allocation4 + $0x260] sm:$0xff]
    %v3134 = vld [vmem:[#allocation4 + $0x268] sm:$0xff]
    %v3135 = vld [vmem:[#allocation4 + $0x270] sm:$0xff]
    %v3136 = vld [vmem:[#allocation4 + $0x278] sm:$0xff]
    %v3137 = vld [vmem:[#allocation4 + $0x280] sm:$0xff]
    %v3138 = vld [vmem:[#allocation4 + $0x288] sm:$0xff]
    %v3139 = vld [vmem:[#allocation4 + $0x290] sm:$0xff]
    %v3140 = vld [vmem:[#allocation4 + $0x298] sm:$0xff]
    %v3141 = vld [vmem:[#allocation4 + $0x2a0] sm:$0xff]
    %v3142 = vld [vmem:[#allocation4 + $0x2a8] sm:$0xff]
    %v3143 = vld [vmem:[#allocation4 + $0x2b0] sm:$0xff]
    %v3144 = vld [vmem:[#allocation4 + $0x2b8] sm:$0xff]
    %v3145 = vld [vmem:[#allocation4 + $0x2c0] sm:$0xff]
    %v3146 = vld [vmem:[#allocation4 + $0x2c8] sm:$0xff]
    %v3147 = vld [vmem:[#allocation4 + $0x2d0] sm:$0xff]
    %v3148 = vld [vmem:[#allocation4 + $0x2d8] sm:$0xff]
    %v3149 = vld [vmem:[#allocation4 + $0x2e0] sm:$0xff]
    %v3150 = vld [vmem:[#allocation4 + $0x2e8] sm:$0xff]
    %v3151 = vld [vmem:[#allocation4 + $0x2f0] sm:$0xff]
    %v3152 = vld [vmem:[#allocation4 + $0x2f8] sm:$0xff]
    %v3153 = vld [vmem:[#allocation4 + $0x300] sm:$0xff]
    %v3154 = vld [vmem:[#allocation4 + $0x308] sm:$0xff]
    %v3155 = vld [vmem:[#allocation4 + $0x310] sm:$0xff]
    %v3156 = vld [vmem:[#allocation4 + $0x318] sm:$0xff]
    %v3157 = vld [vmem:[#allocation4 + $0x320] sm:$0xff]
    %v3158 = vld [vmem:[#allocation4 + $0x328] sm:$0xff]
    %v3159 = vld [vmem:[#allocation4 + $0x330] sm:$0xff]
    %v3160 = vld [vmem:[#allocation4 + $0x338] sm:$0xff]
    %v3161 = vld [vmem:[#allocation4 + $0x340] sm:$0xff]
    %v3162 = vld [vmem:[#allocation4 + $0x348] sm:$0xff]
    %v3163 = vld [vmem:[#allocation4 + $0x350] sm:$0xff]
    %v3164 = vld [vmem:[#allocation4 + $0x358] sm:$0xff]
    %v3165 = vld [vmem:[#allocation4 + $0x360] sm:$0xff]
    %v3166 = vld [vmem:[#allocation4 + $0x368] sm:$0xff]
    %v3167 = vld [vmem:[#allocation4 + $0x370] sm:$0xff]
    %v3168 = vld [vmem:[#allocation4 + $0x378] sm:$0xff]
    %v3169 = vld [vmem:[#allocation4 + $0x380] sm:$0xff]
    %v3170 = vld [vmem:[#allocation4 + $0x388] sm:$0xff]
    %v3171 = vld [vmem:[#allocation4 + $0x390] sm:$0xff]
    %v3172 = vld [vmem:[#allocation4 + $0x398] sm:$0xff]
    %v3173 = vld [vmem:[#allocation4 + $0x3a0] sm:$0xff]
    %v3174 = vld [vmem:[#allocation4 + $0x3a8] sm:$0xff]
    %v3175 = vld [vmem:[#allocation4 + $0x3b0] sm:$0xff]
    %v3176 = vld [vmem:[#allocation4 + $0x3b8] sm:$0xff]
    %v3177 = vld [vmem:[#allocation4 + $0x3c0] sm:$0xff]
    %v3178 = vld [vmem:[#allocation4 + $0x3c8] sm:$0xff]
    %v3179 = vld [vmem:[#allocation4 + $0x3d0] sm:$0xff]
    %v3180 = vld [vmem:[#allocation4 + $0x3d8] sm:$0xff]
    %v3181 = vld [vmem:[#allocation4 + $0x3e0] sm:$0xff]
    %v3182 = vld [vmem:[#allocation4 + $0x3e8] sm:$0xff]
    %v3183 = vld [vmem:[#allocation4 + $0x3f0] sm:$0xff]
    %v3184 = vld [vmem:[#allocation4 + $0x3f8] sm:$0xff]
    %v3185 = vunpack.c.l.bf16 %v3057
    %v3186 = vunpack.c.h.bf16 %v3057
    %v3187 = vunpack.c.l.bf16 %v3058
    %v3188 = vunpack.c.h.bf16 %v3058
    %v3189 = vunpack.c.l.bf16 %v3059
    %v3190 = vunpack.c.h.bf16 %v3059
    %v3191 = vunpack.c.l.bf16 %v3060
    %v3192 = vunpack.c.h.bf16 %v3060
    %v3193 = vunpack.c.l.bf16 %v3061
    %v3194 = vunpack.c.h.bf16 %v3061
    %v3195 = vunpack.c.l.bf16 %v3062
    %v3196 = vunpack.c.h.bf16 %v3062
    %v3197 = vunpack.c.l.bf16 %v3063
    %v3198 = vunpack.c.h.bf16 %v3063
    %v3199 = vunpack.c.l.bf16 %v3064
    %v3200 = vunpack.c.h.bf16 %v3064
    %v3201 = vunpack.c.l.bf16 %v3065
    %v3202 = vunpack.c.h.bf16 %v3065
    %v3203 = vunpack.c.l.bf16 %v3066
    %v3204 = vunpack.c.h.bf16 %v3066
    %v3205 = vunpack.c.l.bf16 %v3067
    %v3206 = vunpack.c.h.bf16 %v3067
    %v3207 = vunpack.c.l.bf16 %v3068
    %v3208 = vunpack.c.h.bf16 %v3068
    %v3209 = vunpack.c.l.bf16 %v3069
    %v3210 = vunpack.c.h.bf16 %v3069
    %v3211 = vunpack.c.l.bf16 %v3070
    %v3212 = vunpack.c.h.bf16 %v3070
    %v3213 = vunpack.c.l.bf16 %v3071
    %v3214 = vunpack.c.h.bf16 %v3071
    %v3215 = vunpack.c.l.bf16 %v3072
    %v3216 = vunpack.c.h.bf16 %v3072
    %v3217 = vunpack.c.l.bf16 %v3073
    %v3218 = vunpack.c.h.bf16 %v3073
    %v3219 = vunpack.c.l.bf16 %v3074
    %v3220 = vunpack.c.h.bf16 %v3074
    %v3221 = vunpack.c.l.bf16 %v3075
    %v3222 = vunpack.c.h.bf16 %v3075
    %v3223 = vunpack.c.l.bf16 %v3076
    %v3224 = vunpack.c.h.bf16 %v3076
    %v3225 = vunpack.c.l.bf16 %v3077
    %v3226 = vunpack.c.h.bf16 %v3077
    %v3227 = vunpack.c.l.bf16 %v3078
    %v3228 = vunpack.c.h.bf16 %v3078
    %v3229 = vunpack.c.l.bf16 %v3079
    %v3230 = vunpack.c.h.bf16 %v3079
    %v3231 = vunpack.c.l.bf16 %v3080
    %v3232 = vunpack.c.h.bf16 %v3080
    %v3233 = vunpack.c.l.bf16 %v3081
    %v3234 = vunpack.c.h.bf16 %v3081
    %v3235 = vunpack.c.l.bf16 %v3082
    %v3236 = vunpack.c.h.bf16 %v3082
    %v3237 = vunpack.c.l.bf16 %v3083
    %v3238 = vunpack.c.h.bf16 %v3083
    %v3239 = vunpack.c.l.bf16 %v3084
    %v3240 = vunpack.c.h.bf16 %v3084
    %v3241 = vunpack.c.l.bf16 %v3085
    %v3242 = vunpack.c.h.bf16 %v3085
    %v3243 = vunpack.c.l.bf16 %v3086
    %v3244 = vunpack.c.h.bf16 %v3086
    %v3245 = vunpack.c.l.bf16 %v3087
    %v3246 = vunpack.c.h.bf16 %v3087
    %v3247 = vunpack.c.l.bf16 %v3088
    %v3248 = vunpack.c.h.bf16 %v3088
    %v3249 = vunpack.c.l.bf16 %v3089
    %v3250 = vunpack.c.h.bf16 %v3089
    %v3251 = vunpack.c.l.bf16 %v3090
    %v3252 = vunpack.c.h.bf16 %v3090
    %v3253 = vunpack.c.l.bf16 %v3091
    %v3254 = vunpack.c.h.bf16 %v3091
    %v3255 = vunpack.c.l.bf16 %v3092
    %v3256 = vunpack.c.h.bf16 %v3092
    %v3257 = vunpack.c.l.bf16 %v3093
    %v3258 = vunpack.c.h.bf16 %v3093
    %v3259 = vunpack.c.l.bf16 %v3094
    %v3260 = vunpack.c.h.bf16 %v3094
    %v3261 = vunpack.c.l.bf16 %v3095
    %v3262 = vunpack.c.h.bf16 %v3095
    %v3263 = vunpack.c.l.bf16 %v3096
    %v3264 = vunpack.c.h.bf16 %v3096
    %v3265 = vunpack.c.l.bf16 %v3097
    %v3266 = vunpack.c.h.bf16 %v3097
    %v3267 = vunpack.c.l.bf16 %v3098
    %v3268 = vunpack.c.h.bf16 %v3098
    %v3269 = vunpack.c.l.bf16 %v3099
    %v3270 = vunpack.c.h.bf16 %v3099
    %v3271 = vunpack.c.l.bf16 %v3100
    %v3272 = vunpack.c.h.bf16 %v3100
    %v3273 = vunpack.c.l.bf16 %v3101
    %v3274 = vunpack.c.h.bf16 %v3101
    %v3275 = vunpack.c.l.bf16 %v3102
    %v3276 = vunpack.c.h.bf16 %v3102
    %v3277 = vunpack.c.l.bf16 %v3103
    %v3278 = vunpack.c.h.bf16 %v3103
    %v3279 = vunpack.c.l.bf16 %v3104
    %v3280 = vunpack.c.h.bf16 %v3104
    %v3281 = vunpack.c.l.bf16 %v3105
    %v3282 = vunpack.c.h.bf16 %v3105
    %v3283 = vunpack.c.l.bf16 %v3106
    %v3284 = vunpack.c.h.bf16 %v3106
    %v3285 = vunpack.c.l.bf16 %v3107
    %v3286 = vunpack.c.h.bf16 %v3107
    %v3287 = vunpack.c.l.bf16 %v3108
    %v3288 = vunpack.c.h.bf16 %v3108
    %v3289 = vunpack.c.l.bf16 %v3109
    %v3290 = vunpack.c.h.bf16 %v3109
    %v3291 = vunpack.c.l.bf16 %v3110
    %v3292 = vunpack.c.h.bf16 %v3110
    %v3293 = vunpack.c.l.bf16 %v3111
    %v3294 = vunpack.c.h.bf16 %v3111
    %v3295 = vunpack.c.l.bf16 %v3112
    %v3296 = vunpack.c.h.bf16 %v3112
    %v3297 = vunpack.c.l.bf16 %v3113
    %v3298 = vunpack.c.h.bf16 %v3113
    %v3299 = vunpack.c.l.bf16 %v3114
    %v3300 = vunpack.c.h.bf16 %v3114
    %v3301 = vunpack.c.l.bf16 %v3115
    %v3302 = vunpack.c.h.bf16 %v3115
    %v3303 = vunpack.c.l.bf16 %v3116
    %v3304 = vunpack.c.h.bf16 %v3116
    %v3305 = vunpack.c.l.bf16 %v3117
    %v3306 = vunpack.c.h.bf16 %v3117
    %v3307 = vunpack.c.l.bf16 %v3118
    %v3308 = vunpack.c.h.bf16 %v3118
    %v3309 = vunpack.c.l.bf16 %v3119
    %v3310 = vunpack.c.h.bf16 %v3119
    %v3311 = vunpack.c.l.bf16 %v3120
    %v3312 = vunpack.c.h.bf16 %v3120
    %v3313 = vunpack.c.l.bf16 %v3121
    %v3314 = vunpack.c.h.bf16 %v3121
    %v3315 = vunpack.c.l.bf16 %v3122
    %v3316 = vunpack.c.h.bf16 %v3122
    %v3317 = vunpack.c.l.bf16 %v3123
    %v3318 = vunpack.c.h.bf16 %v3123
    %v3319 = vunpack.c.l.bf16 %v3124
    %v3320 = vunpack.c.h.bf16 %v3124
    %v3321 = vunpack.c.l.bf16 %v3125
    %v3322 = vunpack.c.h.bf16 %v3125
    %v3323 = vunpack.c.l.bf16 %v3126
    %v3324 = vunpack.c.h.bf16 %v3126
    %v3325 = vunpack.c.l.bf16 %v3127
    %v3326 = vunpack.c.h.bf16 %v3127
    %v3327 = vunpack.c.l.bf16 %v3128
    %v3328 = vunpack.c.h.bf16 %v3128
    %v3329 = vunpack.c.l.bf16 %v3129
    %v3330 = vunpack.c.h.bf16 %v3129
    %v3331 = vunpack.c.l.bf16 %v3130
    %v3332 = vunpack.c.h.bf16 %v3130
    %v3333 = vunpack.c.l.bf16 %v3131
    %v3334 = vunpack.c.h.bf16 %v3131
    %v3335 = vunpack.c.l.bf16 %v3132
    %v3336 = vunpack.c.h.bf16 %v3132
    %v3337 = vunpack.c.l.bf16 %v3133
    %v3338 = vunpack.c.h.bf16 %v3133
    %v3339 = vunpack.c.l.bf16 %v3134
    %v3340 = vunpack.c.h.bf16 %v3134
    %v3341 = vunpack.c.l.bf16 %v3135
    %v3342 = vunpack.c.h.bf16 %v3135
    %v3343 = vunpack.c.l.bf16 %v3136
    %v3344 = vunpack.c.h.bf16 %v3136
    %v3345 = vunpack.c.l.bf16 %v3137
    %v3346 = vunpack.c.h.bf16 %v3137
    %v3347 = vunpack.c.l.bf16 %v3138
    %v3348 = vunpack.c.h.bf16 %v3138
    %v3349 = vunpack.c.l.bf16 %v3139
    %v3350 = vunpack.c.h.bf16 %v3139
    %v3351 = vunpack.c.l.bf16 %v3140
    %v3352 = vunpack.c.h.bf16 %v3140
    %v3353 = vunpack.c.l.bf16 %v3141
    %v3354 = vunpack.c.h.bf16 %v3141
    %v3355 = vunpack.c.l.bf16 %v3142
    %v3356 = vunpack.c.h.bf16 %v3142
    %v3357 = vunpack.c.l.bf16 %v3143
    %v3358 = vunpack.c.h.bf16 %v3143
    %v3359 = vunpack.c.l.bf16 %v3144
    %v3360 = vunpack.c.h.bf16 %v3144
    %v3361 = vunpack.c.l.bf16 %v3145
    %v3362 = vunpack.c.h.bf16 %v3145
    %v3363 = vunpack.c.l.bf16 %v3146
    %v3364 = vunpack.c.h.bf16 %v3146
    %v3365 = vunpack.c.l.bf16 %v3147
    %v3366 = vunpack.c.h.bf16 %v3147
    %v3367 = vunpack.c.l.bf16 %v3148
    %v3368 = vunpack.c.h.bf16 %v3148
    %v3369 = vunpack.c.l.bf16 %v3149
    %v3370 = vunpack.c.h.bf16 %v3149
    %v3371 = vunpack.c.l.bf16 %v3150
    %v3372 = vunpack.c.h.bf16 %v3150
    %v3373 = vunpack.c.l.bf16 %v3151
    %v3374 = vunpack.c.h.bf16 %v3151
    %v3375 = vunpack.c.l.bf16 %v3152
    %v3376 = vunpack.c.h.bf16 %v3152
    %v3377 = vunpack.c.l.bf16 %v3153
    %v3378 = vunpack.c.h.bf16 %v3153
    %v3379 = vunpack.c.l.bf16 %v3154
    %v3380 = vunpack.c.h.bf16 %v3154
    %v3381 = vunpack.c.l.bf16 %v3155
    %v3382 = vunpack.c.h.bf16 %v3155
    %v3383 = vunpack.c.l.bf16 %v3156
    %v3384 = vunpack.c.h.bf16 %v3156
    %v3385 = vunpack.c.l.bf16 %v3157
    %v3386 = vunpack.c.h.bf16 %v3157
    %v3387 = vunpack.c.l.bf16 %v3158
    %v3388 = vunpack.c.h.bf16 %v3158
    %v3389 = vunpack.c.l.bf16 %v3159
    %v3390 = vunpack.c.h.bf16 %v3159
    %v3391 = vunpack.c.l.bf16 %v3160
    %v3392 = vunpack.c.h.bf16 %v3160
    %v3393 = vunpack.c.l.bf16 %v3161
    %v3394 = vunpack.c.h.bf16 %v3161
    %v3395 = vunpack.c.l.bf16 %v3162
    %v3396 = vunpack.c.h.bf16 %v3162
    %v3397 = vunpack.c.l.bf16 %v3163
    %v3398 = vunpack.c.h.bf16 %v3163
    %v3399 = vunpack.c.l.bf16 %v3164
    %v3400 = vunpack.c.h.bf16 %v3164
    %v3401 = vunpack.c.l.bf16 %v3165
    %v3402 = vunpack.c.h.bf16 %v3165
    %v3403 = vunpack.c.l.bf16 %v3166
    %v3404 = vunpack.c.h.bf16 %v3166
    %v3405 = vunpack.c.l.bf16 %v3167
    %v3406 = vunpack.c.h.bf16 %v3167
    %v3407 = vunpack.c.l.bf16 %v3168
    %v3408 = vunpack.c.h.bf16 %v3168
    %v3409 = vunpack.c.l.bf16 %v3169
    %v3410 = vunpack.c.h.bf16 %v3169
    %v3411 = vunpack.c.l.bf16 %v3170
    %v3412 = vunpack.c.h.bf16 %v3170
    %v3413 = vunpack.c.l.bf16 %v3171
    %v3414 = vunpack.c.h.bf16 %v3171
    %v3415 = vunpack.c.l.bf16 %v3172
    %v3416 = vunpack.c.h.bf16 %v3172
    %v3417 = vunpack.c.l.bf16 %v3173
    %v3418 = vunpack.c.h.bf16 %v3173
    %v3419 = vunpack.c.l.bf16 %v3174
    %v3420 = vunpack.c.h.bf16 %v3174
    %v3421 = vunpack.c.l.bf16 %v3175
    %v3422 = vunpack.c.h.bf16 %v3175
    %v3423 = vunpack.c.l.bf16 %v3176
    %v3424 = vunpack.c.h.bf16 %v3176
    %v3425 = vunpack.c.l.bf16 %v3177
    %v3426 = vunpack.c.h.bf16 %v3177
    %v3427 = vunpack.c.l.bf16 %v3178
    %v3428 = vunpack.c.h.bf16 %v3178
    %v3429 = vunpack.c.l.bf16 %v3179
    %v3430 = vunpack.c.h.bf16 %v3179
    %v3431 = vunpack.c.l.bf16 %v3180
    %v3432 = vunpack.c.h.bf16 %v3180
    %v3433 = vunpack.c.l.bf16 %v3181
    %v3434 = vunpack.c.h.bf16 %v3181
    %v3435 = vunpack.c.l.bf16 %v3182
    %v3436 = vunpack.c.h.bf16 %v3182
    %v3437 = vunpack.c.l.bf16 %v3183
    %v3438 = vunpack.c.h.bf16 %v3183
    %v3439 = vunpack.c.l.bf16 %v3184
    %v3440 = vunpack.c.h.bf16 %v3184
    %v3441 = vld [vmem:[%s10] sm:$0xf]
    %v3443 = vlaneseq
    %v3444 = vshrl.u32 %v3443, 7
    %v3445 = vsub.s32 0, %v3444
    %v3446 = vrot.slane %v3441, %v3445
    %v3447 = vlaneseq
    %v3448 = vshrl.u32 %v3447, 7
    %v3449 = vsub.s32 1, %v3448
    %v3450 = vrot.slane %v3441, %v3449
    %v3451 = vlaneseq
    %v3452 = vshrl.u32 %v3451, 7
    %v3453 = vsub.s32 2, %v3452
    %v3454 = vrot.slane %v3441, %v3453
    %v3455 = vlaneseq
    %v3456 = vshrl.u32 %v3455, 7
    %v3457 = vsub.s32 3, %v3456
    %v3458 = vrot.slane %v3441, %v3457
    %3463 = vmatprep.subr.mxu0 %v3186
    %3464 = vmatpush1.msra.mxu0 %v3185
    %3465 = vmatprep.subr.mxu0 %v3190
    %3466 = vmatpush1.msra.mxu0 %v3189
    %3467 = vmatprep.subr.mxu0 %v3194
    %3468 = vmatpush1.msra.mxu0 %v3193
    %3469 = vmatprep.subr.mxu0 %v3198
    %3470 = vmatpush1.msra.mxu0 %v3197
    %3471 = vmatprep.subr.mxu0 %v3202
    %3472 = vmatpush1.msra.mxu0 %v3201
    %3473 = vmatprep.subr.mxu0 %v3206
    %3474 = vmatpush1.msra.mxu0 %v3205
    %3475 = vmatprep.subr.mxu0 %v3210
    %3476 = vmatpush1.msra.mxu0 %v3209
    %3477 = vmatprep.subr.mxu0 %v3214
    %3478 = vmatpush1.msra.mxu0 %v3213
    %3479 = vmatprep.subr.mxu0 %v3218
    %3480 = vmatpush1.msra.mxu0 %v3217
    %3481 = vmatprep.subr.mxu0 %v3222
    %3482 = vmatpush1.msra.mxu0 %v3221
    %3483 = vmatprep.subr.mxu0 %v3226
    %3484 = vmatpush1.msra.mxu0 %v3225
    %3485 = vmatprep.subr.mxu0 %v3230
    %3486 = vmatpush1.msra.mxu0 %v3229
    %3487 = vmatprep.subr.mxu0 %v3234
    %3488 = vmatpush1.msra.mxu0 %v3233
    %3489 = vmatprep.subr.mxu0 %v3238
    %3490 = vmatpush1.msra.mxu0 %v3237
    %3491 = vmatprep.subr.mxu0 %v3242
    %3492 = vmatpush1.msra.mxu0 %v3241
    %3493 = vmatprep.subr.mxu0 %v3246
    %3494 = vmatpush1.msra.mxu0 %v3245
    %3495 = vmatprep.subr.mxu0 %v3250
    %3496 = vmatpush1.msra.mxu0 %v3249
    %3497 = vmatprep.subr.mxu0 %v3254
    %3498 = vmatpush1.msra.mxu0 %v3253
    %3499 = vmatprep.subr.mxu0 %v3258
    %3500 = vmatpush1.msra.mxu0 %v3257
    %3501 = vmatprep.subr.mxu0 %v3262
    %3502 = vmatpush1.msra.mxu0 %v3261
    %3503 = vmatprep.subr.mxu0 %v3266
    %3504 = vmatpush1.msra.mxu0 %v3265
    %3505 = vmatprep.subr.mxu0 %v3270
    %3506 = vmatpush1.msra.mxu0 %v3269
    %3507 = vmatprep.subr.mxu0 %v3274
    %3508 = vmatpush1.msra.mxu0 %v3273
    %3509 = vmatprep.subr.mxu0 %v3278
    %3510 = vmatpush1.msra.mxu0 %v3277
    %3511 = vmatprep.subr.mxu0 %v3282
    %3512 = vmatpush1.msra.mxu0 %v3281
    %3513 = vmatprep.subr.mxu0 %v3286
    %3514 = vmatpush1.msra.mxu0 %v3285
    %3515 = vmatprep.subr.mxu0 %v3290
    %3516 = vmatpush1.msra.mxu0 %v3289
    %3517 = vmatprep.subr.mxu0 %v3294
    %3518 = vmatpush1.msra.mxu0 %v3293
    %3519 = vmatprep.subr.mxu0 %v3298
    %3520 = vmatpush1.msra.mxu0 %v3297
    %3521 = vmatprep.subr.mxu0 %v3302
    %3522 = vmatpush1.msra.mxu0 %v3301
    %3523 = vmatprep.subr.mxu0 %v3306
    %3524 = vmatpush1.msra.mxu0 %v3305
    %3525 = vmatprep.subr.mxu0 %v3310
    %3526 = vmatpush1.msra.mxu0 %v3309
    %3527 = vmatprep.mubr.f32.mxu0 %v2930
    %3528 = vmatmul.mubr.f32.gmra.mrb[0].mxu0 %v2929
    %v3529 = vpop.f32.mrb[0].mxu0
    %v3530 = vadd.f32 %v3446, %v3529
    %v3531 = vpop.f32.mrb[0].mxu0
    %v3532 = vadd.f32 %v3450, %v3531
    %3533 = vmatprep.mubr.f32.mxu0 %v2934
    %3534 = vmatmul.mubr.f32.gmra.mrb[0].mxu0 %v2933
    %v3535 = vpop.f32.mrb[0].mxu0
    %v3536 = vadd.f32 %v3446, %v3535
    %v3537 = vpop.f32.mrb[0].mxu0
    %v3538 = vadd.f32 %v3450, %v3537
    %3539 = vmatprep.mubr.f32.mxu0 %v2938
    %3540 = vmatmul.mubr.f32.gmra.mrb[0].mxu0 %v2937
    %v3541 = vpop.f32.mrb[0].mxu0
    %v3542 = vadd.f32 %v3446, %v3541
    %v3543 = vpop.f32.mrb[0].mxu0
    %v3544 = vadd.f32 %v3450, %v3543
    %3545 = vmatprep.mubr.f32.mxu0 %v2942
    %3546 = vmatmul.mubr.f32.gmra.mrb[0].mxu0 %v2941
    %v3547 = vpop.f32.mrb[0].mxu0
    %v3548 = vadd.f32 %v3446, %v3547
    %v3549 = vpop.f32.mrb[0].mxu0
    %v3550 = vadd.f32 %v3450, %v3549
    %3551 = vmatprep.mubr.f32.mxu0 %v2946
    %3552 = vmatmul.mubr.f32.gmra.mrb[0].mxu0 %v2945
    %v3553 = vpop.f32.mrb[0].mxu0
    %v3554 = vadd.f32 %v3446, %v3553
    %v3555 = vpop.f32.mrb[0].mxu0
    %v3556 = vadd.f32 %v3450, %v3555
    %3557 = vmatprep.mubr.f32.mxu0 %v2950
    %3558 = vmatmul.mubr.f32.gmra.mrb[0].mxu0 %v2949
    %v3559 = vpop.f32.mrb[0].mxu0
    %v3560 = vadd.f32 %v3446, %v3559
    %v3561 = vpop.f32.mrb[0].mxu0
    %v3562 = vadd.f32 %v3450, %v3561
    %3563 = vmatprep.mubr.f32.mxu0 %v2954
    %3564 = vmatmul.mubr.f32.gmra.mrb[0].mxu0 %v2953
    %v3565 = vpop.f32.mrb[0].mxu0
    %v3566 = vadd.f32 %v3446, %v3565
    %v3567 = vpop.f32.mrb[0].mxu0
    %v3568 = vadd.f32 %v3450, %v3567
    %3569 = vmatprep.mubr.f32.mxu0 %v2958
    %3570 = vmatmul.mubr.f32.gmra.mrb[0].mxu0 %v2957
    %v3571 = vpop.f32.mrb[0].mxu0
    %v3572 = vadd.f32 %v3446, %v3571
    %v3573 = vpop.f32.mrb[0].mxu0
    %v3574 = vadd.f32 %v3450, %v3573
    %3575 = vmatprep.mubr.f32.mxu0 %v2962
    %3576 = vmatmul.mubr.f32.gmra.mrb[0].mxu0 %v2961
    %v3577 = vpop.f32.mrb[0].mxu0
    %v3578 = vadd.f32 %v3446, %v3577
    %v3579 = vpop.f32.mrb[0].mxu0
    %v3580 = vadd.f32 %v3450, %v3579
    %3581 = vmatprep.mubr.f32.mxu0 %v2966
    %3582 = vmatmul.mubr.f32.gmra.mrb[0].mxu0 %v2965
    %v3583 = vpop.f32.mrb[0].mxu0
    %v3584 = vadd.f32 %v3446, %v3583
    %v3585 = vpop.f32.mrb[0].mxu0
    %v3586 = vadd.f32 %v3450, %v3585
    %3587 = vmatprep.mubr.f32.mxu0 %v2970
    %3588 = vmatmul.mubr.f32.gmra.mrb[0].mxu0 %v2969
    %v3589 = vpop.f32.mrb[0].mxu0
    %v3590 = vadd.f32 %v3446, %v3589
    %v3591 = vpop.f32.mrb[0].mxu0
    %v3592 = vadd.f32 %v3450, %v3591
    %3593 = vmatprep.mubr.f32.mxu0 %v2974
    %3594 = vmatmul.mubr.f32.gmra.mrb[0].mxu0 %v2973
    %v3595 = vpop.f32.mrb[0].mxu0
    %v3596 = vadd.f32 %v3446, %v3595
    %v3597 = vpop.f32.mrb[0].mxu0
    %v3598 = vadd.f32 %v3450, %v3597
    %3599 = vmatprep.mubr.f32.mxu0 %v2978
    %3600 = vmatmul.mubr.f32.gmra.mrb[0].mxu0 %v2977
    %v3601 = vpop.f32.mrb[0].mxu0
    %v3602 = vadd.f32 %v3446, %v3601
    %v3603 = vpop.f32.mrb[0].mxu0
    %v3604 = vadd.f32 %v3450, %v3603
    %3605 = vmatprep.mubr.f32.mxu0 %v2982
    %3606 = vmatmul.mubr.f32.gmra.mrb[0].mxu0 %v2981
    %v3607 = vpop.f32.mrb[0].mxu0
    %v3608 = vadd.f32 %v3446, %v3607
    %v3609 = vpop.f32.mrb[0].mxu0
    %v3610 = vadd.f32 %v3450, %v3609
    %3611 = vmatprep.mubr.f32.mxu0 %v2986
    %3612 = vmatmul.mubr.f32.gmra.mrb[0].mxu0 %v2985
    %v3613 = vpop.f32.mrb[0].mxu0
    %v3614 = vadd.f32 %v3446, %v3613
    %v3615 = vpop.f32.mrb[0].mxu0
    %v3616 = vadd.f32 %v3450, %v3615
    %3617 = vmatprep.mubr.f32.mxu0 %v2990
    %3618 = vmatmul.mubr.f32.gmra.mrb[0].mxu0 %v2989
    %v3619 = vpop.f32.mrb[0].mxu0
    %v3620 = vadd.f32 %v3446, %v3619
    %v3621 = vpop.f32.mrb[0].mxu0
    %v3622 = vadd.f32 %v3450, %v3621
    %3623 = vmatprep.mubr.f32.mxu0 %v2994
    %3624 = vmatmul.mubr.f32.gmra.mrb[0].mxu0 %v2993
    %v3625 = vpop.f32.mrb[0].mxu0
    %v3626 = vadd.f32 %v3446, %v3625
    %v3627 = vpop.f32.mrb[0].mxu0
    %v3628 = vadd.f32 %v3450, %v3627
    %3629 = vmatprep.mubr.f32.mxu0 %v2998
    %3630 = vmatmul.mubr.f32.gmra.mrb[0].mxu0 %v2997
    %v3631 = vpop.f32.mrb[0].mxu0
    %v3632 = vadd.f32 %v3446, %v3631
    %v3633 = vpop.f32.mrb[0].mxu0
    %v3634 = vadd.f32 %v3450, %v3633
    %3635 = vmatprep.mubr.f32.mxu0 %v3002
    %3636 = vmatmul.mubr.f32.gmra.mrb[0].mxu0 %v3001
    %v3637 = vpop.f32.mrb[0].mxu0
    %v3638 = vadd.f32 %v3446, %v3637
    %v3639 = vpop.f32.mrb[0].mxu0
    %v3640 = vadd.f32 %v3450, %v3639
    %3641 = vmatprep.mubr.f32.mxu0 %v3006
    %3642 = vmatmul.mubr.f32.gmra.mrb[0].mxu0 %v3005
    %v3643 = vpop.f32.mrb[0].mxu0
    %v3644 = vadd.f32 %v3446, %v3643
    %v3645 = vpop.f32.mrb[0].mxu0
    %v3646 = vadd.f32 %v3450, %v3645
    %3647 = vmatprep.mubr.f32.mxu0 %v3010
    %3648 = vmatmul.mubr.f32.gmra.mrb[0].mxu0 %v3009
    %v3649 = vpop.f32.mrb[0].mxu0
    %v3650 = vadd.f32 %v3446, %v3649
    %v3651 = vpop.f32.mrb[0].mxu0
    %v3652 = vadd.f32 %v3450, %v3651
    %3653 = vmatprep.mubr.f32.mxu0 %v3014
    %3654 = vmatmul.mubr.f32.gmra.mrb[0].mxu0 %v3013
    %v3655 = vpop.f32.mrb[0].mxu0
    %v3656 = vadd.f32 %v3446, %v3655
    %v3657 = vpop.f32.mrb[0].mxu0
    %v3658 = vadd.f32 %v3450, %v3657
    %3659 = vmatprep.mubr.f32.mxu0 %v3018
    %3660 = vmatmul.mubr.f32.gmra.mrb[0].mxu0 %v3017
    %v3661 = vpop.f32.mrb[0].mxu0
    %v3662 = vadd.f32 %v3446, %v3661
    %v3663 = vpop.f32.mrb[0].mxu0
    %v3664 = vadd.f32 %v3450, %v3663
    %3665 = vmatprep.mubr.f32.mxu0 %v3022
    %3666 = vmatmul.mubr.f32.gmra.mrb[0].mxu0 %v3021
    %v3667 = vpop.f32.mrb[0].mxu0
    %v3668 = vadd.f32 %v3446, %v3667
    %v3669 = vpop.f32.mrb[0].mxu0
    %v3670 = vadd.f32 %v3450, %v3669
    %3671 = vmatprep.mubr.f32.mxu0 %v3026
    %3672 = vmatmul.mubr.f32.gmra.mrb[0].mxu0 %v3025
    %v3673 = vpop.f32.mrb[0].mxu0
    %v3674 = vadd.f32 %v3446, %v3673
    %v3675 = vpop.f32.mrb[0].mxu0
    %v3676 = vadd.f32 %v3450, %v3675
    %3677 = vmatprep.mubr.f32.mxu0 %v3030
    %3678 = vmatmul.mubr.f32.gmra.mrb[0].mxu0 %v3029
    %v3679 = vpop.f32.mrb[0].mxu0
    %v3680 = vadd.f32 %v3446, %v3679
    %v3681 = vpop.f32.mrb[0].mxu0
    %v3682 = vadd.f32 %v3450, %v3681
    %3683 = vmatprep.mubr.f32.mxu0 %v3034
    %3684 = vmatmul.mubr.f32.gmra.mrb[0].mxu0 %v3033
    %v3685 = vpop.f32.mrb[0].mxu0
    %v3686 = vadd.f32 %v3446, %v3685
    %v3687 = vpop.f32.mrb[0].mxu0
    %v3688 = vadd.f32 %v3450, %v3687
    %3689 = vmatprep.mubr.f32.mxu0 %v3038
    %3690 = vmatmul.mubr.f32.gmra.mrb[0].mxu0 %v3037
    %v3691 = vpop.f32.mrb[0].mxu0
    %v3692 = vadd.f32 %v3446, %v3691
    %v3693 = vpop.f32.mrb[0].mxu0
    %v3694 = vadd.f32 %v3450, %v3693
    %3695 = vmatprep.mubr.f32.mxu0 %v3042
    %3696 = vmatmul.mubr.f32.gmra.mrb[0].mxu0 %v3041
    %v3697 = vpop.f32.mrb[0].mxu0
    %v3698 = vadd.f32 %v3446, %v3697
    %v3699 = vpop.f32.mrb[0].mxu0
    %v3700 = vadd.f32 %v3450, %v3699
    %3701 = vmatprep.mubr.f32.mxu0 %v3046
    %3702 = vmatmul.mubr.f32.gmra.mrb[0].mxu0 %v3045
    %v3703 = vpop.f32.mrb[0].mxu0
    %v3704 = vadd.f32 %v3446, %v3703
    %v3705 = vpop.f32.mrb[0].mxu0
    %v3706 = vadd.f32 %v3450, %v3705
    %3707 = vmatprep.mubr.f32.mxu0 %v3050
    %3708 = vmatmul.mubr.f32.gmra.mrb[0].mxu0 %v3049
    %v3709 = vpop.f32.mrb[0].mxu0
    %v3710 = vadd.f32 %v3446, %v3709
    %v3711 = vpop.f32.mrb[0].mxu0
    %v3712 = vadd.f32 %v3450, %v3711
    %3713 = vmatprep.mubr.f32.mxu0 %v3054
    %3714 = vmatmul.mubr.f32.gmra.mrb[0].mxu0 %v3053
    %v3715 = vpop.f32.mrb[0].mxu0
    %v3716 = vadd.f32 %v3446, %v3715
    %v3717 = vpop.f32.mrb[0].mxu0
    %v3718 = vadd.f32 %v3450, %v3717
    %3719 = vdwg.mxu0
    %3720 = vmatprep.subr.mxu0 %v3314
    %3721 = vmatpush1.msra.mxu0 %v3313
    %3722 = vmatprep.subr.mxu0 %v3318
    %3723 = vmatpush1.msra.mxu0 %v3317
    %3724 = vmatprep.subr.mxu0 %v3322
    %3725 = vmatpush1.msra.mxu0 %v3321
    %3726 = vmatprep.subr.mxu0 %v3326
    %3727 = vmatpush1.msra.mxu0 %v3325
    %3728 = vmatprep.subr.mxu0 %v3330
    %3729 = vmatpush1.msra.mxu0 %v3329
    %3730 = vmatprep.subr.mxu0 %v3334
    %3731 = vmatpush1.msra.mxu0 %v3333
    %3732 = vmatprep.subr.mxu0 %v3338
    %3733 = vmatpush1.msra.mxu0 %v3337
    %3734 = vmatprep.subr.mxu0 %v3342
    %3735 = vmatpush1.msra.mxu0 %v3341
    %3736 = vmatprep.subr.mxu0 %v3346
    %3737 = vmatpush1.msra.mxu0 %v3345
    %3738 = vmatprep.subr.mxu0 %v3350
    %3739 = vmatpush1.msra.mxu0 %v3349
    %3740 = vmatprep.subr.mxu0 %v3354
    %3741 = vmatpush1.msra.mxu0 %v3353
    %3742 = vmatprep.subr.mxu0 %v3358
    %3743 = vmatpush1.msra.mxu0 %v3357
    %3744 = vmatprep.subr.mxu0 %v3362
    %3745 = vmatpush1.msra.mxu0 %v3361
    %3746 = vmatprep.subr.mxu0 %v3366
    %3747 = vmatpush1.msra.mxu0 %v3365
    %3748 = vmatprep.subr.mxu0 %v3370
    %3749 = vmatpush1.msra.mxu0 %v3369
    %3750 = vmatprep.subr.mxu0 %v3374
    %3751 = vmatpush1.msra.mxu0 %v3373
    %3752 = vmatprep.subr.mxu0 %v3378
    %3753 = vmatpush1.msra.mxu0 %v3377
    %3754 = vmatprep.subr.mxu0 %v3382
    %3755 = vmatpush1.msra.mxu0 %v3381
    %3756 = vmatprep.subr.mxu0 %v3386
    %3757 = vmatpush1.msra.mxu0 %v3385
    %3758 = vmatprep.subr.mxu0 %v3390
    %3759 = vmatpush1.msra.mxu0 %v3389
    %3760 = vmatprep.subr.mxu0 %v3394
    %3761 = vmatpush1.msra.mxu0 %v3393
    %3762 = vmatprep.subr.mxu0 %v3398
    %3763 = vmatpush1.msra.mxu0 %v3397
    %3764 = vmatprep.subr.mxu0 %v3402
    %3765 = vmatpush1.msra.mxu0 %v3401
    %3766 = vmatprep.subr.mxu0 %v3406
    %3767 = vmatpush1.msra.mxu0 %v3405
    %3768 = vmatprep.subr.mxu0 %v3410
    %3769 = vmatpush1.msra.mxu0 %v3409
    %3770 = vmatprep.subr.mxu0 %v3414
    %3771 = vmatpush1.msra.mxu0 %v3413
    %3772 = vmatprep.subr.mxu0 %v3418
    %3773 = vmatpush1.msra.mxu0 %v3417
    %3774 = vmatprep.subr.mxu0 %v3422
    %3775 = vmatpush1.msra.mxu0 %v3421
    %3776 = vmatprep.subr.mxu0 %v3426
    %3777 = vmatpush1.msra.mxu0 %v3425
    %3778 = vmatprep.subr.mxu0 %v3430
    %3779 = vmatpush1.msra.mxu0 %v3429
    %3780 = vmatprep.subr.mxu0 %v3434
    %3781 = vmatpush1.msra.mxu0 %v3433
    %3782 = vmatprep.subr.mxu0 %v3438
    %3783 = vmatpush1.msra.mxu0 %v3437
    %3784 = vmatprep.mubr.f32.mxu0 %v2932
    %3785 = vmatmul.mubr.f32.gmra.mrb[0].mxu0 %v2931
    %v3786 = vpop.f32.mrb[0].mxu0
    %v3787 = vadd.f32 %v3530, %v3786
    %v3788 = vpop.f32.mrb[0].mxu0
    %v3789 = vadd.f32 %v3532, %v3788
    %3790 = vmatprep.mubr.f32.mxu0 %v2936
    %3791 = vmatmul.mubr.f32.gmra.mrb[0].mxu0 %v2935
    %v3792 = vpop.f32.mrb[0].mxu0
    %v3793 = vadd.f32 %v3536, %v3792
    %v3794 = vpop.f32.mrb[0].mxu0
    %v3795 = vadd.f32 %v3538, %v3794
    %3796 = vmatprep.mubr.f32.mxu0 %v2940
    %3797 = vmatmul.mubr.f32.gmra.mrb[0].mxu0 %v2939
    %v3798 = vpop.f32.mrb[0].mxu0
    %v3799 = vadd.f32 %v3542, %v3798
    %v3800 = vpop.f32.mrb[0].mxu0
    %v3801 = vadd.f32 %v3544, %v3800
    %3802 = vmatprep.mubr.f32.mxu0 %v2944
    %3803 = vmatmul.mubr.f32.gmra.mrb[0].mxu0 %v2943
    %v3804 = vpop.f32.mrb[0].mxu0
    %v3805 = vadd.f32 %v3548, %v3804
    %v3806 = vpop.f32.mrb[0].mxu0
    %v3807 = vadd.f32 %v3550, %v3806
    %3808 = vmatprep.mubr.f32.mxu0 %v2948
    %3809 = vmatmul.mubr.f32.gmra.mrb[0].mxu0 %v2947
    %v3810 = vpop.f32.mrb[0].mxu0
    %v3811 = vadd.f32 %v3554, %v3810
    %v3812 = vpop.f32.mrb[0].mxu0
    %v3813 = vadd.f32 %v3556, %v3812
    %3814 = vmatprep.mubr.f32.mxu0 %v2952
    %3815 = vmatmul.mubr.f32.gmra.mrb[0].mxu0 %v2951
    %v3816 = vpop.f32.mrb[0].mxu0
    %v3817 = vadd.f32 %v3560, %v3816
    %v3818 = vpop.f32.mrb[0].mxu0
    %v3819 = vadd.f32 %v3562, %v3818
    %3820 = vmatprep.mubr.f32.mxu0 %v2956
    %3821 = vmatmul.mubr.f32.gmra.mrb[0].mxu0 %v2955
    %v3822 = vpop.f32.mrb[0].mxu0
    %v3823 = vadd.f32 %v3566, %v3822
    %v3824 = vpop.f32.mrb[0].mxu0
    %v3825 = vadd.f32 %v3568, %v3824
    %3826 = vmatprep.mubr.f32.mxu0 %v2960
    %3827 = vmatmul.mubr.f32.gmra.mrb[0].mxu0 %v2959
    %v3828 = vpop.f32.mrb[0].mxu0
    %v3829 = vadd.f32 %v3572, %v3828
    %v3830 = vpop.f32.mrb[0].mxu0
    %v3831 = vadd.f32 %v3574, %v3830
    %3832 = vmatprep.mubr.f32.mxu0 %v2964
    %3833 = vmatmul.mubr.f32.gmra.mrb[0].mxu0 %v2963
    %v3834 = vpop.f32.mrb[0].mxu0
    %v3835 = vadd.f32 %v3578, %v3834
    %v3836 = vpop.f32.mrb[0].mxu0
    %v3837 = vadd.f32 %v3580, %v3836
    %3838 = vmatprep.mubr.f32.mxu0 %v2968
    %3839 = vmatmul.mubr.f32.gmra.mrb[0].mxu0 %v2967
    %v3840 = vpop.f32.mrb[0].mxu0
    %v3841 = vadd.f32 %v3584, %v3840
    %v3842 = vpop.f32.mrb[0].mxu0
    %v3843 = vadd.f32 %v3586, %v3842
    %3844 = vmatprep.mubr.f32.mxu0 %v2972
    %3845 = vmatmul.mubr.f32.gmra.mrb[0].mxu0 %v2971
    %v3846 = vpop.f32.mrb[0].mxu0
    %v3847 = vadd.f32 %v3590, %v3846
    %v3848 = vpop.f32.mrb[0].mxu0
    %v3849 = vadd.f32 %v3592, %v3848
    %3850 = vmatprep.mubr.f32.mxu0 %v2976
    %3851 = vmatmul.mubr.f32.gmra.mrb[0].mxu0 %v2975
    %v3852 = vpop.f32.mrb[0].mxu0
    %v3853 = vadd.f32 %v3596, %v3852
    %v3854 = vpop.f32.mrb[0].mxu0
    %v3855 = vadd.f32 %v3598, %v3854
    %3856 = vmatprep.mubr.f32.mxu0 %v2980
    %3857 = vmatmul.mubr.f32.gmra.mrb[0].mxu0 %v2979
    %v3858 = vpop.f32.mrb[0].mxu0
    %v3859 = vadd.f32 %v3602, %v3858
    %v3860 = vpop.f32.mrb[0].mxu0
    %v3861 = vadd.f32 %v3604, %v3860
    %3862 = vmatprep.mubr.f32.mxu0 %v2984
    %3863 = vmatmul.mubr.f32.gmra.mrb[0].mxu0 %v2983
    %v3864 = vpop.f32.mrb[0].mxu0
    %v3865 = vadd.f32 %v3608, %v3864
    %v3866 = vpop.f32.mrb[0].mxu0
    %v3867 = vadd.f32 %v3610, %v3866
    %3868 = vmatprep.mubr.f32.mxu0 %v2988
    %3869 = vmatmul.mubr.f32.gmra.mrb[0].mxu0 %v2987
    %v3870 = vpop.f32.mrb[0].mxu0
    %v3871 = vadd.f32 %v3614, %v3870
    %v3872 = vpop.f32.mrb[0].mxu0
    %v3873 = vadd.f32 %v3616, %v3872
    %3874 = vmatprep.mubr.f32.mxu0 %v2992
    %3875 = vmatmul.mubr.f32.gmra.mrb[0].mxu0 %v2991
    %v3876 = vpop.f32.mrb[0].mxu0
    %v3877 = vadd.f32 %v3620, %v3876
    %v3878 = vpop.f32.mrb[0].mxu0
    %v3879 = vadd.f32 %v3622, %v3878
    %3880 = vmatprep.mubr.f32.mxu0 %v2996
    %3881 = vmatmul.mubr.f32.gmra.mrb[0].mxu0 %v2995
    %v3882 = vpop.f32.mrb[0].mxu0
    %v3883 = vadd.f32 %v3626, %v3882
    %v3884 = vpop.f32.mrb[0].mxu0
    %v3885 = vadd.f32 %v3628, %v3884
    %3886 = vmatprep.mubr.f32.mxu0 %v3000
    %3887 = vmatmul.mubr.f32.gmra.mrb[0].mxu0 %v2999
    %v3888 = vpop.f32.mrb[0].mxu0
    %v3889 = vadd.f32 %v3632, %v3888
    %v3890 = vpop.f32.mrb[0].mxu0
    %v3891 = vadd.f32 %v3634, %v3890
    %3892 = vmatprep.mubr.f32.mxu0 %v3004
    %3893 = vmatmul.mubr.f32.gmra.mrb[0].mxu0 %v3003
    %v3894 = vpop.f32.mrb[0].mxu0
    %v3895 = vadd.f32 %v3638, %v3894
    %v3896 = vpop.f32.mrb[0].mxu0
    %v3897 = vadd.f32 %v3640, %v3896
    %3898 = vmatprep.mubr.f32.mxu0 %v3008
    %3899 = vmatmul.mubr.f32.gmra.mrb[0].mxu0 %v3007
    %v3900 = vpop.f32.mrb[0].mxu0
    %v3901 = vadd.f32 %v3644, %v3900
    %v3902 = vpop.f32.mrb[0].mxu0
    %v3903 = vadd.f32 %v3646, %v3902
    %3904 = vmatprep.mubr.f32.mxu0 %v3012
    %3905 = vmatmul.mubr.f32.gmra.mrb[0].mxu0 %v3011
    %v3906 = vpop.f32.mrb[0].mxu0
    %v3907 = vadd.f32 %v3650, %v3906
    %v3908 = vpop.f32.mrb[0].mxu0
    %v3909 = vadd.f32 %v3652, %v3908
    %3910 = vmatprep.mubr.f32.mxu0 %v3016
    %3911 = vmatmul.mubr.f32.gmra.mrb[0].mxu0 %v3015
    %v3912 = vpop.f32.mrb[0].mxu0
    %v3913 = vadd.f32 %v3656, %v3912
    %v3914 = vpop.f32.mrb[0].mxu0
    %v3915 = vadd.f32 %v3658, %v3914
    %3916 = vmatprep.mubr.f32.mxu0 %v3020
    %3917 = vmatmul.mubr.f32.gmra.mrb[0].mxu0 %v3019
    %v3918 = vpop.f32.mrb[0].mxu0
    %v3919 = vadd.f32 %v3662, %v3918
    %v3920 = vpop.f32.mrb[0].mxu0
    %v3921 = vadd.f32 %v3664, %v3920
    %3922 = vmatprep.mubr.f32.mxu0 %v3024
    %3923 = vmatmul.mubr.f32.gmra.mrb[0].mxu0 %v3023
    %v3924 = vpop.f32.mrb[0].mxu0
    %v3925 = vadd.f32 %v3668, %v3924
    %v3926 = vpop.f32.mrb[0].mxu0
    %v3927 = vadd.f32 %v3670, %v3926
    %3928 = vmatprep.mubr.f32.mxu0 %v3028
    %3929 = vmatmul.mubr.f32.gmra.mrb[0].mxu0 %v3027
    %v3930 = vpop.f32.mrb[0].mxu0
    %v3931 = vadd.f32 %v3674, %v3930
    %v3932 = vpop.f32.mrb[0].mxu0
    %v3933 = vadd.f32 %v3676, %v3932
    %3934 = vmatprep.mubr.f32.mxu0 %v3032
    %3935 = vmatmul.mubr.f32.gmra.mrb[0].mxu0 %v3031
    %v3936 = vpop.f32.mrb[0].mxu0
    %v3937 = vadd.f32 %v3680, %v3936
    %v3938 = vpop.f32.mrb[0].mxu0
    %v3939 = vadd.f32 %v3682, %v3938
    %3940 = vmatprep.mubr.f32.mxu0 %v3036
    %3941 = vmatmul.mubr.f32.gmra.mrb[0].mxu0 %v3035
    %v3942 = vpop.f32.mrb[0].mxu0
    %v3943 = vadd.f32 %v3686, %v3942
    %v3944 = vpop.f32.mrb[0].mxu0
    %v3945 = vadd.f32 %v3688, %v3944
    %3946 = vmatprep.mubr.f32.mxu0 %v3040
    %3947 = vmatmul.mubr.f32.gmra.mrb[0].mxu0 %v3039
    %v3948 = vpop.f32.mrb[0].mxu0
    %v3949 = vadd.f32 %v3692, %v3948
    %v3950 = vpop.f32.mrb[0].mxu0
    %v3951 = vadd.f32 %v3694, %v3950
    %3952 = vmatprep.mubr.f32.mxu0 %v3044
    %3953 = vmatmul.mubr.f32.gmra.mrb[0].mxu0 %v3043
    %v3954 = vpop.f32.mrb[0].mxu0
    %v3955 = vadd.f32 %v3698, %v3954
    %v3956 = vpop.f32.mrb[0].mxu0
    %v3957 = vadd.f32 %v3700, %v3956
    %3958 = vmatprep.mubr.f32.mxu0 %v3048
    %3959 = vmatmul.mubr.f32.gmra.mrb[0].mxu0 %v3047
    %v3960 = vpop.f32.mrb[0].mxu0
    %v3961 = vadd.f32 %v3704, %v3960
    %v3962 = vpop.f32.mrb[0].mxu0
    %v3963 = vadd.f32 %v3706, %v3962
    %3964 = vmatprep.mubr.f32.mxu0 %v3052
    %3965 = vmatmul.mubr.f32.gmra.mrb[0].mxu0 %v3051
    %v3966 = vpop.f32.mrb[0].mxu0
    %v3967 = vadd.f32 %v3710, %v3966
    %v3968 = vpop.f32.mrb[0].mxu0
    %v3969 = vadd.f32 %v3712, %v3968
    %3970 = vmatprep.mubr.f32.mxu0 %v3056
    %3971 = vmatmul.mubr.f32.gmra.mrb[0].mxu0 %v3055
    %v3972 = vpop.f32.mrb[0].mxu0
    %v3973 = vadd.f32 %v3716, %v3972
    %v3974 = vpop.f32.mrb[0].mxu0
    %v3975 = vadd.f32 %v3718, %v3974
    %3976 = vdwg.mxu0
    %3977 = vmatprep.subr.mxu0 %v3188
    %3978 = vmatpush1.msra.mxu0 %v3187
    %3979 = vmatprep.subr.mxu0 %v3192
    %3980 = vmatpush1.msra.mxu0 %v3191
    %3981 = vmatprep.subr.mxu0 %v3196
    %3982 = vmatpush1.msra.mxu0 %v3195
    %3983 = vmatprep.subr.mxu0 %v3200
    %3984 = vmatpush1.msra.mxu0 %v3199
    %3985 = vmatprep.subr.mxu0 %v3204
    %3986 = vmatpush1.msra.mxu0 %v3203
    %3987 = vmatprep.subr.mxu0 %v3208
    %3988 = vmatpush1.msra.mxu0 %v3207
    %3989 = vmatprep.subr.mxu0 %v3212
    %3990 = vmatpush1.msra.mxu0 %v3211
    %3991 = vmatprep.subr.mxu0 %v3216
    %3992 = vmatpush1.msra.mxu0 %v3215
    %3993 = vmatprep.subr.mxu0 %v3220
    %3994 = vmatpush1.msra.mxu0 %v3219
    %3995 = vmatprep.subr.mxu0 %v3224
    %3996 = vmatpush1.msra.mxu0 %v3223
    %3997 = vmatprep.subr.mxu0 %v3228
    %3998 = vmatpush1.msra.mxu0 %v3227
    %3999 = vmatprep.subr.mxu0 %v3232
    %4000 = vmatpush1.msra.mxu0 %v3231
    %4001 = vmatprep.subr.mxu0 %v3236
    %4002 = vmatpush1.msra.mxu0 %v3235
    %4003 = vmatprep.subr.mxu0 %v3240
    %4004 = vmatpush1.msra.mxu0 %v3239
    %4005 = vmatprep.subr.mxu0 %v3244
    %4006 = vmatpush1.msra.mxu0 %v3243
    %4007 = vmatprep.subr.mxu0 %v3248
    %4008 = vmatpush1.msra.mxu0 %v3247
    %4009 = vmatprep.subr.mxu0 %v3252
    %4010 = vmatpush1.msra.mxu0 %v3251
    %4011 = vmatprep.subr.mxu0 %v3256
    %4012 = vmatpush1.msra.mxu0 %v3255
    %4013 = vmatprep.subr.mxu0 %v3260
    %4014 = vmatpush1.msra.mxu0 %v3259
    %4015 = vmatprep.subr.mxu0 %v3264
    %4016 = vmatpush1.msra.mxu0 %v3263
    %4017 = vmatprep.subr.mxu0 %v3268
    %4018 = vmatpush1.msra.mxu0 %v3267
    %4019 = vmatprep.subr.mxu0 %v3272
    %4020 = vmatpush1.msra.mxu0 %v3271
    %4021 = vmatprep.subr.mxu0 %v3276
    %4022 = vmatpush1.msra.mxu0 %v3275
    %4023 = vmatprep.subr.mxu0 %v3280
    %4024 = vmatpush1.msra.mxu0 %v3279
    %4025 = vmatprep.subr.mxu0 %v3284
    %4026 = vmatpush1.msra.mxu0 %v3283
    %4027 = vmatprep.subr.mxu0 %v3288
    %4028 = vmatpush1.msra.mxu0 %v3287
    %4029 = vmatprep.subr.mxu0 %v3292
    %4030 = vmatpush1.msra.mxu0 %v3291
    %4031 = vmatprep.subr.mxu0 %v3296
    %4032 = vmatpush1.msra.mxu0 %v3295
    %4033 = vmatprep.subr.mxu0 %v3300
    %4034 = vmatpush1.msra.mxu0 %v3299
    %4035 = vmatprep.subr.mxu0 %v3304
    %4036 = vmatpush1.msra.mxu0 %v3303
    %4037 = vmatprep.subr.mxu0 %v3308
    %4038 = vmatpush1.msra.mxu0 %v3307
    %4039 = vmatprep.subr.mxu0 %v3312
    %4040 = vmatpush1.msra.mxu0 %v3311
    %4041 = vmatprep.mubr.f32.mxu0 %v2930
    %4042 = vmatmul.mubr.f32.gmra.mrb[0].mxu0 %v2929
    %v4043 = vpop.f32.mrb[0].mxu0
    %v4044 = vadd.f32 %v3454, %v4043
    %v4045 = vpop.f32.mrb[0].mxu0
    %v4046 = vadd.f32 %v3458, %v4045
    %4047 = vmatprep.mubr.f32.mxu0 %v2934
    %4048 = vmatmul.mubr.f32.gmra.mrb[0].mxu0 %v2933
    %v4049 = vpop.f32.mrb[0].mxu0
    %v4050 = vadd.f32 %v3454, %v4049
    %v4051 = vpop.f32.mrb[0].mxu0
    %v4052 = vadd.f32 %v3458, %v4051
    %4053 = vmatprep.mubr.f32.mxu0 %v2938
    %4054 = vmatmul.mubr.f32.gmra.mrb[0].mxu0 %v2937
    %v4055 = vpop.f32.mrb[0].mxu0
    %v4056 = vadd.f32 %v3454, %v4055
    %v4057 = vpop.f32.mrb[0].mxu0
    %v4058 = vadd.f32 %v3458, %v4057
    %4059 = vmatprep.mubr.f32.mxu0 %v2942
    %4060 = vmatmul.mubr.f32.gmra.mrb[0].mxu0 %v2941
    %v4061 = vpop.f32.mrb[0].mxu0
    %v4062 = vadd.f32 %v3454, %v4061
    %v4063 = vpop.f32.mrb[0].mxu0
    %v4064 = vadd.f32 %v3458, %v4063
    %4065 = vmatprep.mubr.f32.mxu0 %v2946
    %4066 = vmatmul.mubr.f32.gmra.mrb[0].mxu0 %v2945
    %v4067 = vpop.f32.mrb[0].mxu0
    %v4068 = vadd.f32 %v3454, %v4067
    %v4069 = vpop.f32.mrb[0].mxu0
    %v4070 = vadd.f32 %v3458, %v4069
    %4071 = vmatprep.mubr.f32.mxu0 %v2950
    %4072 = vmatmul.mubr.f32.gmra.mrb[0].mxu0 %v2949
    %v4073 = vpop.f32.mrb[0].mxu0
    %v4074 = vadd.f32 %v3454, %v4073
    %v4075 = vpop.f32.mrb[0].mxu0
    %v4076 = vadd.f32 %v3458, %v4075
    %4077 = vmatprep.mubr.f32.mxu0 %v2954
    %4078 = vmatmul.mubr.f32.gmra.mrb[0].mxu0 %v2953
    %v4079 = vpop.f32.mrb[0].mxu0
    %v4080 = vadd.f32 %v3454, %v4079
    %v4081 = vpop.f32.mrb[0].mxu0
    %v4082 = vadd.f32 %v3458, %v4081
    %4083 = vmatprep.mubr.f32.mxu0 %v2958
    %4084 = vmatmul.mubr.f32.gmra.mrb[0].mxu0 %v2957
    %v4085 = vpop.f32.mrb[0].mxu0
    %v4086 = vadd.f32 %v3454, %v4085
    %v4087 = vpop.f32.mrb[0].mxu0
    %v4088 = vadd.f32 %v3458, %v4087
    %4089 = vmatprep.mubr.f32.mxu0 %v2962
    %4090 = vmatmul.mubr.f32.gmra.mrb[0].mxu0 %v2961
    %v4091 = vpop.f32.mrb[0].mxu0
    %v4092 = vadd.f32 %v3454, %v4091
    %v4093 = vpop.f32.mrb[0].mxu0
    %v4094 = vadd.f32 %v3458, %v4093
    %4095 = vmatprep.mubr.f32.mxu0 %v2966
    %4096 = vmatmul.mubr.f32.gmra.mrb[0].mxu0 %v2965
    %v4097 = vpop.f32.mrb[0].mxu0
    %v4098 = vadd.f32 %v3454, %v4097
    %v4099 = vpop.f32.mrb[0].mxu0
    %v4100 = vadd.f32 %v3458, %v4099
    %4101 = vmatprep.mubr.f32.mxu0 %v2970
    %4102 = vmatmul.mubr.f32.gmra.mrb[0].mxu0 %v2969
    %v4103 = vpop.f32.mrb[0].mxu0
    %v4104 = vadd.f32 %v3454, %v4103
    %v4105 = vpop.f32.mrb[0].mxu0
    %v4106 = vadd.f32 %v3458, %v4105
    %4107 = vmatprep.mubr.f32.mxu0 %v2974
    %4108 = vmatmul.mubr.f32.gmra.mrb[0].mxu0 %v2973
    %v4109 = vpop.f32.mrb[0].mxu0
    %v4110 = vadd.f32 %v3454, %v4109
    %v4111 = vpop.f32.mrb[0].mxu0
    %v4112 = vadd.f32 %v3458, %v4111
    %4113 = vmatprep.mubr.f32.mxu0 %v2978
    %4114 = vmatmul.mubr.f32.gmra.mrb[0].mxu0 %v2977
    %v4115 = vpop.f32.mrb[0].mxu0
    %v4116 = vadd.f32 %v3454, %v4115
    %v4117 = vpop.f32.mrb[0].mxu0
    %v4118 = vadd.f32 %v3458, %v4117
    %4119 = vmatprep.mubr.f32.mxu0 %v2982
    %4120 = vmatmul.mubr.f32.gmra.mrb[0].mxu0 %v2981
    %v4121 = vpop.f32.mrb[0].mxu0
    %v4122 = vadd.f32 %v3454, %v4121
    %v4123 = vpop.f32.mrb[0].mxu0
    %v4124 = vadd.f32 %v3458, %v4123
    %4125 = vmatprep.mubr.f32.mxu0 %v2986
    %4126 = vmatmul.mubr.f32.gmra.mrb[0].mxu0 %v2985
    %v4127 = vpop.f32.mrb[0].mxu0
    %v4128 = vadd.f32 %v3454, %v4127
    %v4129 = vpop.f32.mrb[0].mxu0
    %v4130 = vadd.f32 %v3458, %v4129
    %4131 = vmatprep.mubr.f32.mxu0 %v2990
    %4132 = vmatmul.mubr.f32.gmra.mrb[0].mxu0 %v2989
    %v4133 = vpop.f32.mrb[0].mxu0
    %v4134 = vadd.f32 %v3454, %v4133
    %v4135 = vpop.f32.mrb[0].mxu0
    %v4136 = vadd.f32 %v3458, %v4135
    %4137 = vmatprep.mubr.f32.mxu0 %v2994
    %4138 = vmatmul.mubr.f32.gmra.mrb[0].mxu0 %v2993
    %v4139 = vpop.f32.mrb[0].mxu0
    %v4140 = vadd.f32 %v3454, %v4139
    %v4141 = vpop.f32.mrb[0].mxu0
    %v4142 = vadd.f32 %v3458, %v4141
    %4143 = vmatprep.mubr.f32.mxu0 %v2998
    %4144 = vmatmul.mubr.f32.gmra.mrb[0].mxu0 %v2997
    %v4145 = vpop.f32.mrb[0].mxu0
    %v4146 = vadd.f32 %v3454, %v4145
    %v4147 = vpop.f32.mrb[0].mxu0
    %v4148 = vadd.f32 %v3458, %v4147
    %4149 = vmatprep.mubr.f32.mxu0 %v3002
    %4150 = vmatmul.mubr.f32.gmra.mrb[0].mxu0 %v3001
    %v4151 = vpop.f32.mrb[0].mxu0
    %v4152 = vadd.f32 %v3454, %v4151
    %v4153 = vpop.f32.mrb[0].mxu0
    %v4154 = vadd.f32 %v3458, %v4153
    %4155 = vmatprep.mubr.f32.mxu0 %v3006
    %4156 = vmatmul.mubr.f32.gmra.mrb[0].mxu0 %v3005
    %v4157 = vpop.f32.mrb[0].mxu0
    %v4158 = vadd.f32 %v3454, %v4157
    %v4159 = vpop.f32.mrb[0].mxu0
    %v4160 = vadd.f32 %v3458, %v4159
    %4161 = vmatprep.mubr.f32.mxu0 %v3010
    %4162 = vmatmul.mubr.f32.gmra.mrb[0].mxu0 %v3009
    %v4163 = vpop.f32.mrb[0].mxu0
    %v4164 = vadd.f32 %v3454, %v4163
    %v4165 = vpop.f32.mrb[0].mxu0
    %v4166 = vadd.f32 %v3458, %v4165
    %4167 = vmatprep.mubr.f32.mxu0 %v3014
    %4168 = vmatmul.mubr.f32.gmra.mrb[0].mxu0 %v3013
    %v4169 = vpop.f32.mrb[0].mxu0
    %v4170 = vadd.f32 %v3454, %v4169
    %v4171 = vpop.f32.mrb[0].mxu0
    %v4172 = vadd.f32 %v3458, %v4171
    %4173 = vmatprep.mubr.f32.mxu0 %v3018
    %4174 = vmatmul.mubr.f32.gmra.mrb[0].mxu0 %v3017
    %v4175 = vpop.f32.mrb[0].mxu0
    %v4176 = vadd.f32 %v3454, %v4175
    %v4177 = vpop.f32.mrb[0].mxu0
    %v4178 = vadd.f32 %v3458, %v4177
    %4179 = vmatprep.mubr.f32.mxu0 %v3022
    %4180 = vmatmul.mubr.f32.gmra.mrb[0].mxu0 %v3021
    %v4181 = vpop.f32.mrb[0].mxu0
    %v4182 = vadd.f32 %v3454, %v4181
    %v4183 = vpop.f32.mrb[0].mxu0
    %v4184 = vadd.f32 %v3458, %v4183
    %4185 = vmatprep.mubr.f32.mxu0 %v3026
    %4186 = vmatmul.mubr.f32.gmra.mrb[0].mxu0 %v3025
    %v4187 = vpop.f32.mrb[0].mxu0
    %v4188 = vadd.f32 %v3454, %v4187
    %v4189 = vpop.f32.mrb[0].mxu0
    %v4190 = vadd.f32 %v3458, %v4189
    %4191 = vmatprep.mubr.f32.mxu0 %v3030
    %4192 = vmatmul.mubr.f32.gmra.mrb[0].mxu0 %v3029
    %v4193 = vpop.f32.mrb[0].mxu0
    %v4194 = vadd.f32 %v3454, %v4193
    %v4195 = vpop.f32.mrb[0].mxu0
    %v4196 = vadd.f32 %v3458, %v4195
    %4197 = vmatprep.mubr.f32.mxu0 %v3034
    %4198 = vmatmul.mubr.f32.gmra.mrb[0].mxu0 %v3033
    %v4199 = vpop.f32.mrb[0].mxu0
    %v4200 = vadd.f32 %v3454, %v4199
    %v4201 = vpop.f32.mrb[0].mxu0
    %v4202 = vadd.f32 %v3458, %v4201
    %4203 = vmatprep.mubr.f32.mxu0 %v3038
    %4204 = vmatmul.mubr.f32.gmra.mrb[0].mxu0 %v3037
    %v4205 = vpop.f32.mrb[0].mxu0
    %v4206 = vadd.f32 %v3454, %v4205
    %v4207 = vpop.f32.mrb[0].mxu0
    %v4208 = vadd.f32 %v3458, %v4207
    %4209 = vmatprep.mubr.f32.mxu0 %v3042
    %4210 = vmatmul.mubr.f32.gmra.mrb[0].mxu0 %v3041
    %v4211 = vpop.f32.mrb[0].mxu0
    %v4212 = vadd.f32 %v3454, %v4211
    %v4213 = vpop.f32.mrb[0].mxu0
    %v4214 = vadd.f32 %v3458, %v4213
    %4215 = vmatprep.mubr.f32.mxu0 %v3046
    %4216 = vmatmul.mubr.f32.gmra.mrb[0].mxu0 %v3045
    %v4217 = vpop.f32.mrb[0].mxu0
    %v4218 = vadd.f32 %v3454, %v4217
    %v4219 = vpop.f32.mrb[0].mxu0
    %v4220 = vadd.f32 %v3458, %v4219
    %4221 = vmatprep.mubr.f32.mxu0 %v3050
    %4222 = vmatmul.mubr.f32.gmra.mrb[0].mxu0 %v3049
    %v4223 = vpop.f32.mrb[0].mxu0
    %v4224 = vadd.f32 %v3454, %v4223
    %v4225 = vpop.f32.mrb[0].mxu0
    %v4226 = vadd.f32 %v3458, %v4225
    %4227 = vmatprep.mubr.f32.mxu0 %v3054
    %4228 = vmatmul.mubr.f32.gmra.mrb[0].mxu0 %v3053
    %v4229 = vpop.f32.mrb[0].mxu0
    %v4230 = vadd.f32 %v3454, %v4229
    %v4231 = vpop.f32.mrb[0].mxu0
    %v4232 = vadd.f32 %v3458, %v4231
    %4233 = vdwg.mxu0
    %4234 = vmatprep.subr.mxu0 %v3316
    %4235 = vmatpush1.msra.mxu0 %v3315
    %4236 = vmatprep.subr.mxu0 %v3320
    %4237 = vmatpush1.msra.mxu0 %v3319
    %4238 = vmatprep.subr.mxu0 %v3324
    %4239 = vmatpush1.msra.mxu0 %v3323
    %4240 = vmatprep.subr.mxu0 %v3328
    %4241 = vmatpush1.msra.mxu0 %v3327
    %4242 = vmatprep.subr.mxu0 %v3332
    %4243 = vmatpush1.msra.mxu0 %v3331
    %4244 = vmatprep.subr.mxu0 %v3336
    %4245 = vmatpush1.msra.mxu0 %v3335
    %4246 = vmatprep.subr.mxu0 %v3340
    %4247 = vmatpush1.msra.mxu0 %v3339
    %4248 = vmatprep.subr.mxu0 %v3344
    %4249 = vmatpush1.msra.mxu0 %v3343
    %4250 = vmatprep.subr.mxu0 %v3348
    %4251 = vmatpush1.msra.mxu0 %v3347
    %4252 = vmatprep.subr.mxu0 %v3352
    %4253 = vmatpush1.msra.mxu0 %v3351
    %4254 = vmatprep.subr.mxu0 %v3356
    %4255 = vmatpush1.msra.mxu0 %v3355
    %4256 = vmatprep.subr.mxu0 %v3360
    %4257 = vmatpush1.msra.mxu0 %v3359
    %4258 = vmatprep.subr.mxu0 %v3364
    %4259 = vmatpush1.msra.mxu0 %v3363
    %4260 = vmatprep.subr.mxu0 %v3368
    %4261 = vmatpush1.msra.mxu0 %v3367
    %4262 = vmatprep.subr.mxu0 %v3372
    %4263 = vmatpush1.msra.mxu0 %v3371
    %4264 = vmatprep.subr.mxu0 %v3376
    %4265 = vmatpush1.msra.mxu0 %v3375
    %4266 = vmatprep.subr.mxu0 %v3380
    %4267 = vmatpush1.msra.mxu0 %v3379
    %4268 = vmatprep.subr.mxu0 %v3384
    %4269 = vmatpush1.msra.mxu0 %v3383
    %4270 = vmatprep.subr.mxu0 %v3388
    %4271 = vmatpush1.msra.mxu0 %v3387
    %4272 = vmatprep.subr.mxu0 %v3392
    %4273 = vmatpush1.msra.mxu0 %v3391
    %4274 = vmatprep.subr.mxu0 %v3396
    %4275 = vmatpush1.msra.mxu0 %v3395
    %4276 = vmatprep.subr.mxu0 %v3400
    %4277 = vmatpush1.msra.mxu0 %v3399
    %4278 = vmatprep.subr.mxu0 %v3404
    %4279 = vmatpush1.msra.mxu0 %v3403
    %4280 = vmatprep.subr.mxu0 %v3408
    %4281 = vmatpush1.msra.mxu0 %v3407
    %4282 = vmatprep.subr.mxu0 %v3412
    %4283 = vmatpush1.msra.mxu0 %v3411
    %4284 = vmatprep.subr.mxu0 %v3416
    %4285 = vmatpush1.msra.mxu0 %v3415
    %4286 = vmatprep.subr.mxu0 %v3420
    %4287 = vmatpush1.msra.mxu0 %v3419
    %4288 = vmatprep.subr.mxu0 %v3424
    %4289 = vmatpush1.msra.mxu0 %v3423
    %4290 = vmatprep.subr.mxu0 %v3428
    %4291 = vmatpush1.msra.mxu0 %v3427
    %4292 = vmatprep.subr.mxu0 %v3432
    %4293 = vmatpush1.msra.mxu0 %v3431
    %4294 = vmatprep.subr.mxu0 %v3436
    %4295 = vmatpush1.msra.mxu0 %v3435
    %4296 = vmatprep.subr.mxu0 %v3440
    %4297 = vmatpush1.msra.mxu0 %v3439
    %4298 = vmatprep.mubr.f32.mxu0 %v2932
    %4299 = vmatmul.mubr.f32.gmra.mrb[0].mxu0 %v2931
    %v4300 = vpop.f32.mrb[0].mxu0
    %v4301 = vadd.f32 %v4044, %v4300
    %v4302 = vpop.f32.mrb[0].mxu0
    %v4303 = vadd.f32 %v4046, %v4302
    %4304 = vmatprep.mubr.f32.mxu0 %v2936
    %4305 = vmatmul.mubr.f32.gmra.mrb[0].mxu0 %v2935
    %v4306 = vpop.f32.mrb[0].mxu0
    %v4307 = vadd.f32 %v4050, %v4306
    %v4308 = vpop.f32.mrb[0].mxu0
    %v4309 = vadd.f32 %v4052, %v4308
    %4310 = vmatprep.mubr.f32.mxu0 %v2940
    %4311 = vmatmul.mubr.f32.gmra.mrb[0].mxu0 %v2939
    %v4312 = vpop.f32.mrb[0].mxu0
    %v4313 = vadd.f32 %v4056, %v4312
    %v4314 = vpop.f32.mrb[0].mxu0
    %v4315 = vadd.f32 %v4058, %v4314
    %4316 = vmatprep.mubr.f32.mxu0 %v2944
    %4317 = vmatmul.mubr.f32.gmra.mrb[0].mxu0 %v2943
    %v4318 = vpop.f32.mrb[0].mxu0
    %v4319 = vadd.f32 %v4062, %v4318
    %v4320 = vpop.f32.mrb[0].mxu0
    %v4321 = vadd.f32 %v4064, %v4320
    %4322 = vmatprep.mubr.f32.mxu0 %v2948
    %4323 = vmatmul.mubr.f32.gmra.mrb[0].mxu0 %v2947
    %v4324 = vpop.f32.mrb[0].mxu0
    %v4325 = vadd.f32 %v4068, %v4324
    %v4326 = vpop.f32.mrb[0].mxu0
    %v4327 = vadd.f32 %v4070, %v4326
    %4328 = vmatprep.mubr.f32.mxu0 %v2952
    %4329 = vmatmul.mubr.f32.gmra.mrb[0].mxu0 %v2951
    %v4330 = vpop.f32.mrb[0].mxu0
    %v4331 = vadd.f32 %v4074, %v4330
    %v4332 = vpop.f32.mrb[0].mxu0
    %v4333 = vadd.f32 %v4076, %v4332
    %4334 = vmatprep.mubr.f32.mxu0 %v2956
    %4335 = vmatmul.mubr.f32.gmra.mrb[0].mxu0 %v2955
    %v4336 = vpop.f32.mrb[0].mxu0
    %v4337 = vadd.f32 %v4080, %v4336
    %v4338 = vpop.f32.mrb[0].mxu0
    %v4339 = vadd.f32 %v4082, %v4338
    %4340 = vmatprep.mubr.f32.mxu0 %v2960
    %4341 = vmatmul.mubr.f32.gmra.mrb[0].mxu0 %v2959
    %v4342 = vpop.f32.mrb[0].mxu0
    %v4343 = vadd.f32 %v4086, %v4342
    %v4344 = vpop.f32.mrb[0].mxu0
    %v4345 = vadd.f32 %v4088, %v4344
    %4346 = vmatprep.mubr.f32.mxu0 %v2964
    %4347 = vmatmul.mubr.f32.gmra.mrb[0].mxu0 %v2963
    %v4348 = vpop.f32.mrb[0].mxu0
    %v4349 = vadd.f32 %v4092, %v4348
    %v4350 = vpop.f32.mrb[0].mxu0
    %v4351 = vadd.f32 %v4094, %v4350
    %4352 = vmatprep.mubr.f32.mxu0 %v2968
    %4353 = vmatmul.mubr.f32.gmra.mrb[0].mxu0 %v2967
    %v4354 = vpop.f32.mrb[0].mxu0
    %v4355 = vadd.f32 %v4098, %v4354
    %v4356 = vpop.f32.mrb[0].mxu0
    %v4357 = vadd.f32 %v4100, %v4356
    %4358 = vmatprep.mubr.f32.mxu0 %v2972
    %4359 = vmatmul.mubr.f32.gmra.mrb[0].mxu0 %v2971
    %v4360 = vpop.f32.mrb[0].mxu0
    %v4361 = vadd.f32 %v4104, %v4360
    %v4362 = vpop.f32.mrb[0].mxu0
    %v4363 = vadd.f32 %v4106, %v4362
    %4364 = vmatprep.mubr.f32.mxu0 %v2976
    %4365 = vmatmul.mubr.f32.gmra.mrb[0].mxu0 %v2975
    %v4366 = vpop.f32.mrb[0].mxu0
    %v4367 = vadd.f32 %v4110, %v4366
    %v4368 = vpop.f32.mrb[0].mxu0
    %v4369 = vadd.f32 %v4112, %v4368
    %4370 = vmatprep.mubr.f32.mxu0 %v2980
    %4371 = vmatmul.mubr.f32.gmra.mrb[0].mxu0 %v2979
    %v4372 = vpop.f32.mrb[0].mxu0
    %v4373 = vadd.f32 %v4116, %v4372
    %v4374 = vpop.f32.mrb[0].mxu0
    %v4375 = vadd.f32 %v4118, %v4374
    %4376 = vmatprep.mubr.f32.mxu0 %v2984
    %4377 = vmatmul.mubr.f32.gmra.mrb[0].mxu0 %v2983
    %v4378 = vpop.f32.mrb[0].mxu0
    %v4379 = vadd.f32 %v4122, %v4378
    %v4380 = vpop.f32.mrb[0].mxu0
    %v4381 = vadd.f32 %v4124, %v4380
    %4382 = vmatprep.mubr.f32.mxu0 %v2988
    %4383 = vmatmul.mubr.f32.gmra.mrb[0].mxu0 %v2987
    %v4384 = vpop.f32.mrb[0].mxu0
    %v4385 = vadd.f32 %v4128, %v4384
    %v4386 = vpop.f32.mrb[0].mxu0
    %v4387 = vadd.f32 %v4130, %v4386
    %4388 = vmatprep.mubr.f32.mxu0 %v2992
    %4389 = vmatmul.mubr.f32.gmra.mrb[0].mxu0 %v2991
    %v4390 = vpop.f32.mrb[0].mxu0
    %v4391 = vadd.f32 %v4134, %v4390
    %v4392 = vpop.f32.mrb[0].mxu0
    %v4393 = vadd.f32 %v4136, %v4392
    %4394 = vmatprep.mubr.f32.mxu0 %v2996
    %4395 = vmatmul.mubr.f32.gmra.mrb[0].mxu0 %v2995
    %v4396 = vpop.f32.mrb[0].mxu0
    %v4397 = vadd.f32 %v4140, %v4396
    %v4398 = vpop.f32.mrb[0].mxu0
    %v4399 = vadd.f32 %v4142, %v4398
    %4400 = vmatprep.mubr.f32.mxu0 %v3000
    %4401 = vmatmul.mubr.f32.gmra.mrb[0].mxu0 %v2999
    %v4402 = vpop.f32.mrb[0].mxu0
    %v4403 = vadd.f32 %v4146, %v4402
    %v4404 = vpop.f32.mrb[0].mxu0
    %v4405 = vadd.f32 %v4148, %v4404
    %4406 = vmatprep.mubr.f32.mxu0 %v3004
    %4407 = vmatmul.mubr.f32.gmra.mrb[0].mxu0 %v3003
    %v4408 = vpop.f32.mrb[0].mxu0
    %v4409 = vadd.f32 %v4152, %v4408
    %v4410 = vpop.f32.mrb[0].mxu0
    %v4411 = vadd.f32 %v4154, %v4410
    %4412 = vmatprep.mubr.f32.mxu0 %v3008
    %4413 = vmatmul.mubr.f32.gmra.mrb[0].mxu0 %v3007
    %v4414 = vpop.f32.mrb[0].mxu0
    %v4415 = vadd.f32 %v4158, %v4414
    %v4416 = vpop.f32.mrb[0].mxu0
    %v4417 = vadd.f32 %v4160, %v4416
    %4418 = vmatprep.mubr.f32.mxu0 %v3012
    %4419 = vmatmul.mubr.f32.gmra.mrb[0].mxu0 %v3011
    %v4420 = vpop.f32.mrb[0].mxu0
    %v4421 = vadd.f32 %v4164, %v4420
    %v4422 = vpop.f32.mrb[0].mxu0
    %v4423 = vadd.f32 %v4166, %v4422
    %4424 = vmatprep.mubr.f32.mxu0 %v3016
    %4425 = vmatmul.mubr.f32.gmra.mrb[0].mxu0 %v3015
    %v4426 = vpop.f32.mrb[0].mxu0
    %v4427 = vadd.f32 %v4170, %v4426
    %v4428 = vpop.f32.mrb[0].mxu0
    %v4429 = vadd.f32 %v4172, %v4428
    %4430 = vmatprep.mubr.f32.mxu0 %v3020
    %4431 = vmatmul.mubr.f32.gmra.mrb[0].mxu0 %v3019
    %v4432 = vpop.f32.mrb[0].mxu0
    %v4433 = vadd.f32 %v4176, %v4432
    %v4434 = vpop.f32.mrb[0].mxu0
    %v4435 = vadd.f32 %v4178, %v4434
    %4436 = vmatprep.mubr.f32.mxu0 %v3024
    %4437 = vmatmul.mubr.f32.gmra.mrb[0].mxu0 %v3023
    %v4438 = vpop.f32.mrb[0].mxu0
    %v4439 = vadd.f32 %v4182, %v4438
    %v4440 = vpop.f32.mrb[0].mxu0
    %v4441 = vadd.f32 %v4184, %v4440
    %4442 = vmatprep.mubr.f32.mxu0 %v3028
    %4443 = vmatmul.mubr.f32.gmra.mrb[0].mxu0 %v3027
    %v4444 = vpop.f32.mrb[0].mxu0
    %v4445 = vadd.f32 %v4188, %v4444
    %v4446 = vpop.f32.mrb[0].mxu0
    %v4447 = vadd.f32 %v4190, %v4446
    %4448 = vmatprep.mubr.f32.mxu0 %v3032
    %4449 = vmatmul.mubr.f32.gmra.mrb[0].mxu0 %v3031
    %v4450 = vpop.f32.mrb[0].mxu0
    %v4451 = vadd.f32 %v4194, %v4450
    %v4452 = vpop.f32.mrb[0].mxu0
    %v4453 = vadd.f32 %v4196, %v4452
    %4454 = vmatprep.mubr.f32.mxu0 %v3036
    %4455 = vmatmul.mubr.f32.gmra.mrb[0].mxu0 %v3035
    %v4456 = vpop.f32.mrb[0].mxu0
    %v4457 = vadd.f32 %v4200, %v4456
    %v4458 = vpop.f32.mrb[0].mxu0
    %v4459 = vadd.f32 %v4202, %v4458
    %4460 = vmatprep.mubr.f32.mxu0 %v3040
    %4461 = vmatmul.mubr.f32.gmra.mrb[0].mxu0 %v3039
    %v4462 = vpop.f32.mrb[0].mxu0
    %v4463 = vadd.f32 %v4206, %v4462
    %v4464 = vpop.f32.mrb[0].mxu0
    %v4465 = vadd.f32 %v4208, %v4464
    %4466 = vmatprep.mubr.f32.mxu0 %v3044
    %4467 = vmatmul.mubr.f32.gmra.mrb[0].mxu0 %v3043
    %v4468 = vpop.f32.mrb[0].mxu0
    %v4469 = vadd.f32 %v4212, %v4468
    %v4470 = vpop.f32.mrb[0].mxu0
    %v4471 = vadd.f32 %v4214, %v4470
    %4472 = vmatprep.mubr.f32.mxu0 %v3048
    %4473 = vmatmul.mubr.f32.gmra.mrb[0].mxu0 %v3047
    %v4474 = vpop.f32.mrb[0].mxu0
    %v4475 = vadd.f32 %v4218, %v4474
    %v4476 = vpop.f32.mrb[0].mxu0
    %v4477 = vadd.f32 %v4220, %v4476
    %4478 = vmatprep.mubr.f32.mxu0 %v3052
    %4479 = vmatmul.mubr.f32.gmra.mrb[0].mxu0 %v3051
    %v4480 = vpop.f32.mrb[0].mxu0
    %v4481 = vadd.f32 %v4224, %v4480
    %v4482 = vpop.f32.mrb[0].mxu0
    %v4483 = vadd.f32 %v4226, %v4482
    %4484 = vmatprep.mubr.f32.mxu0 %v3056
    %4485 = vmatmul.mubr.f32.gmra.mrb[0].mxu0 %v3055
    %v4486 = vpop.f32.mrb[0].mxu0
    %v4487 = vadd.f32 %v4230, %v4486
    %v4488 = vpop.f32.mrb[0].mxu0
    %v4489 = vadd.f32 %v4232, %v4488
    %4490 = vdwg.mxu0
    %v4491 = vmax.f32 %v3787, 0.0
    %v4492 = vmax.f32 %v3789, 0.0
    %v4493 = vmax.f32 %v4301, 0.0
    %v4494 = vmax.f32 %v4303, 0.0
    %v4495 = vmax.f32 %v3793, 0.0
    %v4496 = vmax.f32 %v3795, 0.0
    %v4497 = vmax.f32 %v4307, 0.0
    %v4498 = vmax.f32 %v4309, 0.0
    %v4499 = vmax.f32 %v3799, 0.0
    %v4500 = vmax.f32 %v3801, 0.0
    %v4501 = vmax.f32 %v4313, 0.0
    %v4502 = vmax.f32 %v4315, 0.0
    %v4503 = vmax.f32 %v3805, 0.0
    %v4504 = vmax.f32 %v3807, 0.0
    %v4505 = vmax.f32 %v4319, 0.0
    %v4506 = vmax.f32 %v4321, 0.0
    %v4507 = vmax.f32 %v3811, 0.0
    %v4508 = vmax.f32 %v3813, 0.0
    %v4509 = vmax.f32 %v4325, 0.0
    %v4510 = vmax.f32 %v4327, 0.0
    %v4511 = vmax.f32 %v3817, 0.0
    %v4512 = vmax.f32 %v3819, 0.0
    %v4513 = vmax.f32 %v4331, 0.0
    %v4514 = vmax.f32 %v4333, 0.0
    %v4515 = vmax.f32 %v3823, 0.0
    %v4516 = vmax.f32 %v3825, 0.0
    %v4517 = vmax.f32 %v4337, 0.0
    %v4518 = vmax.f32 %v4339, 0.0
    %v4519 = vmax.f32 %v3829, 0.0
    %v4520 = vmax.f32 %v3831, 0.0
    %v4521 = vmax.f32 %v4343, 0.0
    %v4522 = vmax.f32 %v4345, 0.0
    %v4523 = vmax.f32 %v3835, 0.0
    %v4524 = vmax.f32 %v3837, 0.0
    %v4525 = vmax.f32 %v4349, 0.0
    %v4526 = vmax.f32 %v4351, 0.0
    %v4527 = vmax.f32 %v3841, 0.0
    %v4528 = vmax.f32 %v3843, 0.0
    %v4529 = vmax.f32 %v4355, 0.0
    %v4530 = vmax.f32 %v4357, 0.0
    %v4531 = vmax.f32 %v3847, 0.0
    %v4532 = vmax.f32 %v3849, 0.0
    %v4533 = vmax.f32 %v4361, 0.0
    %v4534 = vmax.f32 %v4363, 0.0
    %v4535 = vmax.f32 %v3853, 0.0
    %v4536 = vmax.f32 %v3855, 0.0
    %v4537 = vmax.f32 %v4367, 0.0
    %v4538 = vmax.f32 %v4369, 0.0
    %v4539 = vmax.f32 %v3859, 0.0
    %v4540 = vmax.f32 %v3861, 0.0
    %v4541 = vmax.f32 %v4373, 0.0
    %v4542 = vmax.f32 %v4375, 0.0
    %v4543 = vmax.f32 %v3865, 0.0
    %v4544 = vmax.f32 %v3867, 0.0
    %v4545 = vmax.f32 %v4379, 0.0
    %v4546 = vmax.f32 %v4381, 0.0
    %v4547 = vmax.f32 %v3871, 0.0
    %v4548 = vmax.f32 %v3873, 0.0
    %v4549 = vmax.f32 %v4385, 0.0
    %v4550 = vmax.f32 %v4387, 0.0
    %v4551 = vmax.f32 %v3877, 0.0
    %v4552 = vmax.f32 %v3879, 0.0
    %v4553 = vmax.f32 %v4391, 0.0
    %v4554 = vmax.f32 %v4393, 0.0
    %v4555 = vmax.f32 %v3883, 0.0
    %v4556 = vmax.f32 %v3885, 0.0
    %v4557 = vmax.f32 %v4397, 0.0
    %v4558 = vmax.f32 %v4399, 0.0
    %v4559 = vmax.f32 %v3889, 0.0
    %v4560 = vmax.f32 %v3891, 0.0
    %v4561 = vmax.f32 %v4403, 0.0
    %v4562 = vmax.f32 %v4405, 0.0
    %v4563 = vmax.f32 %v3895, 0.0
    %v4564 = vmax.f32 %v3897, 0.0
    %v4565 = vmax.f32 %v4409, 0.0
    %v4566 = vmax.f32 %v4411, 0.0
    %v4567 = vmax.f32 %v3901, 0.0
    %v4568 = vmax.f32 %v3903, 0.0
    %v4569 = vmax.f32 %v4415, 0.0
    %v4570 = vmax.f32 %v4417, 0.0
    %v4571 = vmax.f32 %v3907, 0.0
    %v4572 = vmax.f32 %v3909, 0.0
    %v4573 = vmax.f32 %v4421, 0.0
    %v4574 = vmax.f32 %v4423, 0.0
    %v4575 = vmax.f32 %v3913, 0.0
    %v4576 = vmax.f32 %v3915, 0.0
    %v4577 = vmax.f32 %v4427, 0.0
    %v4578 = vmax.f32 %v4429, 0.0
    %v4579 = vmax.f32 %v3919, 0.0
    %v4580 = vmax.f32 %v3921, 0.0
    %v4581 = vmax.f32 %v4433, 0.0
    %v4582 = vmax.f32 %v4435, 0.0
    %v4583 = vmax.f32 %v3925, 0.0
    %v4584 = vmax.f32 %v3927, 0.0
    %v4585 = vmax.f32 %v4439, 0.0
    %v4586 = vmax.f32 %v4441, 0.0
    %v4587 = vmax.f32 %v3931, 0.0
    %v4588 = vmax.f32 %v3933, 0.0
    %v4589 = vmax.f32 %v4445, 0.0
    %v4590 = vmax.f32 %v4447, 0.0
    %v4591 = vmax.f32 %v3937, 0.0
    %v4592 = vmax.f32 %v3939, 0.0
    %v4593 = vmax.f32 %v4451, 0.0
    %v4594 = vmax.f32 %v4453, 0.0
    %v4595 = vmax.f32 %v3943, 0.0
    %v4596 = vmax.f32 %v3945, 0.0
    %v4597 = vmax.f32 %v4457, 0.0
    %v4598 = vmax.f32 %v4459, 0.0
    %v4599 = vmax.f32 %v3949, 0.0
    %v4600 = vmax.f32 %v3951, 0.0
    %v4601 = vmax.f32 %v4463, 0.0
    %v4602 = vmax.f32 %v4465, 0.0
    %v4603 = vmax.f32 %v3955, 0.0
    %v4604 = vmax.f32 %v3957, 0.0
    %v4605 = vmax.f32 %v4469, 0.0
    %v4606 = vmax.f32 %v4471, 0.0
    %v4607 = vmax.f32 %v3961, 0.0
    %v4608 = vmax.f32 %v3963, 0.0
    %v4609 = vmax.f32 %v4475, 0.0
    %v4610 = vmax.f32 %v4477, 0.0
    %v4611 = vmax.f32 %v3967, 0.0
    %v4612 = vmax.f32 %v3969, 0.0
    %v4613 = vmax.f32 %v4481, 0.0
    %v4614 = vmax.f32 %v4483, 0.0
    %v4615 = vmax.f32 %v3973, 0.0
    %v4616 = vmax.f32 %v3975, 0.0
    %v4617 = vmax.f32 %v4487, 0.0
    %v4618 = vmax.f32 %v4489, 0.0
    %v4619 = vld [vmem:[%s11] sm:$0xf]
    %v4621 = vlaneseq
    %v4622 = vshrl.u32 %v4621, 7
    %v4623 = vsub.s32 0, %v4622
    %v4624 = vrot.slane %v4619, %v4623
    %v4625 = vlaneseq
    %v4626 = vshrl.u32 %v4625, 7
    %v4627 = vsub.s32 1, %v4626
    %v4628 = vrot.slane %v4619, %v4627
    %v4629 = vlaneseq
    %v4630 = vshrl.u32 %v4629, 7
    %v4631 = vsub.s32 2, %v4630
    %v4632 = vrot.slane %v4619, %v4631
    %v4633 = vlaneseq
    %v4634 = vshrl.u32 %v4633, 7
    %v4635 = vsub.s32 3, %v4634
    %v4636 = vrot.slane %v4619, %v4635
    %v4641 = vmul.f32 %v4491, %v4624
    %v4642 = vmul.f32 %v4492, %v4628
    %v4643 = vmul.f32 %v4493, %v4632
    %v4644 = vmul.f32 %v4494, %v4636
    %v4645 = vmul.f32 %v4495, %v4624
    %v4646 = vmul.f32 %v4496, %v4628
    %v4647 = vmul.f32 %v4497, %v4632
    %v4648 = vmul.f32 %v4498, %v4636
    %v4649 = vmul.f32 %v4499, %v4624
    %v4650 = vmul.f32 %v4500, %v4628
    %v4651 = vmul.f32 %v4501, %v4632
    %v4652 = vmul.f32 %v4502, %v4636
    %v4653 = vmul.f32 %v4503, %v4624
    %v4654 = vmul.f32 %v4504, %v4628
    %v4655 = vmul.f32 %v4505, %v4632
    %v4656 = vmul.f32 %v4506, %v4636
    %v4657 = vmul.f32 %v4507, %v4624
    %v4658 = vmul.f32 %v4508, %v4628
    %v4659 = vmul.f32 %v4509, %v4632
    %v4660 = vmul.f32 %v4510, %v4636
    %v4661 = vmul.f32 %v4511, %v4624
    %v4662 = vmul.f32 %v4512, %v4628
    %v4663 = vmul.f32 %v4513, %v4632
    %v4664 = vmul.f32 %v4514, %v4636
    %v4665 = vmul.f32 %v4515, %v4624
    %v4666 = vmul.f32 %v4516, %v4628
    %v4667 = vmul.f32 %v4517, %v4632
    %v4668 = vmul.f32 %v4518, %v4636
    %v4669 = vmul.f32 %v4519, %v4624
    %v4670 = vmul.f32 %v4520, %v4628
    %v4671 = vmul.f32 %v4521, %v4632
    %v4672 = vmul.f32 %v4522, %v4636
    %v4673 = vmul.f32 %v4523, %v4624
    %v4674 = vmul.f32 %v4524, %v4628
    %v4675 = vmul.f32 %v4525, %v4632
    %v4676 = vmul.f32 %v4526, %v4636
    %v4677 = vmul.f32 %v4527, %v4624
    %v4678 = vmul.f32 %v4528, %v4628
    %v4679 = vmul.f32 %v4529, %v4632
    %v4680 = vmul.f32 %v4530, %v4636
    %v4681 = vmul.f32 %v4531, %v4624
    %v4682 = vmul.f32 %v4532, %v4628
    %v4683 = vmul.f32 %v4533, %v4632
    %v4684 = vmul.f32 %v4534, %v4636
    %v4685 = vmul.f32 %v4535, %v4624
    %v4686 = vmul.f32 %v4536, %v4628
    %v4687 = vmul.f32 %v4537, %v4632
    %v4688 = vmul.f32 %v4538, %v4636
    %v4689 = vmul.f32 %v4539, %v4624
    %v4690 = vmul.f32 %v4540, %v4628
    %v4691 = vmul.f32 %v4541, %v4632
    %v4692 = vmul.f32 %v4542, %v4636
    %v4693 = vmul.f32 %v4543, %v4624
    %v4694 = vmul.f32 %v4544, %v4628
    %v4695 = vmul.f32 %v4545, %v4632
    %v4696 = vmul.f32 %v4546, %v4636
    %v4697 = vmul.f32 %v4547, %v4624
    %v4698 = vmul.f32 %v4548, %v4628
    %v4699 = vmul.f32 %v4549, %v4632
    %v4700 = vmul.f32 %v4550, %v4636
    %v4701 = vmul.f32 %v4551, %v4624
    %v4702 = vmul.f32 %v4552, %v4628
    %v4703 = vmul.f32 %v4553, %v4632
    %v4704 = vmul.f32 %v4554, %v4636
    %v4705 = vmul.f32 %v4555, %v4624
    %v4706 = vmul.f32 %v4556, %v4628
    %v4707 = vmul.f32 %v4557, %v4632
    %v4708 = vmul.f32 %v4558, %v4636
    %v4709 = vmul.f32 %v4559, %v4624
    %v4710 = vmul.f32 %v4560, %v4628
    %v4711 = vmul.f32 %v4561, %v4632
    %v4712 = vmul.f32 %v4562, %v4636
    %v4713 = vmul.f32 %v4563, %v4624
    %v4714 = vmul.f32 %v4564, %v4628
    %v4715 = vmul.f32 %v4565, %v4632
    %v4716 = vmul.f32 %v4566, %v4636
    %v4717 = vmul.f32 %v4567, %v4624
    %v4718 = vmul.f32 %v4568, %v4628
    %v4719 = vmul.f32 %v4569, %v4632
    %v4720 = vmul.f32 %v4570, %v4636
    %v4721 = vmul.f32 %v4571, %v4624
    %v4722 = vmul.f32 %v4572, %v4628
    %v4723 = vmul.f32 %v4573, %v4632
    %v4724 = vmul.f32 %v4574, %v4636
    %v4725 = vmul.f32 %v4575, %v4624
    %v4726 = vmul.f32 %v4576, %v4628
    %v4727 = vmul.f32 %v4577, %v4632
    %v4728 = vmul.f32 %v4578, %v4636
    %v4729 = vmul.f32 %v4579, %v4624
    %v4730 = vmul.f32 %v4580, %v4628
    %v4731 = vmul.f32 %v4581, %v4632
    %v4732 = vmul.f32 %v4582, %v4636
    %v4733 = vmul.f32 %v4583, %v4624
    %v4734 = vmul.f32 %v4584, %v4628
    %v4735 = vmul.f32 %v4585, %v4632
    %v4736 = vmul.f32 %v4586, %v4636
    %v4737 = vmul.f32 %v4587, %v4624
    %v4738 = vmul.f32 %v4588, %v4628
    %v4739 = vmul.f32 %v4589, %v4632
    %v4740 = vmul.f32 %v4590, %v4636
    %v4741 = vmul.f32 %v4591, %v4624
    %v4742 = vmul.f32 %v4592, %v4628
    %v4743 = vmul.f32 %v4593, %v4632
    %v4744 = vmul.f32 %v4594, %v4636
    %v4745 = vmul.f32 %v4595, %v4624
    %v4746 = vmul.f32 %v4596, %v4628
    %v4747 = vmul.f32 %v4597, %v4632
    %v4748 = vmul.f32 %v4598, %v4636
    %v4749 = vmul.f32 %v4599, %v4624
    %v4750 = vmul.f32 %v4600, %v4628
    %v4751 = vmul.f32 %v4601, %v4632
    %v4752 = vmul.f32 %v4602, %v4636
    %v4753 = vmul.f32 %v4603, %v4624
    %v4754 = vmul.f32 %v4604, %v4628
    %v4755 = vmul.f32 %v4605, %v4632
    %v4756 = vmul.f32 %v4606, %v4636
    %v4757 = vmul.f32 %v4607, %v4624
    %v4758 = vmul.f32 %v4608, %v4628
    %v4759 = vmul.f32 %v4609, %v4632
    %v4760 = vmul.f32 %v4610, %v4636
    %v4761 = vmul.f32 %v4611, %v4624
    %v4762 = vmul.f32 %v4612, %v4628
    %v4763 = vmul.f32 %v4613, %v4632
    %v4764 = vmul.f32 %v4614, %v4636
    %v4765 = vmul.f32 %v4615, %v4624
    %v4766 = vmul.f32 %v4616, %v4628
    %v4767 = vmul.f32 %v4617, %v4632
    %v4768 = vmul.f32 %v4618, %v4636
    %v4769 = vld [vmem:[%s12] sm:$0xf]
    %v4771 = vlaneseq
    %v4772 = vshrl.u32 %v4771, 7
    %v4773 = vsub.s32 0, %v4772
    %v4774 = vrot.slane %v4769, %v4773
    %v4775 = vlaneseq
    %v4776 = vshrl.u32 %v4775, 7
    %v4777 = vsub.s32 1, %v4776
    %v4778 = vrot.slane %v4769, %v4777
    %v4779 = vlaneseq
    %v4780 = vshrl.u32 %v4779, 7
    %v4781 = vsub.s32 2, %v4780
    %v4782 = vrot.slane %v4769, %v4781
    %v4783 = vlaneseq
    %v4784 = vshrl.u32 %v4783, 7
    %v4785 = vsub.s32 3, %v4784
    %v4786 = vrot.slane %v4769, %v4785
    %v4791 = vadd.f32 %v4641, %v4774
    %v4792 = vadd.f32 %v4642, %v4778
    %v4793 = vadd.f32 %v4643, %v4782
    %v4794 = vadd.f32 %v4644, %v4786
    %v4795 = vadd.f32 %v4645, %v4774
    %v4796 = vadd.f32 %v4646, %v4778
    %v4797 = vadd.f32 %v4647, %v4782
    %v4798 = vadd.f32 %v4648, %v4786
    %v4799 = vadd.f32 %v4649, %v4774
    %v4800 = vadd.f32 %v4650, %v4778
    %v4801 = vadd.f32 %v4651, %v4782
    %v4802 = vadd.f32 %v4652, %v4786
    %v4803 = vadd.f32 %v4653, %v4774
    %v4804 = vadd.f32 %v4654, %v4778
    %v4805 = vadd.f32 %v4655, %v4782
    %v4806 = vadd.f32 %v4656, %v4786
    %v4807 = vadd.f32 %v4657, %v4774
    %v4808 = vadd.f32 %v4658, %v4778
    %v4809 = vadd.f32 %v4659, %v4782
    %v4810 = vadd.f32 %v4660, %v4786
    %v4811 = vadd.f32 %v4661, %v4774
    %v4812 = vadd.f32 %v4662, %v4778
    %v4813 = vadd.f32 %v4663, %v4782
    %v4814 = vadd.f32 %v4664, %v4786
    %v4815 = vadd.f32 %v4665, %v4774
    %v4816 = vadd.f32 %v4666, %v4778
    %v4817 = vadd.f32 %v4667, %v4782
    %v4818 = vadd.f32 %v4668, %v4786
    %v4819 = vadd.f32 %v4669, %v4774
    %v4820 = vadd.f32 %v4670, %v4778
    %v4821 = vadd.f32 %v4671, %v4782
    %v4822 = vadd.f32 %v4672, %v4786
    %v4823 = vadd.f32 %v4673, %v4774
    %v4824 = vadd.f32 %v4674, %v4778
    %v4825 = vadd.f32 %v4675, %v4782
    %v4826 = vadd.f32 %v4676, %v4786
    %v4827 = vadd.f32 %v4677, %v4774
    %v4828 = vadd.f32 %v4678, %v4778
    %v4829 = vadd.f32 %v4679, %v4782
    %v4830 = vadd.f32 %v4680, %v4786
    %v4831 = vadd.f32 %v4681, %v4774
    %v4832 = vadd.f32 %v4682, %v4778
    %v4833 = vadd.f32 %v4683, %v4782
    %v4834 = vadd.f32 %v4684, %v4786
    %v4835 = vadd.f32 %v4685, %v4774
    %v4836 = vadd.f32 %v4686, %v4778
    %v4837 = vadd.f32 %v4687, %v4782
    %v4838 = vadd.f32 %v4688, %v4786
    %v4839 = vadd.f32 %v4689, %v4774
    %v4840 = vadd.f32 %v4690, %v4778
    %v4841 = vadd.f32 %v4691, %v4782
    %v4842 = vadd.f32 %v4692, %v4786
    %v4843 = vadd.f32 %v4693, %v4774
    %v4844 = vadd.f32 %v4694, %v4778
    %v4845 = vadd.f32 %v4695, %v4782
    %v4846 = vadd.f32 %v4696, %v4786
    %v4847 = vadd.f32 %v4697, %v4774
    %v4848 = vadd.f32 %v4698, %v4778
    %v4849 = vadd.f32 %v4699, %v4782
    %v4850 = vadd.f32 %v4700, %v4786
    %v4851 = vadd.f32 %v4701, %v4774
    %v4852 = vadd.f32 %v4702, %v4778
    %v4853 = vadd.f32 %v4703, %v4782
    %v4854 = vadd.f32 %v4704, %v4786
    %v4855 = vadd.f32 %v4705, %v4774
    %v4856 = vadd.f32 %v4706, %v4778
    %v4857 = vadd.f32 %v4707, %v4782
    %v4858 = vadd.f32 %v4708, %v4786
    %v4859 = vadd.f32 %v4709, %v4774
    %v4860 = vadd.f32 %v4710, %v4778
    %v4861 = vadd.f32 %v4711, %v4782
    %v4862 = vadd.f32 %v4712, %v4786
    %v4863 = vadd.f32 %v4713, %v4774
    %v4864 = vadd.f32 %v4714, %v4778
    %v4865 = vadd.f32 %v4715, %v4782
    %v4866 = vadd.f32 %v4716, %v4786
    %v4867 = vadd.f32 %v4717, %v4774
    %v4868 = vadd.f32 %v4718, %v4778
    %v4869 = vadd.f32 %v4719, %v4782
    %v4870 = vadd.f32 %v4720, %v4786
    %v4871 = vadd.f32 %v4721, %v4774
    %v4872 = vadd.f32 %v4722, %v4778
    %v4873 = vadd.f32 %v4723, %v4782
    %v4874 = vadd.f32 %v4724, %v4786
    %v4875 = vadd.f32 %v4725, %v4774
    %v4876 = vadd.f32 %v4726, %v4778
    %v4877 = vadd.f32 %v4727, %v4782
    %v4878 = vadd.f32 %v4728, %v4786
    %v4879 = vadd.f32 %v4729, %v4774
    %v4880 = vadd.f32 %v4730, %v4778
    %v4881 = vadd.f32 %v4731, %v4782
    %v4882 = vadd.f32 %v4732, %v4786
    %v4883 = vadd.f32 %v4733, %v4774
    %v4884 = vadd.f32 %v4734, %v4778
    %v4885 = vadd.f32 %v4735, %v4782
    %v4886 = vadd.f32 %v4736, %v4786
    %v4887 = vadd.f32 %v4737, %v4774
    %v4888 = vadd.f32 %v4738, %v4778
    %v4889 = vadd.f32 %v4739, %v4782
    %v4890 = vadd.f32 %v4740, %v4786
    %v4891 = vadd.f32 %v4741, %v4774
    %v4892 = vadd.f32 %v4742, %v4778
    %v4893 = vadd.f32 %v4743, %v4782
    %v4894 = vadd.f32 %v4744, %v4786
    %v4895 = vadd.f32 %v4745, %v4774
    %v4896 = vadd.f32 %v4746, %v4778
    %v4897 = vadd.f32 %v4747, %v4782
    %v4898 = vadd.f32 %v4748, %v4786
    %v4899 = vadd.f32 %v4749, %v4774
    %v4900 = vadd.f32 %v4750, %v4778
    %v4901 = vadd.f32 %v4751, %v4782
    %v4902 = vadd.f32 %v4752, %v4786
    %v4903 = vadd.f32 %v4753, %v4774
    %v4904 = vadd.f32 %v4754, %v4778
    %v4905 = vadd.f32 %v4755, %v4782
    %v4906 = vadd.f32 %v4756, %v4786
    %v4907 = vadd.f32 %v4757, %v4774
    %v4908 = vadd.f32 %v4758, %v4778
    %v4909 = vadd.f32 %v4759, %v4782
    %v4910 = vadd.f32 %v4760, %v4786
    %v4911 = vadd.f32 %v4761, %v4774
    %v4912 = vadd.f32 %v4762, %v4778
    %v4913 = vadd.f32 %v4763, %v4782
    %v4914 = vadd.f32 %v4764, %v4786
    %v4915 = vadd.f32 %v4765, %v4774
    %v4916 = vadd.f32 %v4766, %v4778
    %v4917 = vadd.f32 %v4767, %v4782
    %v4918 = vadd.f32 %v4768, %v4786
    %v4919 = vld [vmem:[%s13] sm:$0xf]
    %v4920 = vld [vmem:[%s13 + $0x4] sm:$0xf]
    %v4921 = vld [vmem:[%s13 + $0x8] sm:$0xf]
    %v4922 = vld [vmem:[%s13 + $0xc] sm:$0xf]
    %v4923 = vld [vmem:[%s13 + $0x10] sm:$0xf]
    %v4924 = vld [vmem:[%s13 + $0x14] sm:$0xf]
    %v4925 = vld [vmem:[%s13 + $0x18] sm:$0xf]
    %v4926 = vld [vmem:[%s13 + $0x1c] sm:$0xf]
    %v4927 = vld [vmem:[%s13 + $0x20] sm:$0xf]
    %v4928 = vld [vmem:[%s13 + $0x24] sm:$0xf]
    %v4929 = vld [vmem:[%s13 + $0x28] sm:$0xf]
    %v4930 = vld [vmem:[%s13 + $0x2c] sm:$0xf]
    %v4931 = vld [vmem:[%s13 + $0x30] sm:$0xf]
    %v4932 = vld [vmem:[%s13 + $0x34] sm:$0xf]
    %v4933 = vld [vmem:[%s13 + $0x38] sm:$0xf]
    %v4934 = vld [vmem:[%s13 + $0x3c] sm:$0xf]
    %v4935 = vld [vmem:[%s13 + $0x40] sm:$0xf]
    %v4936 = vld [vmem:[%s13 + $0x44] sm:$0xf]
    %v4937 = vld [vmem:[%s13 + $0x48] sm:$0xf]
    %v4938 = vld [vmem:[%s13 + $0x4c] sm:$0xf]
    %v4939 = vld [vmem:[%s13 + $0x50] sm:$0xf]
    %v4940 = vld [vmem:[%s13 + $0x54] sm:$0xf]
    %v4941 = vld [vmem:[%s13 + $0x58] sm:$0xf]
    %v4942 = vld [vmem:[%s13 + $0x5c] sm:$0xf]
    %v4943 = vld [vmem:[%s13 + $0x60] sm:$0xf]
    %v4944 = vld [vmem:[%s13 + $0x64] sm:$0xf]
    %v4945 = vld [vmem:[%s13 + $0x68] sm:$0xf]
    %v4946 = vld [vmem:[%s13 + $0x6c] sm:$0xf]
    %v4947 = vld [vmem:[%s13 + $0x70] sm:$0xf]
    %v4948 = vld [vmem:[%s13 + $0x74] sm:$0xf]
    %v4949 = vld [vmem:[%s13 + $0x78] sm:$0xf]
    %v4950 = vld [vmem:[%s13 + $0x7c] sm:$0xf]
    %v4951 = vld [vmem:[%s13 + $0x80] sm:$0xf]
    %v4952 = vld [vmem:[%s13 + $0x84] sm:$0xf]
    %v4953 = vld [vmem:[%s13 + $0x88] sm:$0xf]
    %v4954 = vld [vmem:[%s13 + $0x8c] sm:$0xf]
    %v4955 = vld [vmem:[%s13 + $0x90] sm:$0xf]
    %v4956 = vld [vmem:[%s13 + $0x94] sm:$0xf]
    %v4957 = vld [vmem:[%s13 + $0x98] sm:$0xf]
    %v4958 = vld [vmem:[%s13 + $0x9c] sm:$0xf]
    %v4959 = vld [vmem:[%s13 + $0xa0] sm:$0xf]
    %v4960 = vld [vmem:[%s13 + $0xa4] sm:$0xf]
    %v4961 = vld [vmem:[%s13 + $0xa8] sm:$0xf]
    %v4962 = vld [vmem:[%s13 + $0xac] sm:$0xf]
    %v4963 = vld [vmem:[%s13 + $0xb0] sm:$0xf]
    %v4964 = vld [vmem:[%s13 + $0xb4] sm:$0xf]
    %v4965 = vld [vmem:[%s13 + $0xb8] sm:$0xf]
    %v4966 = vld [vmem:[%s13 + $0xbc] sm:$0xf]
    %v4967 = vld [vmem:[%s13 + $0xc0] sm:$0xf]
    %v4968 = vld [vmem:[%s13 + $0xc4] sm:$0xf]
    %v4969 = vld [vmem:[%s13 + $0xc8] sm:$0xf]
    %v4970 = vld [vmem:[%s13 + $0xcc] sm:$0xf]
    %v4971 = vld [vmem:[%s13 + $0xd0] sm:$0xf]
    %v4972 = vld [vmem:[%s13 + $0xd4] sm:$0xf]
    %v4973 = vld [vmem:[%s13 + $0xd8] sm:$0xf]
    %v4974 = vld [vmem:[%s13 + $0xdc] sm:$0xf]
    %v4975 = vld [vmem:[%s13 + $0xe0] sm:$0xf]
    %v4976 = vld [vmem:[%s13 + $0xe4] sm:$0xf]
    %v4977 = vld [vmem:[%s13 + $0xe8] sm:$0xf]
    %v4978 = vld [vmem:[%s13 + $0xec] sm:$0xf]
    %v4979 = vld [vmem:[%s13 + $0xf0] sm:$0xf]
    %v4980 = vld [vmem:[%s13 + $0xf4] sm:$0xf]
    %v4981 = vld [vmem:[%s13 + $0xf8] sm:$0xf]
    %v4982 = vld [vmem:[%s13 + $0xfc] sm:$0xf]
    %v4983 = vunpack.c.l.bf16 %v4919
    %v4984 = vunpack.c.l.bf16 %v4920
    %v4985 = vunpack.c.l.bf16 %v4921
    %v4986 = vunpack.c.l.bf16 %v4922
    %v4987 = vunpack.c.l.bf16 %v4923
    %v4988 = vunpack.c.l.bf16 %v4924
    %v4989 = vunpack.c.l.bf16 %v4925
    %v4990 = vunpack.c.l.bf16 %v4926
    %v4991 = vunpack.c.l.bf16 %v4927
    %v4992 = vunpack.c.l.bf16 %v4928
    %v4993 = vunpack.c.l.bf16 %v4929
    %v4994 = vunpack.c.l.bf16 %v4930
    %v4995 = vunpack.c.l.bf16 %v4931
    %v4996 = vunpack.c.l.bf16 %v4932
    %v4997 = vunpack.c.l.bf16 %v4933
    %v4998 = vunpack.c.l.bf16 %v4934
    %v4999 = vunpack.c.l.bf16 %v4935
    %v5000 = vunpack.c.l.bf16 %v4936
    %v5001 = vunpack.c.l.bf16 %v4937
    %v5002 = vunpack.c.l.bf16 %v4938
    %v5003 = vunpack.c.l.bf16 %v4939
    %v5004 = vunpack.c.l.bf16 %v4940
    %v5005 = vunpack.c.l.bf16 %v4941
    %v5006 = vunpack.c.l.bf16 %v4942
    %v5007 = vunpack.c.l.bf16 %v4943
    %v5008 = vunpack.c.l.bf16 %v4944
    %v5009 = vunpack.c.l.bf16 %v4945
    %v5010 = vunpack.c.l.bf16 %v4946
    %v5011 = vunpack.c.l.bf16 %v4947
    %v5012 = vunpack.c.l.bf16 %v4948
    %v5013 = vunpack.c.l.bf16 %v4949
    %v5014 = vunpack.c.l.bf16 %v4950
    %v5015 = vunpack.c.l.bf16 %v4951
    %v5016 = vunpack.c.l.bf16 %v4952
    %v5017 = vunpack.c.l.bf16 %v4953
    %v5018 = vunpack.c.l.bf16 %v4954
    %v5019 = vunpack.c.l.bf16 %v4955
    %v5020 = vunpack.c.l.bf16 %v4956
    %v5021 = vunpack.c.l.bf16 %v4957
    %v5022 = vunpack.c.l.bf16 %v4958
    %v5023 = vunpack.c.l.bf16 %v4959
    %v5024 = vunpack.c.l.bf16 %v4960
    %v5025 = vunpack.c.l.bf16 %v4961
    %v5026 = vunpack.c.l.bf16 %v4962
    %v5027 = vunpack.c.l.bf16 %v4963
    %v5028 = vunpack.c.l.bf16 %v4964
    %v5029 = vunpack.c.l.bf16 %v4965
    %v5030 = vunpack.c.l.bf16 %v4966
    %v5031 = vunpack.c.l.bf16 %v4967
    %v5032 = vunpack.c.l.bf16 %v4968
    %v5033 = vunpack.c.l.bf16 %v4969
    %v5034 = vunpack.c.l.bf16 %v4970
    %v5035 = vunpack.c.l.bf16 %v4971
    %v5036 = vunpack.c.l.bf16 %v4972
    %v5037 = vunpack.c.l.bf16 %v4973
    %v5038 = vunpack.c.l.bf16 %v4974
    %v5039 = vunpack.c.l.bf16 %v4975
    %v5040 = vunpack.c.l.bf16 %v4976
    %v5041 = vunpack.c.l.bf16 %v4977
    %v5042 = vunpack.c.l.bf16 %v4978
    %v5043 = vunpack.c.l.bf16 %v4979
    %v5044 = vunpack.c.l.bf16 %v4980
    %v5045 = vunpack.c.l.bf16 %v4981
    %v5046 = vunpack.c.l.bf16 %v4982
    %v5047 = vld [vmem:[%s14] sm:$0x1]
    %v5049 = vlaneseq
    %v5050 = vshrl.u32 %v5049, 7
    %v5051 = vsub.s32 0, %v5050
    %v5052 = vrot.slane %v5047, %v5051
    %5054 = vmatprep.subr.mxu0 0.0
    %5055 = vmatpush1.msra.mxu0 %v4983
    %5056 = vmatprep.subr.mxu0 0.0
    %5057 = vmatpush1.msra.mxu0 %v4984
    %5058 = vmatprep.subr.mxu0 0.0
    %5059 = vmatpush1.msra.mxu0 %v4985
    %5060 = vmatprep.subr.mxu0 0.0
    %5061 = vmatpush1.msra.mxu0 %v4986
    %5062 = vmatprep.subr.mxu0 0.0
    %5063 = vmatpush1.msra.mxu0 %v4987
    %5064 = vmatprep.subr.mxu0 0.0
    %5065 = vmatpush1.msra.mxu0 %v4988
    %5066 = vmatprep.subr.mxu0 0.0
    %5067 = vmatpush1.msra.mxu0 %v4989
    %5068 = vmatprep.subr.mxu0 0.0
    %5069 = vmatpush1.msra.mxu0 %v4990
    %5070 = vmatprep.subr.mxu0 0.0
    %5071 = vmatpush1.msra.mxu0 %v4991
    %5072 = vmatprep.subr.mxu0 0.0
    %5073 = vmatpush1.msra.mxu0 %v4992
    %5074 = vmatprep.subr.mxu0 0.0
    %5075 = vmatpush1.msra.mxu0 %v4993
    %5076 = vmatprep.subr.mxu0 0.0
    %5077 = vmatpush1.msra.mxu0 %v4994
    %5078 = vmatprep.subr.mxu0 0.0
    %5079 = vmatpush1.msra.mxu0 %v4995
    %5080 = vmatprep.subr.mxu0 0.0
    %5081 = vmatpush1.msra.mxu0 %v4996
    %5082 = vmatprep.subr.mxu0 0.0
    %5083 = vmatpush1.msra.mxu0 %v4997
    %5084 = vmatprep.subr.mxu0 0.0
    %5085 = vmatpush1.msra.mxu0 %v4998
    %5086 = vmatprep.subr.mxu0 0.0
    %5087 = vmatpush1.msra.mxu0 %v4999
    %5088 = vmatprep.subr.mxu0 0.0
    %5089 = vmatpush1.msra.mxu0 %v5000
    %5090 = vmatprep.subr.mxu0 0.0
    %5091 = vmatpush1.msra.mxu0 %v5001
    %5092 = vmatprep.subr.mxu0 0.0
    %5093 = vmatpush1.msra.mxu0 %v5002
    %5094 = vmatprep.subr.mxu0 0.0
    %5095 = vmatpush1.msra.mxu0 %v5003
    %5096 = vmatprep.subr.mxu0 0.0
    %5097 = vmatpush1.msra.mxu0 %v5004
    %5098 = vmatprep.subr.mxu0 0.0
    %5099 = vmatpush1.msra.mxu0 %v5005
    %5100 = vmatprep.subr.mxu0 0.0
    %5101 = vmatpush1.msra.mxu0 %v5006
    %5102 = vmatprep.subr.mxu0 0.0
    %5103 = vmatpush1.msra.mxu0 %v5007
    %5104 = vmatprep.subr.mxu0 0.0
    %5105 = vmatpush1.msra.mxu0 %v5008
    %5106 = vmatprep.subr.mxu0 0.0
    %5107 = vmatpush1.msra.mxu0 %v5009
    %5108 = vmatprep.subr.mxu0 0.0
    %5109 = vmatpush1.msra.mxu0 %v5010
    %5110 = vmatprep.subr.mxu0 0.0
    %5111 = vmatpush1.msra.mxu0 %v5011
    %5112 = vmatprep.subr.mxu0 0.0
    %5113 = vmatpush1.msra.mxu0 %v5012
    %5114 = vmatprep.subr.mxu0 0.0
    %5115 = vmatpush1.msra.mxu0 %v5013
    %5116 = vmatprep.subr.mxu0 0.0
    %5117 = vmatpush1.msra.mxu0 %v5014
    %5118 = vmatprep.mubr.f32.mxu0 %v4792
    %5119 = vmatmul.mubr.f32.gmra.mrb[0].mxu0 %v4791
    %v5120 = vpop.f32.mrb[0].mxu0
    %v5121 = vadd.f32 %v5052, %v5120
    %v5122 = vpop.f32.mrb[0].mxu0
    %5123 = vmatprep.mubr.f32.mxu0 %v4796
    %5124 = vmatmul.mubr.f32.gmra.mrb[0].mxu0 %v4795
    %v5125 = vpop.f32.mrb[0].mxu0
    %v5126 = vadd.f32 %v5052, %v5125
    %v5127 = vpop.f32.mrb[0].mxu0
    %5128 = vmatprep.mubr.f32.mxu0 %v4800
    %5129 = vmatmul.mubr.f32.gmra.mrb[0].mxu0 %v4799
    %v5130 = vpop.f32.mrb[0].mxu0
    %v5131 = vadd.f32 %v5052, %v5130
    %v5132 = vpop.f32.mrb[0].mxu0
    %5133 = vmatprep.mubr.f32.mxu0 %v4804
    %5134 = vmatmul.mubr.f32.gmra.mrb[0].mxu0 %v4803
    %v5135 = vpop.f32.mrb[0].mxu0
    %v5136 = vadd.f32 %v5052, %v5135
    %v5137 = vpop.f32.mrb[0].mxu0
    %5138 = vmatprep.mubr.f32.mxu0 %v4808
    %5139 = vmatmul.mubr.f32.gmra.mrb[0].mxu0 %v4807
    %v5140 = vpop.f32.mrb[0].mxu0
    %v5141 = vadd.f32 %v5052, %v5140
    %v5142 = vpop.f32.mrb[0].mxu0
    %5143 = vmatprep.mubr.f32.mxu0 %v4812
    %5144 = vmatmul.mubr.f32.gmra.mrb[0].mxu0 %v4811
    %v5145 = vpop.f32.mrb[0].mxu0
    %v5146 = vadd.f32 %v5052, %v5145
    %v5147 = vpop.f32.mrb[0].mxu0
    %5148 = vmatprep.mubr.f32.mxu0 %v4816
    %5149 = vmatmul.mubr.f32.gmra.mrb[0].mxu0 %v4815
    %v5150 = vpop.f32.mrb[0].mxu0
    %v5151 = vadd.f32 %v5052, %v5150
    %v5152 = vpop.f32.mrb[0].mxu0
    %5153 = vmatprep.mubr.f32.mxu0 %v4820
    %5154 = vmatmul.mubr.f32.gmra.mrb[0].mxu0 %v4819
    %v5155 = vpop.f32.mrb[0].mxu0
    %v5156 = vadd.f32 %v5052, %v5155
    %v5157 = vpop.f32.mrb[0].mxu0
    %5158 = vmatprep.mubr.f32.mxu0 %v4824
    %5159 = vmatmul.mubr.f32.gmra.mrb[0].mxu0 %v4823
    %v5160 = vpop.f32.mrb[0].mxu0
    %v5161 = vadd.f32 %v5052, %v5160
    %v5162 = vpop.f32.mrb[0].mxu0
    %5163 = vmatprep.mubr.f32.mxu0 %v4828
    %5164 = vmatmul.mubr.f32.gmra.mrb[0].mxu0 %v4827
    %v5165 = vpop.f32.mrb[0].mxu0
    %v5166 = vadd.f32 %v5052, %v5165
    %v5167 = vpop.f32.mrb[0].mxu0
    %5168 = vmatprep.mubr.f32.mxu0 %v4832
    %5169 = vmatmul.mubr.f32.gmra.mrb[0].mxu0 %v4831
    %v5170 = vpop.f32.mrb[0].mxu0
    %v5171 = vadd.f32 %v5052, %v5170
    %v5172 = vpop.f32.mrb[0].mxu0
    %5173 = vmatprep.mubr.f32.mxu0 %v4836
    %5174 = vmatmul.mubr.f32.gmra.mrb[0].mxu0 %v4835
    %v5175 = vpop.f32.mrb[0].mxu0
    %v5176 = vadd.f32 %v5052, %v5175
    %v5177 = vpop.f32.mrb[0].mxu0
    %5178 = vmatprep.mubr.f32.mxu0 %v4840
    %5179 = vmatmul.mubr.f32.gmra.mrb[0].mxu0 %v4839
    %v5180 = vpop.f32.mrb[0].mxu0
    %v5181 = vadd.f32 %v5052, %v5180
    %v5182 = vpop.f32.mrb[0].mxu0
    %5183 = vmatprep.mubr.f32.mxu0 %v4844
    %5184 = vmatmul.mubr.f32.gmra.mrb[0].mxu0 %v4843
    %v5185 = vpop.f32.mrb[0].mxu0
    %v5186 = vadd.f32 %v5052, %v5185
    %v5187 = vpop.f32.mrb[0].mxu0
    %5188 = vmatprep.mubr.f32.mxu0 %v4848
    %5189 = vmatmul.mubr.f32.gmra.mrb[0].mxu0 %v4847
    %v5190 = vpop.f32.mrb[0].mxu0
    %v5191 = vadd.f32 %v5052, %v5190
    %v5192 = vpop.f32.mrb[0].mxu0
    %5193 = vmatprep.mubr.f32.mxu0 %v4852
    %5194 = vmatmul.mubr.f32.gmra.mrb[0].mxu0 %v4851
    %v5195 = vpop.f32.mrb[0].mxu0
    %v5196 = vadd.f32 %v5052, %v5195
    %v5197 = vpop.f32.mrb[0].mxu0
    %5198 = vmatprep.mubr.f32.mxu0 %v4856
    %5199 = vmatmul.mubr.f32.gmra.mrb[0].mxu0 %v4855
    %v5200 = vpop.f32.mrb[0].mxu0
    %v5201 = vadd.f32 %v5052, %v5200
    %v5202 = vpop.f32.mrb[0].mxu0
    %5203 = vmatprep.mubr.f32.mxu0 %v4860
    %5204 = vmatmul.mubr.f32.gmra.mrb[0].mxu0 %v4859
    %v5205 = vpop.f32.mrb[0].mxu0
    %v5206 = vadd.f32 %v5052, %v5205
    %v5207 = vpop.f32.mrb[0].mxu0
    %5208 = vmatprep.mubr.f32.mxu0 %v4864
    %5209 = vmatmul.mubr.f32.gmra.mrb[0].mxu0 %v4863
    %v5210 = vpop.f32.mrb[0].mxu0
    %v5211 = vadd.f32 %v5052, %v5210
    %v5212 = vpop.f32.mrb[0].mxu0
    %5213 = vmatprep.mubr.f32.mxu0 %v4868
    %5214 = vmatmul.mubr.f32.gmra.mrb[0].mxu0 %v4867
    %v5215 = vpop.f32.mrb[0].mxu0
    %v5216 = vadd.f32 %v5052, %v5215
    %v5217 = vpop.f32.mrb[0].mxu0
    %5218 = vmatprep.mubr.f32.mxu0 %v4872
    %5219 = vmatmul.mubr.f32.gmra.mrb[0].mxu0 %v4871
    %v5220 = vpop.f32.mrb[0].mxu0
    %v5221 = vadd.f32 %v5052, %v5220
    %v5222 = vpop.f32.mrb[0].mxu0
    %5223 = vmatprep.mubr.f32.mxu0 %v4876
    %5224 = vmatmul.mubr.f32.gmra.mrb[0].mxu0 %v4875
    %v5225 = vpop.f32.mrb[0].mxu0
    %v5226 = vadd.f32 %v5052, %v5225
    %v5227 = vpop.f32.mrb[0].mxu0
    %5228 = vmatprep.mubr.f32.mxu0 %v4880
    %5229 = vmatmul.mubr.f32.gmra.mrb[0].mxu0 %v4879
    %v5230 = vpop.f32.mrb[0].mxu0
    %v5231 = vadd.f32 %v5052, %v5230
    %v5232 = vpop.f32.mrb[0].mxu0
    %5233 = vmatprep.mubr.f32.mxu0 %v4884
    %5234 = vmatmul.mubr.f32.gmra.mrb[0].mxu0 %v4883
    %v5235 = vpop.f32.mrb[0].mxu0
    %v5236 = vadd.f32 %v5052, %v5235
    %v5237 = vpop.f32.mrb[0].mxu0
    %5238 = vmatprep.mubr.f32.mxu0 %v4888
    %5239 = vmatmul.mubr.f32.gmra.mrb[0].mxu0 %v4887
    %v5240 = vpop.f32.mrb[0].mxu0
    %v5241 = vadd.f32 %v5052, %v5240
    %v5242 = vpop.f32.mrb[0].mxu0
    %5243 = vmatprep.mubr.f32.mxu0 %v4892
    %5244 = vmatmul.mubr.f32.gmra.mrb[0].mxu0 %v4891
    %v5245 = vpop.f32.mrb[0].mxu0
    %v5246 = vadd.f32 %v5052, %v5245
    %v5247 = vpop.f32.mrb[0].mxu0
    %5248 = vmatprep.mubr.f32.mxu0 %v4896
    %5249 = vmatmul.mubr.f32.gmra.mrb[0].mxu0 %v4895
    %v5250 = vpop.f32.mrb[0].mxu0
    %v5251 = vadd.f32 %v5052, %v5250
    %v5252 = vpop.f32.mrb[0].mxu0
    %5253 = vmatprep.mubr.f32.mxu0 %v4900
    %5254 = vmatmul.mubr.f32.gmra.mrb[0].mxu0 %v4899
    %v5255 = vpop.f32.mrb[0].mxu0
    %v5256 = vadd.f32 %v5052, %v5255
    %v5257 = vpop.f32.mrb[0].mxu0
    %5258 = vmatprep.mubr.f32.mxu0 %v4904
    %5259 = vmatmul.mubr.f32.gmra.mrb[0].mxu0 %v4903
    %v5260 = vpop.f32.mrb[0].mxu0
    %v5261 = vadd.f32 %v5052, %v5260
    %v5262 = vpop.f32.mrb[0].mxu0
    %5263 = vmatprep.mubr.f32.mxu0 %v4908
    %5264 = vmatmul.mubr.f32.gmra.mrb[0].mxu0 %v4907
    %v5265 = vpop.f32.mrb[0].mxu0
    %v5266 = vadd.f32 %v5052, %v5265
    %v5267 = vpop.f32.mrb[0].mxu0
    %5268 = vmatprep.mubr.f32.mxu0 %v4912
    %5269 = vmatmul.mubr.f32.gmra.mrb[0].mxu0 %v4911
    %v5270 = vpop.f32.mrb[0].mxu0
    %v5271 = vadd.f32 %v5052, %v5270
    %v5272 = vpop.f32.mrb[0].mxu0
    %5273 = vmatprep.mubr.f32.mxu0 %v4916
    %5274 = vmatmul.mubr.f32.gmra.mrb[0].mxu0 %v4915
    %v5275 = vpop.f32.mrb[0].mxu0
    %v5276 = vadd.f32 %v5052, %v5275
    %v5277 = vpop.f32.mrb[0].mxu0
    %5278 = vdwg.mxu0
    %5279 = vmatprep.subr.mxu0 0.0
    %5280 = vmatpush1.msra.mxu0 %v5015
    %5281 = vmatprep.subr.mxu0 0.0
    %5282 = vmatpush1.msra.mxu0 %v5016
    %5283 = vmatprep.subr.mxu0 0.0
    %5284 = vmatpush1.msra.mxu0 %v5017
    %5285 = vmatprep.subr.mxu0 0.0
    %5286 = vmatpush1.msra.mxu0 %v5018
    %5287 = vmatprep.subr.mxu0 0.0
    %5288 = vmatpush1.msra.mxu0 %v5019
    %5289 = vmatprep.subr.mxu0 0.0
    %5290 = vmatpush1.msra.mxu0 %v5020
    %5291 = vmatprep.subr.mxu0 0.0
    %5292 = vmatpush1.msra.mxu0 %v5021
    %5293 = vmatprep.subr.mxu0 0.0
    %5294 = vmatpush1.msra.mxu0 %v5022
    %5295 = vmatprep.subr.mxu0 0.0
    %5296 = vmatpush1.msra.mxu0 %v5023
    %5297 = vmatprep.subr.mxu0 0.0
    %5298 = vmatpush1.msra.mxu0 %v5024
    %5299 = vmatprep.subr.mxu0 0.0
    %5300 = vmatpush1.msra.mxu0 %v5025
    %5301 = vmatprep.subr.mxu0 0.0
    %5302 = vmatpush1.msra.mxu0 %v5026
    %5303 = vmatprep.subr.mxu0 0.0
    %5304 = vmatpush1.msra.mxu0 %v5027
    %5305 = vmatprep.subr.mxu0 0.0
    %5306 = vmatpush1.msra.mxu0 %v5028
    %5307 = vmatprep.subr.mxu0 0.0
    %5308 = vmatpush1.msra.mxu0 %v5029
    %5309 = vmatprep.subr.mxu0 0.0
    %5310 = vmatpush1.msra.mxu0 %v5030
    %5311 = vmatprep.subr.mxu0 0.0
    %5312 = vmatpush1.msra.mxu0 %v5031
    %5313 = vmatprep.subr.mxu0 0.0
    %5314 = vmatpush1.msra.mxu0 %v5032
    %5315 = vmatprep.subr.mxu0 0.0
    %5316 = vmatpush1.msra.mxu0 %v5033
    %5317 = vmatprep.subr.mxu0 0.0
    %5318 = vmatpush1.msra.mxu0 %v5034
    %5319 = vmatprep.subr.mxu0 0.0
    %5320 = vmatpush1.msra.mxu0 %v5035
    %5321 = vmatprep.subr.mxu0 0.0
    %5322 = vmatpush1.msra.mxu0 %v5036
    %5323 = vmatprep.subr.mxu0 0.0
    %5324 = vmatpush1.msra.mxu0 %v5037
    %5325 = vmatprep.subr.mxu0 0.0
    %5326 = vmatpush1.msra.mxu0 %v5038
    %5327 = vmatprep.subr.mxu0 0.0
    %5328 = vmatpush1.msra.mxu0 %v5039
    %5329 = vmatprep.subr.mxu0 0.0
    %5330 = vmatpush1.msra.mxu0 %v5040
    %5331 = vmatprep.subr.mxu0 0.0
    %5332 = vmatpush1.msra.mxu0 %v5041
    %5333 = vmatprep.subr.mxu0 0.0
    %5334 = vmatpush1.msra.mxu0 %v5042
    %5335 = vmatprep.subr.mxu0 0.0
    %5336 = vmatpush1.msra.mxu0 %v5043
    %5337 = vmatprep.subr.mxu0 0.0
    %5338 = vmatpush1.msra.mxu0 %v5044
    %5339 = vmatprep.subr.mxu0 0.0
    %5340 = vmatpush1.msra.mxu0 %v5045
    %5341 = vmatprep.subr.mxu0 0.0
    %5342 = vmatpush1.msra.mxu0 %v5046
    %5343 = vmatprep.mubr.f32.mxu0 %v4794
    %5344 = vmatmul.mubr.f32.gmra.mrb[0].mxu0 %v4793
    %v5345 = vpop.f32.mrb[0].mxu0
    %v5346 = vadd.f32 %v5121, %v5345
    %v5347 = vpop.f32.mrb[0].mxu0
    %5348 = vmatprep.mubr.f32.mxu0 %v4798
    %5349 = vmatmul.mubr.f32.gmra.mrb[0].mxu0 %v4797
    %v5350 = vpop.f32.mrb[0].mxu0
    %v5351 = vadd.f32 %v5126, %v5350
    %v5352 = vpop.f32.mrb[0].mxu0
    %5353 = vmatprep.mubr.f32.mxu0 %v4802
    %5354 = vmatmul.mubr.f32.gmra.mrb[0].mxu0 %v4801
    %v5355 = vpop.f32.mrb[0].mxu0
    %v5356 = vadd.f32 %v5131, %v5355
    %v5357 = vpop.f32.mrb[0].mxu0
    %5358 = vmatprep.mubr.f32.mxu0 %v4806
    %5359 = vmatmul.mubr.f32.gmra.mrb[0].mxu0 %v4805
    %v5360 = vpop.f32.mrb[0].mxu0
    %v5361 = vadd.f32 %v5136, %v5360
    %v5362 = vpop.f32.mrb[0].mxu0
    %5363 = vmatprep.mubr.f32.mxu0 %v4810
    %5364 = vmatmul.mubr.f32.gmra.mrb[0].mxu0 %v4809
    %v5365 = vpop.f32.mrb[0].mxu0
    %v5366 = vadd.f32 %v5141, %v5365
    %v5367 = vpop.f32.mrb[0].mxu0
    %5368 = vmatprep.mubr.f32.mxu0 %v4814
    %5369 = vmatmul.mubr.f32.gmra.mrb[0].mxu0 %v4813
    %v5370 = vpop.f32.mrb[0].mxu0
    %v5371 = vadd.f32 %v5146, %v5370
    %v5372 = vpop.f32.mrb[0].mxu0
    %5373 = vmatprep.mubr.f32.mxu0 %v4818
    %5374 = vmatmul.mubr.f32.gmra.mrb[0].mxu0 %v4817
    %v5375 = vpop.f32.mrb[0].mxu0
    %v5376 = vadd.f32 %v5151, %v5375
    %v5377 = vpop.f32.mrb[0].mxu0
    %5378 = vmatprep.mubr.f32.mxu0 %v4822
    %5379 = vmatmul.mubr.f32.gmra.mrb[0].mxu0 %v4821
    %v5380 = vpop.f32.mrb[0].mxu0
    %v5381 = vadd.f32 %v5156, %v5380
    %v5382 = vpop.f32.mrb[0].mxu0
    %5383 = vmatprep.mubr.f32.mxu0 %v4826
    %5384 = vmatmul.mubr.f32.gmra.mrb[0].mxu0 %v4825
    %v5385 = vpop.f32.mrb[0].mxu0
    %v5386 = vadd.f32 %v5161, %v5385
    %v5387 = vpop.f32.mrb[0].mxu0
    %5388 = vmatprep.mubr.f32.mxu0 %v4830
    %5389 = vmatmul.mubr.f32.gmra.mrb[0].mxu0 %v4829
    %v5390 = vpop.f32.mrb[0].mxu0
    %v5391 = vadd.f32 %v5166, %v5390
    %v5392 = vpop.f32.mrb[0].mxu0
    %5393 = vmatprep.mubr.f32.mxu0 %v4834
    %5394 = vmatmul.mubr.f32.gmra.mrb[0].mxu0 %v4833
    %v5395 = vpop.f32.mrb[0].mxu0
    %v5396 = vadd.f32 %v5171, %v5395
    %v5397 = vpop.f32.mrb[0].mxu0
    %5398 = vmatprep.mubr.f32.mxu0 %v4838
    %5399 = vmatmul.mubr.f32.gmra.mrb[0].mxu0 %v4837
    %v5400 = vpop.f32.mrb[0].mxu0
    %v5401 = vadd.f32 %v5176, %v5400
    %v5402 = vpop.f32.mrb[0].mxu0
    %5403 = vmatprep.mubr.f32.mxu0 %v4842
    %5404 = vmatmul.mubr.f32.gmra.mrb[0].mxu0 %v4841
    %v5405 = vpop.f32.mrb[0].mxu0
    %v5406 = vadd.f32 %v5181, %v5405
    %v5407 = vpop.f32.mrb[0].mxu0
    %5408 = vmatprep.mubr.f32.mxu0 %v4846
    %5409 = vmatmul.mubr.f32.gmra.mrb[0].mxu0 %v4845
    %v5410 = vpop.f32.mrb[0].mxu0
    %v5411 = vadd.f32 %v5186, %v5410
    %v5412 = vpop.f32.mrb[0].mxu0
    %5413 = vmatprep.mubr.f32.mxu0 %v4850
    %5414 = vmatmul.mubr.f32.gmra.mrb[0].mxu0 %v4849
    %v5415 = vpop.f32.mrb[0].mxu0
    %v5416 = vadd.f32 %v5191, %v5415
    %v5417 = vpop.f32.mrb[0].mxu0
    %5418 = vmatprep.mubr.f32.mxu0 %v4854
    %5419 = vmatmul.mubr.f32.gmra.mrb[0].mxu0 %v4853
    %v5420 = vpop.f32.mrb[0].mxu0
    %v5421 = vadd.f32 %v5196, %v5420
    %v5422 = vpop.f32.mrb[0].mxu0
    %5423 = vmatprep.mubr.f32.mxu0 %v4858
    %5424 = vmatmul.mubr.f32.gmra.mrb[0].mxu0 %v4857
    %v5425 = vpop.f32.mrb[0].mxu0
    %v5426 = vadd.f32 %v5201, %v5425
    %v5427 = vpop.f32.mrb[0].mxu0
    %5428 = vmatprep.mubr.f32.mxu0 %v4862
    %5429 = vmatmul.mubr.f32.gmra.mrb[0].mxu0 %v4861
    %v5430 = vpop.f32.mrb[0].mxu0
    %v5431 = vadd.f32 %v5206, %v5430
    %v5432 = vpop.f32.mrb[0].mxu0
    %5433 = vmatprep.mubr.f32.mxu0 %v4866
    %5434 = vmatmul.mubr.f32.gmra.mrb[0].mxu0 %v4865
    %v5435 = vpop.f32.mrb[0].mxu0
    %v5436 = vadd.f32 %v5211, %v5435
    %v5437 = vpop.f32.mrb[0].mxu0
    %5438 = vmatprep.mubr.f32.mxu0 %v4870
    %5439 = vmatmul.mubr.f32.gmra.mrb[0].mxu0 %v4869
    %v5440 = vpop.f32.mrb[0].mxu0
    %v5441 = vadd.f32 %v5216, %v5440
    %v5442 = vpop.f32.mrb[0].mxu0
    %5443 = vmatprep.mubr.f32.mxu0 %v4874
    %5444 = vmatmul.mubr.f32.gmra.mrb[0].mxu0 %v4873
    %v5445 = vpop.f32.mrb[0].mxu0
    %v5446 = vadd.f32 %v5221, %v5445
    %v5447 = vpop.f32.mrb[0].mxu0
    %5448 = vmatprep.mubr.f32.mxu0 %v4878
    %5449 = vmatmul.mubr.f32.gmra.mrb[0].mxu0 %v4877
    %v5450 = vpop.f32.mrb[0].mxu0
    %v5451 = vadd.f32 %v5226, %v5450
    %v5452 = vpop.f32.mrb[0].mxu0
    %5453 = vmatprep.mubr.f32.mxu0 %v4882
    %5454 = vmatmul.mubr.f32.gmra.mrb[0].mxu0 %v4881
    %v5455 = vpop.f32.mrb[0].mxu0
    %v5456 = vadd.f32 %v5231, %v5455
    %v5457 = vpop.f32.mrb[0].mxu0
    %5458 = vmatprep.mubr.f32.mxu0 %v4886
    %5459 = vmatmul.mubr.f32.gmra.mrb[0].mxu0 %v4885
    %v5460 = vpop.f32.mrb[0].mxu0
    %v5461 = vadd.f32 %v5236, %v5460
    %v5462 = vpop.f32.mrb[0].mxu0
    %5463 = vmatprep.mubr.f32.mxu0 %v4890
    %5464 = vmatmul.mubr.f32.gmra.mrb[0].mxu0 %v4889
    %v5465 = vpop.f32.mrb[0].mxu0
    %v5466 = vadd.f32 %v5241, %v5465
    %v5467 = vpop.f32.mrb[0].mxu0
    %5468 = vmatprep.mubr.f32.mxu0 %v4894
    %5469 = vmatmul.mubr.f32.gmra.mrb[0].mxu0 %v4893
    %v5470 = vpop.f32.mrb[0].mxu0
    %v5471 = vadd.f32 %v5246, %v5470
    %v5472 = vpop.f32.mrb[0].mxu0
    %5473 = vmatprep.mubr.f32.mxu0 %v4898
    %5474 = vmatmul.mubr.f32.gmra.mrb[0].mxu0 %v4897
    %v5475 = vpop.f32.mrb[0].mxu0
    %v5476 = vadd.f32 %v5251, %v5475
    %v5477 = vpop.f32.mrb[0].mxu0
    %5478 = vmatprep.mubr.f32.mxu0 %v4902
    %5479 = vmatmul.mubr.f32.gmra.mrb[0].mxu0 %v4901
    %v5480 = vpop.f32.mrb[0].mxu0
    %v5481 = vadd.f32 %v5256, %v5480
    %v5482 = vpop.f32.mrb[0].mxu0
    %5483 = vmatprep.mubr.f32.mxu0 %v4906
    %5484 = vmatmul.mubr.f32.gmra.mrb[0].mxu0 %v4905
    %v5485 = vpop.f32.mrb[0].mxu0
    %v5486 = vadd.f32 %v5261, %v5485
    %v5487 = vpop.f32.mrb[0].mxu0
    %5488 = vmatprep.mubr.f32.mxu0 %v4910
    %5489 = vmatmul.mubr.f32.gmra.mrb[0].mxu0 %v4909
    %v5490 = vpop.f32.mrb[0].mxu0
    %v5491 = vadd.f32 %v5266, %v5490
    %v5492 = vpop.f32.mrb[0].mxu0
    %5493 = vmatprep.mubr.f32.mxu0 %v4914
    %5494 = vmatmul.mubr.f32.gmra.mrb[0].mxu0 %v4913
    %v5495 = vpop.f32.mrb[0].mxu0
    %v5496 = vadd.f32 %v5271, %v5495
    %v5497 = vpop.f32.mrb[0].mxu0
    %5498 = vmatprep.mubr.f32.mxu0 %v4918
    %5499 = vmatmul.mubr.f32.gmra.mrb[0].mxu0 %v4917
    %v5500 = vpop.f32.mrb[0].mxu0
    %v5501 = vadd.f32 %v5276, %v5500
    %v5502 = vpop.f32.mrb[0].mxu0
    %5503 = vdwg.mxu0
    %vm5504 = vcmask 523264
    %5505 = vst.msk [vmem:[%s15] sm:$0xff] %vm5504, %v5346
    %5506 = vst.msk [vmem:[%s15 + $0x8] sm:$0xff] %vm5504, %v5351
    %5507 = vst.msk [vmem:[%s15 + $0x10] sm:$0xff] %vm5504, %v5356
    %5508 = vst.msk [vmem:[%s15 + $0x18] sm:$0xff] %vm5504, %v5361
    %5509 = vst.msk [vmem:[%s15 + $0x20] sm:$0xff] %vm5504, %v5366
    %5510 = vst.msk [vmem:[%s15 + $0x28] sm:$0xff] %vm5504, %v5371
    %5511 = vst.msk [vmem:[%s15 + $0x30] sm:$0xff] %vm5504, %v5376
    %5512 = vst.msk [vmem:[%s15 + $0x38] sm:$0xff] %vm5504, %v5381
    %5513 = vst.msk [vmem:[%s15 + $0x40] sm:$0xff] %vm5504, %v5386
    %5514 = vst.msk [vmem:[%s15 + $0x48] sm:$0xff] %vm5504, %v5391
    %5515 = vst.msk [vmem:[%s15 + $0x50] sm:$0xff] %vm5504, %v5396
    %5516 = vst.msk [vmem:[%s15 + $0x58] sm:$0xff] %vm5504, %v5401
    %5517 = vst.msk [vmem:[%s15 + $0x60] sm:$0xff] %vm5504, %v5406
    %5518 = vst.msk [vmem:[%s15 + $0x68] sm:$0xff] %vm5504, %v5411
    %5519 = vst.msk [vmem:[%s15 + $0x70] sm:$0xff] %vm5504, %v5416
    %5520 = vst.msk [vmem:[%s15 + $0x78] sm:$0xff] %vm5504, %v5421
    %5521 = vst.msk [vmem:[%s15 + $0x80] sm:$0xff] %vm5504, %v5426
    %5522 = vst.msk [vmem:[%s15 + $0x88] sm:$0xff] %vm5504, %v5431
    %5523 = vst.msk [vmem:[%s15 + $0x90] sm:$0xff] %vm5504, %v5436
    %5524 = vst.msk [vmem:[%s15 + $0x98] sm:$0xff] %vm5504, %v5441
    %5525 = vst.msk [vmem:[%s15 + $0xa0] sm:$0xff] %vm5504, %v5446
    %5526 = vst.msk [vmem:[%s15 + $0xa8] sm:$0xff] %vm5504, %v5451
    %5527 = vst.msk [vmem:[%s15 + $0xb0] sm:$0xff] %vm5504, %v5456
    %5528 = vst.msk [vmem:[%s15 + $0xb8] sm:$0xff] %vm5504, %v5461
    %5529 = vst.msk [vmem:[%s15 + $0xc0] sm:$0xff] %vm5504, %v5466
    %5530 = vst.msk [vmem:[%s15 + $0xc8] sm:$0xff] %vm5504, %v5471
    %5531 = vst.msk [vmem:[%s15 + $0xd0] sm:$0xff] %vm5504, %v5476
    %5532 = vst.msk [vmem:[%s15 + $0xd8] sm:$0xff] %vm5504, %v5481
    %5533 = vst.msk [vmem:[%s15 + $0xe0] sm:$0xff] %vm5504, %v5486
    %5534 = vst.msk [vmem:[%s15 + $0xe8] sm:$0xff] %vm5504, %v5491
    %5535 = vst.msk [vmem:[%s15 + $0xf0] sm:$0xff] %vm5504, %v5496
    %5536 = vst.msk [vmem:[%s15 + $0xf8] sm:$0xff] %vm5504, %v5501
    // Predicated region
    $region70: #{tpu_custom_call.1} parent=1 // pred_check
      _
    $region71: #{tpu_custom_call.1} parent=1 // pred_check_branch
      %5538 = sbr.rel (0) target = $region73
    $region72: #{tpu_custom_call.1} parent=1 // pred_region
      _
    $region73: #{tpu_custom_call.1} parent=1 // pred_fallthru
      _
    // Predicated region
    $region74: #{tpu_custom_call.1} parent=1 // pred_check
      _
    $region75: #{tpu_custom_call.1} parent=1 // pred_check_branch
      %5540 = sbr.rel (0) target = $region77
    $region76: #{tpu_custom_call.1} parent=1 // pred_region
      _
    $region77: #{tpu_custom_call.1} parent=1 // pred_fallthru
      _
    %5541 = vsyncpa [#allocation3], 1
    %5542 = vsyncpa [#allocation5], 1

</llo_original>
